<compile_context>
chip_gen: v7x
topology: tpu7x:2x2x1
jax: 0.10.0
libtpu: 0.0.40
codegen_flags: <defaults>
</compile_context>

<pallas_src>
import functools

import jax
import jax.numpy as jnp
from jax.experimental import pallas as pl
from jax.experimental.pallas import tpu as pltpu

_BN_EPS = 1e-5


# ----------------------------------------------------------------------------
# helpers
# ----------------------------------------------------------------------------
def _pick_tile(n, candidates):
    """Largest candidate tile that divides n; fall back to the full extent."""
    for t in candidates:
        if t <= n and n % t == 0:
            return t
    return n


def _full_spec(shape):
    """Whole-array VMEM block with a constant index map (fetched once)."""
    nd = len(shape)
    return pl.BlockSpec(shape, lambda b, t: (0,) * nd)


# ----------------------------------------------------------------------------
# Kernel 1: pairwise squared distance (kNN graph building), tiled over (B, N)
# ----------------------------------------------------------------------------
def _knn_dist_kernel(xt_ref, xf_ref, d_ref):
    # xt_ref: (1, T, C) query tile; xf_ref: (1, N, C) all points of batch b.
    xt = xt_ref[0]
    xf = xf_ref[0]
    sq_t = jnp.sum(xt * xt, axis=-1, keepdims=True)            # (T, 1)
    sq_f = jnp.sum(xf * xf, axis=-1)[None, :]                  # (1, N)  (computed once, reused)
    gram = jax.lax.dot_general(                                # (T, N) on MXU; N lane-dense
        xt, xf, (((1,), (1,)), ((), ())), preferred_element_type=jnp.float32)
    d_ref[0] = sq_t + sq_f - 2.0 * gram


def pairwise_sqdist(points_bnc):
    B, N, C = points_bnc.shape
    T = _pick_tile(N, (256, 128, 64, 32, 16, 8))   # (1,T,N) f32 block stays << VMEM on v7x
    return pl.pallas_call(
        _knn_dist_kernel,
        out_shape=jax.ShapeDtypeStruct((B, N, N), jnp.float32),
        grid=(B, N // T),
        in_specs=[pl.BlockSpec((1, T, C), lambda b, t: (b, t, 0)),
                  pl.BlockSpec((1, N, C), lambda b, t: (b, 0, 0))],
        out_specs=pl.BlockSpec((1, T, N), lambda b, t: (b, t, 0)),
        compiler_params=pltpu.CompilerParams(
            dimension_semantics=("parallel", "parallel")),
    )(points_bnc, points_bnc)


# ----------------------------------------------------------------------------
# In-kernel neighbor gather (one-hot matmul on the MXU; no dynamic-gather op)
# ----------------------------------------------------------------------------
def _gather_nbr(idx, k, xf):
    """Rows xf[idx[:, k]] for one neighbor slot k.  idx: (T, K) int32, xf: (N, C)."""
    n = xf.shape[0]
    idx_k = idx[:, k:k + 1]                                     # (T, 1), stays 2-D
    iota_n = jax.lax.broadcasted_iota(jnp.int32, (1, n), 1)     # (1, N)
    onehot = (idx_k == iota_n).astype(jnp.float32)              # (T, N)
    # TODO(synk): for very large N a manual DMA/index gather would beat the
    # one-hot matmul; at DGCNN sizes the MXU is idle so this is nearly free.
    return jnp.dot(onehot, xf, preferred_element_type=jnp.float32)   # (T, C)


# ----------------------------------------------------------------------------
# Kernel 2 (pass S1): BN statistics of layer-1 pre-activations over all edges
# ----------------------------------------------------------------------------
def _edge_stats1_kernel(K, count, xt_ref, xf_ref, idx_ref,
                        wa_ref, wb_ref, b1_ref, s_ref):
    first = jnp.logical_and(pl.program_id(0) == 0, pl.program_id(1) == 0)
    last = jnp.logical_and(pl.program_id(0) == pl.num_programs(0) - 1,
                           pl.program_id(1) == pl.num_programs(1) - 1)

    @pl.when(first)
    def _():
        s_ref[...] = jnp.zeros_like(s_ref)

    xt, xf, idx = xt_ref[0], xf_ref[0], idx_ref[0]
    wa, wb, b1 = wa_ref[...], wb_ref[...], b1_ref[...]
    h1_dim = wa.shape[1]
    # center-point projection: done once per point (K-fold FLOP cut)
    a = jnp.dot(xt, wa, preferred_element_type=jnp.float32) + b1      # (T, H1)

    tot_s = jnp.zeros((1, h1_dim), jnp.float32)
    tot_q = jnp.zeros((1, h1_dim), jnp.float32)
    for k in range(K):                      # static unroll; K is small
        x_nbr = _gather_nbr(idx, k, xf)                                # (T, C)
        h = a + jnp.dot(x_nbr, wb, preferred_element_type=jnp.float32)  # (T, H1)
        tot_s = tot_s + jnp.sum(h, axis=0, keepdims=True)
        tot_q = tot_q + jnp.sum(h * h, axis=0, keepdims=True)
    s_ref[...] = s_ref[...] + jnp.concatenate([tot_s, tot_q], axis=0)

    @pl.when(last)
    def _():
        sums = s_ref[...]
        mu = sums[0:1, :] * (1.0 / count)
        var = jnp.maximum(sums[1:2, :] * (1.0 / count) - mu * mu, 0.0)
        s_ref[...] = jnp.concatenate([mu, var], axis=0)


# ----------------------------------------------------------------------------
# Kernel 3 (pass S2): BN statistics of layer-2 pre-activations over all edges
# ----------------------------------------------------------------------------
def _edge_stats2_kernel(K, count, xt_ref, xf_ref, idx_ref,
                        wa_ref, wb_ref, b1_ref, s1_ref, t1_ref,
                        w2_ref, b2_ref, s_ref):
    first = jnp.logical_and(pl.program_id(0) == 0, pl.program_id(1) == 0)
    last = jnp.logical_and(pl.program_id(0) == pl.num_programs(0) - 1,
                           pl.program_id(1) == pl.num_programs(1) - 1)

    @pl.when(first)
    def _():
        s_ref[...] = jnp.zeros_like(s_ref)

    xt, xf, idx = xt_ref[0], xf_ref[0], idx_ref[0]
    wa, wb, b1 = wa_ref[...], wb_ref[...], b1_ref[...]
    s1, t1 = s1_ref[...], t1_ref[...]
    w2, b2 = w2_ref[...], b2_ref[...]
    h2_dim = w2.shape[1]
    a = jnp.dot(xt, wa, preferred_element_type=jnp.float32) + b1      # (T, H1)

    tot_s = jnp.zeros((1, h2_dim), jnp.float32)
    tot_q = jnp.zeros((1, h2_dim), jnp.float32)
    for k in range(K):
        x_nbr = _gather_nbr(idx, k, xf)
        h1 = a + jnp.dot(x_nbr, wb, preferred_element_type=jnp.float32)
        h1 = jnp.maximum(h1 * s1 + t1, 0.0)                            # BN1 + ReLU
        h2 = jnp.dot(h1, w2, preferred_element_type=jnp.float32) + b2  # (T, H2)
        tot_s = tot_s + jnp.sum(h2, axis=0, keepdims=True)
        tot_q = tot_q + jnp.sum(h2 * h2, axis=0, keepdims=True)
    s_ref[...] = s_ref[...] + jnp.concatenate([tot_s, tot_q], axis=0)

    @pl.when(last)
    def _():
        sums = s_ref[...]
        mu = sums[0:1, :] * (1.0 / count)
        var = jnp.maximum(sums[1:2, :] * (1.0 / count) - mu * mu, 0.0)
        s_ref[...] = jnp.concatenate([mu, var], axis=0)


# ----------------------------------------------------------------------------
# Kernel 4 (pass F): fused shared-MLP + BN + ReLU + max over K  ->  (B, H2, N)
# ----------------------------------------------------------------------------
def _edge_final_kernel(K, xt_ref, xf_ref, idx_ref,
                       wa_ref, wb_ref, b1_ref, s1_ref, t1_ref,
                       w2_ref, b2_ref, s2_ref, t2_ref, o_ref):
    xt, xf, idx = xt_ref[0], xf_ref[0], idx_ref[0]
    wa, wb, b1 = wa_ref[...], wb_ref[...], b1_ref[...]
    s1, t1 = s1_ref[...], t1_ref[...]
    w2, b2 = w2_ref[...], b2_ref[...]
    s2, t2 = s2_ref[...], t2_ref[...]

    a = jnp.dot(xt, wa, preferred_element_type=jnp.float32) + b1      # (T, H1)
    acc = None
    for k in range(K):                      # max over neighbors, no K*rows tensor alive
        x_nbr = _gather_nbr(idx, k, xf)
        h1 = a + jnp.dot(x_nbr, wb, preferred_element_type=jnp.float32)
        h1 = jnp.maximum(h1 * s1 + t1, 0.0)
        h2 = jnp.dot(h1, w2, preferred_element_type=jnp.float32) + b2
        h2 = jnp.maximum(h2 * s2 + t2, 0.0)
        acc = h2 if acc is None else jnp.maximum(acc, h2)
    # lane-dense store: channels on sublanes, points (N) on the 128-wide lanes
    o_ref[0] = jnp.transpose(acc)                                      # (H2, T)


# ----------------------------------------------------------------------------
# pallas_call wrappers for the edge kernels
# ----------------------------------------------------------------------------
def _edge_point_specs(N, C, K, T):
    return [
        pl.BlockSpec((1, T, C), lambda b, t: (b, t, 0)),   # center-point tile
        pl.BlockSpec((1, N, C), lambda b, t: (b, 0, 0)),   # all points of batch b
        pl.BlockSpec((1, T, K), lambda b, t: (b, t, 0)),   # kNN indices (tile)
    ]


def edge_stats1(x, idx, wa, wb, b1, K):
    B, N, C = x.shape
    H1 = wa.shape[1]
    T = _pick_tile(N, (256, 128))
    specs = _edge_point_specs(N, C, K, T) + [_full_spec(p.shape) for p in (wa, wb, b1)]
    return pl.pallas_call(
        functools.partial(_edge_stats1_kernel, K, float(B * N * K)),
        out_shape=jax.ShapeDtypeStruct((2, H1), jnp.float32),
        grid=(B, N // T),
        in_specs=specs,
        out_specs=pl.BlockSpec((2, H1), lambda b, t: (0, 0)),
        compiler_params=pltpu.CompilerParams(           # global reduction -> arbitrary
            dimension_semantics=("arbitrary", "arbitrary")),
    )(x, x, idx, wa, wb, b1)


def edge_stats2(x, idx, wa, wb, b1, s1, t1, w2, b2, K):
    B, N, C = x.shape
    H2 = w2.shape[1]
    T = _pick_tile(N, (256, 128))
    specs = _edge_point_specs(N, C, K, T) + [
        _full_spec(p.shape) for p in (wa, wb, b1, s1, t1, w2, b2)]
    return pl.pallas_call(
        functools.partial(_edge_stats2_kernel, K, float(B * N * K)),
        out_shape=jax.ShapeDtypeStruct((2, H2), jnp.float32),
        grid=(B, N // T),
        in_specs=specs,
        out_specs=pl.BlockSpec((2, H2), lambda b, t: (0, 0)),
        compiler_params=pltpu.CompilerParams(
            dimension_semantics=("arbitrary", "arbitrary")),
    )(x, x, idx, wa, wb, b1, s1, t1, w2, b2)


def edge_final(x, idx, wa, wb, b1, s1, t1, w2, b2, s2, t2, K):
    B, N, C = x.shape
    H2 = w2.shape[1]
    T = _pick_tile(N, (256, 128))
    specs = _edge_point_specs(N, C, K, T) + [
        _full_spec(p.shape) for p in (wa, wb, b1, s1, t1, w2, b2, s2, t2)]
    return pl.pallas_call(
        functools.partial(_edge_final_kernel, K),
        out_shape=jax.ShapeDtypeStruct((B, H2, N), jnp.float32),
        grid=(B, N // T),
        in_specs=specs,
        out_specs=pl.BlockSpec((1, H2, T), lambda b, t: (b, 0, t)),
        compiler_params=pltpu.CompilerParams(           # fully independent tiles
            dimension_semantics=("parallel", "parallel")),
    )(x, x, idx, wa, wb, b1, s1, t1, w2, b2, s2, t2)


# ----------------------------------------------------------------------------
# Top-level EdgeConv forward
# ----------------------------------------------------------------------------
def edge_conv(points_bcn, params, num_neighbor):
    """points_bcn: (B, C, N) as in PyTorch. Returns (B, output_dims[-1], N)."""
    B, C, N = points_bcn.shape
    K = num_neighbor
    w1, b1, g1, be1, w2, b2, g2, be2 = params

    x = jnp.transpose(points_bcn, (0, 2, 1))               # (B, N, C) channel-last

    # --- dynamic graph: pairwise distances (Pallas) + kNN selection ---------
    d = pairwise_sqdist(x)                                  # (B, N, N)
    # TODO(synk): top-k selection (sort) has no clean Pallas equivalent; the
    # tiny (B, N, K) index table is produced with plain JAX.
    _, idx = jax.lax.top_k(-d, K)                           # self included
    idx = idx.astype(jnp.int32)

    # layer-1 algebraic split:  edge @ W1 = x_i @ wa + x_j @ wb
    wa = w1[:C] - w1[C:]
    wb = w1[C:]

    # --- BN(train) stats over all K*B*N edges, folded into scale/shift ------
    st1 = edge_stats1(x, idx, wa, wb, b1, K)                # rows: [mu1, var1]
    s1 = g1 * jax.lax.rsqrt(st1[1:2] + _BN_EPS)
    t1 = be1 - st1[0:1] * s1
    st2 = edge_stats2(x, idx, wa, wb, b1, s1, t1, w2, b2, K)
    s2 = g2 * jax.lax.rsqrt(st2[1:2] + _BN_EPS)
    t2 = be2 - st2[0:1] * s2

    # --- fused MLP + ReLU + max over K, lane-dense (B, H2, N) output --------
    return edge_final(x, idx, wa, wb, b1, s1, t1, w2, b2, s2, t2, K)


# ----------------------------------------------------------------------------
# Pure-JAX reference (mirrors the PyTorch module, training-mode BatchNorm)
# ----------------------------------------------------------------------------
def edge_conv_reference(points_bcn, params, K):
    w1, b1, g1, be1, w2, b2, g2, be2 = params
    x = jnp.transpose(points_bcn, (0, 2, 1))                # (B, N, C)
    sq = jnp.sum(x * x, axis=-1)
    d = sq[:, :, None] + sq[:, None, :] - 2.0 * jnp.einsum("bnc,bmc->bnm", x, x)
    _, idx = jax.lax.top_k(-d, K)
    nbr = jax.vmap(lambda p, i: p[i])(x, idx)               # (B, N, K, C)
    ctr = jnp.broadcast_to(x[:, :, None, :], nbr.shape)
    edge = jnp.concatenate([ctr, nbr - ctr], axis=-1)       # (B, N, K, 2C)

    def bn_relu(h, g, be):
        mu = jnp.mean(h, axis=(0, 1, 2), keepdims=True)
        var = jnp.mean((h - mu) ** 2, axis=(0, 1, 2), keepdims=True)
        return jnp.maximum((h - mu) * jax.lax.rsqrt(var + _BN_EPS) * g + be, 0.0)

    h = bn_relu(edge @ w1 + b1, g1, be1)
    h = bn_relu(h @ w2 + b2, g2, be2)
    return jnp.transpose(jnp.max(h, axis=2), (0, 2, 1))     # (B, H2, N)


def init_params(key, input_dim, output_dims):
    """Deterministic synthetic params. Conv weight stored as (C_in, C_out)."""
    h1, h2 = output_dims
    c_in = 2 * input_dim
    ks = jax.random.split(key, 8)
    w1 = 0.2 * jax.random.normal(ks[0], (c_in, h1), jnp.float32)
    b1 = 0.1 * jax.random.normal(ks[1], (1, h1), jnp.float32)
    g1 = 1.0 + 0.1 * jax.random.normal(ks[2], (1, h1), jnp.float32)
    be1 = 0.1 * jax.random.normal(ks[3], (1, h1), jnp.float32)
    w2 = 0.2 * jax.random.normal(ks[4], (h1, h2), jnp.float32)
    b2 = 0.1 * jax.random.normal(ks[5], (1, h2), jnp.float32)
    g2 = 1.0 + 0.1 * jax.random.normal(ks[6], (1, h2), jnp.float32)
    be2 = 0.1 * jax.random.normal(ks[7], (1, h2), jnp.float32)
    return (w1, b1, g1, be1, w2, b2, g2, be2)


if __name__ == "__main__":
    B, C, N = 2, 4, 16          # batch, input_dim (num_channel1), num_point
    K = 4                       # num_neighbor
    output_dims = (8, 16)       # shared_mlp output channels

    key = jax.random.PRNGKey(0)
    k_pts, k_par = jax.random.split(key)
    points = jax.random.normal(k_pts, (B, C, N), jnp.float32)   # PyTorch (B, C, N)
    params = init_params(k_par, C, output_dims)

    out = jax.jit(edge_conv, static_argnums=2)(points, params, K)
    out = jax.block_until_ready(out)
    assert out.shape == (B, output_dims[-1], N), out.shape
    assert bool(jnp.all(jnp.isfinite(out)))

    ref = jax.block_until_ready(edge_conv_reference(points, params, K))
    err = float(jnp.max(jnp.abs(out - ref)))
    assert bool(jnp.allclose(out, ref, atol=5e-3, rtol=5e-3)), f"max |err| = {err}"

    print("KERNEL_OK")
</pallas_src>

<mosaic_0001>
module attributes {stable_mosaic.version = 11 : i64} {
  func.func @_knn_dist_kernel(%arg0: i32, %arg1: i32, %arg2: memref<1x16x4xf32, #tpu.memory_space<vmem>>, %arg3: memref<1x16x4xf32, #tpu.memory_space<vmem>>, %arg4: memref<1x16x16xf32, #tpu.memory_space<vmem>>) attributes {dimension_semantics = [#tpu.dimension_semantics<parallel>, #tpu.dimension_semantics<parallel>], iteration_bounds = array<i64: 2, 1>, scalar_prefetch = 0 : i64, scratch_operands = 0 : i64, tpu.core_type = #tpu.core_type<tc>, window_params = [{transform_indices = @transform_0, window_bounds = array<i64: 1, 16, 4>}, {transform_indices = @transform_1, window_bounds = array<i64: 1, 16, 4>}, {transform_indices = @transform_2, window_bounds = array<i64: 1, 16, 16>}]} {
    %c0 = arith.constant 0 : index
    %c0_0 = arith.constant 0 : index
    %c0_1 = arith.constant 0 : index
    %0 = vector.load %arg2[%c0, %c0_0, %c0_1] : memref<1x16x4xf32, #tpu.memory_space<vmem>>, vector<1x16x4xf32>
    %1 = vector.shape_cast %0 : vector<1x16x4xf32> to vector<16x4xf32>
    %c0_2 = arith.constant 0 : index
    %c0_3 = arith.constant 0 : index
    %c0_4 = arith.constant 0 : index
    %2 = vector.load %arg3[%c0_2, %c0_3, %c0_4] : memref<1x16x4xf32, #tpu.memory_space<vmem>>, vector<1x16x4xf32>
    %3 = vector.shape_cast %2 : vector<1x16x4xf32> to vector<16x4xf32>
    %4 = arith.mulf %1, %1 : vector<16x4xf32>
    %cst = arith.constant dense<0.000000e+00> : vector<16xf32>
    %5 = vector.multi_reduction <add>, %4, %cst [1] : vector<16x4xf32> to vector<16xf32>
    %6 = vector.shape_cast %5 : vector<16xf32> to vector<16x1xf32>
    %7 = arith.mulf %3, %3 : vector<16x4xf32>
    %cst_5 = arith.constant dense<0.000000e+00> : vector<16xf32>
    %8 = vector.multi_reduction <add>, %7, %cst_5 [1] : vector<16x4xf32> to vector<16xf32>
    %9 = vector.shape_cast %8 : vector<16xf32> to vector<1x16xf32>
    %cst_6 = arith.constant dense<0.000000e+00> : vector<16x16xf32>
    %10 = tpu.matmul %1, %3, %cst_6 {dimension_numbers = #tpu.dot_dimension_numbers<[1], [1], [0], [0], [0, 0, 1, 0], [], []>} : vector<16x4xf32>, vector<16x4xf32>, vector<16x16xf32> -> vector<16x16xf32>
    %11 = vector.broadcast %6 : vector<16x1xf32> to vector<16x16xf32>
    %12 = vector.broadcast %9 : vector<1x16xf32> to vector<16x16xf32>
    %13 = arith.addf %11, %12 : vector<16x16xf32>
    %cst_7 = arith.constant 2.000000e+00 : f32
    %14 = vector.broadcast %cst_7 : f32 to vector<16x16xf32>
    %15 = arith.mulf %14, %10 : vector<16x16xf32>
    %16 = arith.subf %13, %15 : vector<16x16xf32>
    %c0_8 = arith.constant 0 : index
    %c0_9 = arith.constant 0 : index
    %c0_10 = arith.constant 0 : index
    %17 = vector.load %arg4[%c0_8, %c0_9, %c0_10] : memref<1x16x16xf32, #tpu.memory_space<vmem>>, vector<1x16x16xf32>
    %18 = vector.shape_cast %17 : vector<1x16x16xf32> to vector<16x16xf32>
    %19 = vector.shape_cast %16 : vector<16x16xf32> to vector<1x16x16xf32>
    tpu.vector_store %arg4[%c0_8, %c0_9, %c0_10], %19 {strides = array<i32>} : memref<1x16x16xf32, #tpu.memory_space<vmem>>, vector<1x16x16xf32>,
    return
  }
  func.func @transform_0(%arg0: i32, %arg1: i32) -> (i32, i32, i32) {
    %c0_i32 = arith.constant 0 : i32
    %c0_i32_0 = arith.constant 0 : i32
    return %arg0, %arg1, %c0_i32 : i32, i32, i32
  }
  func.func @transform_1(%arg0: i32, %arg1: i32) -> (i32, i32, i32) {
    %c0_i32 = arith.constant 0 : i32
    %c0_i32_0 = arith.constant 0 : i32
    %c0_i32_1 = arith.constant 0 : i32
    return %arg0, %c0_i32, %c0_i32_0 : i32, i32, i32
  }
  func.func @transform_2(%arg0: i32, %arg1: i32) -> (i32, i32, i32) {
    %c0_i32 = arith.constant 0 : i32
    %c0_i32_0 = arith.constant 0 : i32
    return %arg0, %arg1, %c0_i32 : i32, i32, i32
  }
}

module attributes {stable_mosaic.version = 11 : i64} {
  func.func @_edge_stats1_kernel(%arg0: i32, %arg1: i32, %arg2: memref<1x16x4xf32, #tpu.memory_space<vmem>>, %arg3: memref<1x16x4xf32, #tpu.memory_space<vmem>>, %arg4: memref<1x16x4xi32, #tpu.memory_space<vmem>>, %arg5: memref<4x8xf32, #tpu.memory_space<vmem>>, %arg6: memref<4x8xf32, #tpu.memory_space<vmem>>, %arg7: memref<1x8xf32, #tpu.memory_space<vmem>>, %arg8: memref<2x8xf32, #tpu.memory_space<vmem>>) attributes {dimension_semantics = [#tpu.dimension_semantics<arbitrary>, #tpu.dimension_semantics<arbitrary>], iteration_bounds = array<i64: 2, 1>, scalar_prefetch = 0 : i64, scratch_operands = 0 : i64, tpu.core_type = #tpu.core_type<tc>, window_params = [{transform_indices = @transform_0, window_bounds = array<i64: 1, 16, 4>}, {transform_indices = @transform_1, window_bounds = array<i64: 1, 16, 4>}, {transform_indices = @transform_2, window_bounds = array<i64: 1, 16, 4>}, {pipeline_mode = #tpu.pipeline_mode<synchronous>, transform_indices = @transform_3, window_bounds = array<i64: 4, 8>}, {pipeline_mode = #tpu.pipeline_mode<synchronous>, transform_indices = @transform_4, window_bounds = array<i64: 4, 8>}, {pipeline_mode = #tpu.pipeline_mode<synchronous>, transform_indices = @transform_5, window_bounds = array<i64: 1, 8>}, {pipeline_mode = #tpu.pipeline_mode<synchronous>, transform_indices = @transform_6, window_bounds = array<i64: 2, 8>}]} {
    %c0_i32 = arith.constant 0 : i32
    %0 = arith.cmpi eq, %arg0, %c0_i32 : i32
    %c0_i32_0 = arith.constant 0 : i32
    %1 = arith.cmpi eq, %arg1, %c0_i32_0 : i32
    %2 = arith.andi %0, %1 : i1
    %c1_i32 = arith.constant 1 : i32
    %3 = arith.cmpi eq, %arg0, %c1_i32 : i32
    %c0_i32_1 = arith.constant 0 : i32
    %4 = arith.cmpi eq, %arg1, %c0_i32_1 : i32
    %5 = arith.andi %3, %4 : i1
    %6 = arith.extui %2 : i1 to i32
    %c0_i32_2 = arith.constant 0 : i32
    %7 = arith.cmpi ne, %6, %c0_i32_2 : i32
    scf.if %7 {
      %cst_40 = arith.constant 0.000000e+00 : f32
      %96 = vector.broadcast %cst_40 : f32 to vector<2x8xf32>
      %c0_41 = arith.constant 0 : index
      %c0_42 = arith.constant 0 : index
      %97 = vector.load %arg8[%c0_41, %c0_42] : memref<2x8xf32, #tpu.memory_space<vmem>>, vector<2x8xf32>
      tpu.vector_store %arg8[%c0_41, %c0_42], %96 {strides = array<i32>} : memref<2x8xf32, #tpu.memory_space<vmem>>, vector<2x8xf32>,
    } else {
    }
    %c0 = arith.constant 0 : index
    %c0_3 = arith.constant 0 : index
    %c0_4 = arith.constant 0 : index
    %8 = vector.load %arg2[%c0, %c0_3, %c0_4] : memref<1x16x4xf32, #tpu.memory_space<vmem>>, vector<1x16x4xf32>
    %9 = vector.shape_cast %8 : vector<1x16x4xf32> to vector<16x4xf32>
    %c0_5 = arith.constant 0 : index
    %c0_6 = arith.constant 0 : index
    %c0_7 = arith.constant 0 : index
    %10 = vector.load %arg3[%c0_5, %c0_6, %c0_7] : memref<1x16x4xf32, #tpu.memory_space<vmem>>, vector<1x16x4xf32>
    %11 = vector.shape_cast %10 : vector<1x16x4xf32> to vector<16x4xf32>
    %c0_8 = arith.constant 0 : index
    %c0_9 = arith.constant 0 : index
    %c0_10 = arith.constant 0 : index
    %12 = vector.load %arg4[%c0_8, %c0_9, %c0_10] : memref<1x16x4xi32, #tpu.memory_space<vmem>>, vector<1x16x4xi32>
    %13 = vector.shape_cast %12 : vector<1x16x4xi32> to vector<16x4xi32>
    %c0_11 = arith.constant 0 : index
    %c0_12 = arith.constant 0 : index
    %14 = vector.load %arg5[%c0_11, %c0_12] : memref<4x8xf32, #tpu.memory_space<vmem>>, vector<4x8xf32>
    %c0_13 = arith.constant 0 : index
    %c0_14 = arith.constant 0 : index
    %15 = vector.load %arg6[%c0_13, %c0_14] : memref<4x8xf32, #tpu.memory_space<vmem>>, vector<4x8xf32>
    %c0_15 = arith.constant 0 : index
    %c0_16 = arith.constant 0 : index
    %16 = vector.load %arg7[%c0_15, %c0_16] : memref<1x8xf32, #tpu.memory_space<vmem>>, vector<1x8xf32>
    %cst = arith.constant dense<0.000000e+00> : vector<16x8xf32>
    %17 = tpu.matmul %9, %14, %cst {dimension_numbers = #tpu.dot_dimension_numbers<[1], [0], [0], [1], [0, 0, 1, 1], [], []>} : vector<16x4xf32>, vector<4x8xf32>, vector<16x8xf32> -> vector<16x8xf32>
    %18 = vector.broadcast %16 : vector<1x8xf32> to vector<16x8xf32>
    %19 = arith.addf %17, %18 : vector<16x8xf32>
    %cst_17 = arith.constant 0.000000e+00 : f32
    %20 = vector.broadcast %cst_17 : f32 to vector<1x8xf32>
    %cst_18 = arith.constant 0.000000e+00 : f32
    %21 = vector.broadcast %cst_18 : f32 to vector<1x8xf32>
    %22 = vector.extract_strided_slice %13 {offsets = [0, 0], sizes = [16, 1], strides = [1, 1]} : vector<16x4xi32> to vector<16x1xi32>
    %23 = tpu.iota {dimensions = array<i32: 1>} : vector<1x16xi32>
    %24 = vector.broadcast %22 : vector<16x1xi32> to vector<16x16xi32>
    %25 = vector.broadcast %23 : vector<1x16xi32> to vector<16x16xi32>
    %26 = arith.cmpi eq, %24, %25 : vector<16x16xi32>
    %27 = arith.extui %26 : vector<16x16xi1> to vector<16x16xi32>
    %28 = arith.sitofp %27 : vector<16x16xi32> to vector<16x16xf32>
    %cst_19 = arith.constant dense<0.000000e+00> : vector<16x4xf32>
    %29 = tpu.matmul %28, %11, %cst_19 {dimension_numbers = #tpu.dot_dimension_numbers<[1], [0], [0], [1], [0, 0, 1, 1], [], []>} : vector<16x16xf32>, vector<16x4xf32>, vector<16x4xf32> -> vector<16x4xf32>
    %cst_20 = arith.constant dense<0.000000e+00> : vector<16x8xf32>
    %30 = tpu.matmul %29, %15, %cst_20 {dimension_numbers = #tpu.dot_dimension_numbers<[1], [0], [0], [1], [0, 0, 1, 1], [], []>} : vector<16x4xf32>, vector<4x8xf32>, vector<16x8xf32> -> vector<16x8xf32>
    %31 = arith.addf %19, %30 : vector<16x8xf32>
    %cst_21 = arith.constant dense<0.000000e+00> : vector<8xf32>
    %32 = vector.multi_reduction <add>, %31, %cst_21 [0] : vector<16x8xf32> to vector<8xf32>
    %33 = vector.shape_cast %32 : vector<8xf32> to vector<1x8xf32>
    %34 = arith.addf %20, %33 : vector<1x8xf32>
    %35 = arith.mulf %31, %31 : vector<16x8xf32>
    %cst_22 = arith.constant dense<0.000000e+00> : vector<8xf32>
    %36 = vector.multi_reduction <add>, %35, %cst_22 [0] : vector<16x8xf32> to vector<8xf32>
    %37 = vector.shape_cast %36 : vector<8xf32> to vector<1x8xf32>
    %38 = arith.addf %21, %37 : vector<1x8xf32>
    %39 = vector.extract_strided_slice %13 {offsets = [0, 1], sizes = [16, 1], strides = [1, 1]} : vector<16x4xi32> to vector<16x1xi32>
    %40 = tpu.iota {dimensions = array<i32: 1>} : vector<1x16xi32>
    %41 = vector.broadcast %39 : vector<16x1xi32> to vector<16x16xi32>
    %42 = vector.broadcast %40 : vector<1x16xi32> to vector<16x16xi32>
    %43 = arith.cmpi eq, %41, %42 : vector<16x16xi32>
    %44 = arith.extui %43 : vector<16x16xi1> to vector<16x16xi32>
    %45 = arith.sitofp %44 : vector<16x16xi32> to vector<16x16xf32>
    %cst_23 = arith.constant dense<0.000000e+00> : vector<16x4xf32>
    %46 = tpu.matmul %45, %11, %cst_23 {dimension_numbers = #tpu.dot_dimension_numbers<[1], [0], [0], [1], [0, 0, 1, 1], [], []>} : vector<16x16xf32>, vector<16x4xf32>, vector<16x4xf32> -> vector<16x4xf32>
    %cst_24 = arith.constant dense<0.000000e+00> : vector<16x8xf32>
    %47 = tpu.matmul %46, %15, %cst_24 {dimension_numbers = #tpu.dot_dimension_numbers<[1], [0], [0], [1], [0, 0, 1, 1], [], []>} : vector<16x4xf32>, vector<4x8xf32>, vector<16x8xf32> -> vector<16x8xf32>
    %48 = arith.addf %19, %47 : vector<16x8xf32>
    %cst_25 = arith.constant dense<0.000000e+00> : vector<8xf32>
    %49 = vector.multi_reduction <add>, %48, %cst_25 [0] : vector<16x8xf32> to vector<8xf32>
    %50 = vector.shape_cast %49 : vector<8xf32> to vector<1x8xf32>
    %51 = arith.addf %34, %50 : vector<1x8xf32>
    %52 = arith.mulf %48, %48 : vector<16x8xf32>
    %cst_26 = arith.constant dense<0.000000e+00> : vector<8xf32>
    %53 = vector.multi_reduction <add>, %52, %cst_26 [0] : vector<16x8xf32> to vector<8xf32>
    %54 = vector.shape_cast %53 : vector<8xf32> to vector<1x8xf32>
    %55 = arith.addf %38, %54 : vector<1x8xf32>
    %56 = vector.extract_strided_slice %13 {offsets = [0, 2], sizes = [16, 1], strides = [1, 1]} : vector<16x4xi32> to vector<16x1xi32>
    %57 = tpu.iota {dimensions = array<i32: 1>} : vector<1x16xi32>
    %58 = vector.broadcast %56 : vector<16x1xi32> to vector<16x16xi32>
    %59 = vector.broadcast %57 : vector<1x16xi32> to vector<16x16xi32>
    %60 = arith.cmpi eq, %58, %59 : vector<16x16xi32>
    %61 = arith.extui %60 : vector<16x16xi1> to vector<16x16xi32>
    %62 = arith.sitofp %61 : vector<16x16xi32> to vector<16x16xf32>
    %cst_27 = arith.constant dense<0.000000e+00> : vector<16x4xf32>
    %63 = tpu.matmul %62, %11, %cst_27 {dimension_numbers = #tpu.dot_dimension_numbers<[1], [0], [0], [1], [0, 0, 1, 1], [], []>} : vector<16x16xf32>, vector<16x4xf32>, vector<16x4xf32> -> vector<16x4xf32>
    %cst_28 = arith.constant dense<0.000000e+00> : vector<16x8xf32>
    %64 = tpu.matmul %63, %15, %cst_28 {dimension_numbers = #tpu.dot_dimension_numbers<[1], [0], [0], [1], [0, 0, 1, 1], [], []>} : vector<16x4xf32>, vector<4x8xf32>, vector<16x8xf32> -> vector<16x8xf32>
    %65 = arith.addf %19, %64 : vector<16x8xf32>
    %cst_29 = arith.constant dense<0.000000e+00> : vector<8xf32>
    %66 = vector.multi_reduction <add>, %65, %cst_29 [0] : vector<16x8xf32> to vector<8xf32>
    %67 = vector.shape_cast %66 : vector<8xf32> to vector<1x8xf32>
    %68 = arith.addf %51, %67 : vector<1x8xf32>
    %69 = arith.mulf %65, %65 : vector<16x8xf32>
    %cst_30 = arith.constant dense<0.000000e+00> : vector<8xf32>
    %70 = vector.multi_reduction <add>, %69, %cst_30 [0] : vector<16x8xf32> to vector<8xf32>
    %71 = vector.shape_cast %70 : vector<8xf32> to vector<1x8xf32>
    %72 = arith.addf %55, %71 : vector<1x8xf32>
    %73 = vector.extract_strided_slice %13 {offsets = [0, 3], sizes = [16, 1], strides = [1, 1]} : vector<16x4xi32> to vector<16x1xi32>
    %74 = tpu.iota {dimensions = array<i32: 1>} : vector<1x16xi32>
    %75 = vector.broadcast %73 : vector<16x1xi32> to vector<16x16xi32>
    %76 = vector.broadcast %74 : vector<1x16xi32> to vector<16x16xi32>
    %77 = arith.cmpi eq, %75, %76 : vector<16x16xi32>
    %78 = arith.extui %77 : vector<16x16xi1> to vector<16x16xi32>
    %79 = arith.sitofp %78 : vector<16x16xi32> to vector<16x16xf32>
    %cst_31 = arith.constant dense<0.000000e+00> : vector<16x4xf32>
    %80 = tpu.matmul %79, %11, %cst_31 {dimension_numbers = #tpu.dot_dimension_numbers<[1], [0], [0], [1], [0, 0, 1, 1], [], []>} : vector<16x16xf32>, vector<16x4xf32>, vector<16x4xf32> -> vector<16x4xf32>
    %cst_32 = arith.constant dense<0.000000e+00> : vector<16x8xf32>
    %81 = tpu.matmul %80, %15, %cst_32 {dimension_numbers = #tpu.dot_dimension_numbers<[1], [0], [0], [1], [0, 0, 1, 1], [], []>} : vector<16x4xf32>, vector<4x8xf32>, vector<16x8xf32> -> vector<16x8xf32>
    %82 = arith.addf %19, %81 : vector<16x8xf32>
    %cst_33 = arith.constant dense<0.000000e+00> : vector<8xf32>
    %83 = vector.multi_reduction <add>, %82, %cst_33 [0] : vector<16x8xf32> to vector<8xf32>
    %84 = vector.shape_cast %83 : vector<8xf32> to vector<1x8xf32>
    %85 = arith.addf %68, %84 : vector<1x8xf32>
    %86 = arith.mulf %82, %82 : vector<16x8xf32>
    %cst_34 = arith.constant dense<0.000000e+00> : vector<8xf32>
    %87 = vector.multi_reduction <add>, %86, %cst_34 [0] : vector<16x8xf32> to vector<8xf32>
    %88 = vector.shape_cast %87 : vector<8xf32> to vector<1x8xf32>
    %89 = arith.addf %72, %88 : vector<1x8xf32>
    %c0_35 = arith.constant 0 : index
    %c0_36 = arith.constant 0 : index
    %90 = vector.load %arg8[%c0_35, %c0_36] : memref<2x8xf32, #tpu.memory_space<vmem>>, vector<2x8xf32>
    %91 = tpu.concatenate %85, %89 in 0 : vector<1x8xf32>, vector<1x8xf32> -> vector<2x8xf32>
    %92 = arith.addf %90, %91 : vector<2x8xf32>
    %c0_37 = arith.constant 0 : index
    %c0_38 = arith.constant 0 : index
    %93 = vector.load %arg8[%c0_37, %c0_38] : memref<2x8xf32, #tpu.memory_space<vmem>>, vector<2x8xf32>
    tpu.vector_store %arg8[%c0_37, %c0_38], %92 {strides = array<i32>} : memref<2x8xf32, #tpu.memory_space<vmem>>, vector<2x8xf32>,
    %94 = arith.extui %5 : i1 to i32
    %c0_i32_39 = arith.constant 0 : i32
    %95 = arith.cmpi ne, %94, %c0_i32_39 : i32
    scf.if %95 {
      %c0_40 = arith.constant 0 : index
      %c0_41 = arith.constant 0 : index
      %96 = vector.load %arg8[%c0_40, %c0_41] : memref<2x8xf32, #tpu.memory_space<vmem>>, vector<2x8xf32>
      %97 = vector.extract_strided_slice %96 {offsets = [0, 0], sizes = [1, 8], strides = [1, 1]} : vector<2x8xf32> to vector<1x8xf32>
      %cst_42 = arith.constant 7.812500e-03 : f32
      %98 = vector.broadcast %cst_42 : f32 to vector<1x8xf32>
      %99 = arith.mulf %97, %98 : vector<1x8xf32>
      %100 = vector.extract_strided_slice %96 {offsets = [1, 0], sizes = [1, 8], strides = [1, 1]} : vector<2x8xf32> to vector<1x8xf32>
      %cst_43 = arith.constant 7.812500e-03 : f32
      %101 = vector.broadcast %cst_43 : f32 to vector<1x8xf32>
      %102 = arith.mulf %100, %101 : vector<1x8xf32>
      %103 = arith.mulf %99, %99 : vector<1x8xf32>
      %104 = arith.subf %102, %103 : vector<1x8xf32>
      %cst_44 = arith.constant 0.000000e+00 : f32
      %105 = vector.broadcast %cst_44 : f32 to vector<1x8xf32>
      %106 = arith.maximumf %104, %105 : vector<1x8xf32>
      %107 = tpu.concatenate %99, %106 in 0 : vector<1x8xf32>, vector<1x8xf32> -> vector<2x8xf32>
      %c0_45 = arith.constant 0 : index
      %c0_46 = arith.constant 0 : index
      %108 = vector.load %arg8[%c0_45, %c0_46] : memref<2x8xf32, #tpu.memory_space<vmem>>, vector<2x8xf32>
      tpu.vector_store %arg8[%c0_45, %c0_46], %107 {strides = array<i32>} : memref<2x8xf32, #tpu.memory_space<vmem>>, vector<2x8xf32>,
    } else {
    }
    return
  }
  func.func @transform_0(%arg0: i32, %arg1: i32) -> (i32, i32, i32) {
    %c0_i32 = arith.constant 0 : i32
    %c0_i32_0 = arith.constant 0 : i32
    return %arg0, %arg1, %c0_i32 : i32, i32, i32
  }
  func.func @transform_1(%arg0: i32, %arg1: i32) -> (i32, i32, i32) {
    %c0_i32 = arith.constant 0 : i32
    %c0_i32_0 = arith.constant 0 : i32
    %c0_i32_1 = arith.constant 0 : i32
    return %arg0, %c0_i32, %c0_i32_0 : i32, i32, i32
  }
  func.func @transform_2(%arg0: i32, %arg1: i32) -> (i32, i32, i32) {
    %c0_i32 = arith.constant 0 : i32
    %c0_i32_0 = arith.constant 0 : i32
    return %arg0, %arg1, %c0_i32 : i32, i32, i32
  }
  func.func @transform_3(%arg0: i32, %arg1: i32) -> (i32, i32) {
    %c0_i32 = arith.constant 0 : i32
    %c0_i32_0 = arith.constant 0 : i32
    %c0_i32_1 = arith.constant 0 : i32
    return %c0_i32, %c0_i32_0 : i32, i32
  }
  func.func @transform_4(%arg0: i32, %arg1: i32) -> (i32, i32) {
    %c0_i32 = arith.constant 0 : i32
    %c0_i32_0 = arith.constant 0 : i32
    %c0_i32_1 = arith.constant 0 : i32
    return %c0_i32, %c0_i32_0 : i32, i32
  }
  func.func @transform_5(%arg0: i32, %arg1: i32) -> (i32, i32) {
    %c0_i32 = arith.constant 0 : i32
    %c0_i32_0 = arith.constant 0 : i32
    %c0_i32_1 = arith.constant 0 : i32
    return %c0_i32, %c0_i32_0 : i32, i32
  }
  func.func @transform_6(%arg0: i32, %arg1: i32) -> (i32, i32) {
    %c0_i32 = arith.constant 0 : i32
    %c0_i32_0 = arith.constant 0 : i32
    %c0_i32_1 = arith.constant 0 : i32
    return %c0_i32, %c0_i32_0 : i32, i32
  }
}

module attributes {stable_mosaic.version = 11 : i64} {
  func.func @_edge_stats2_kernel(%arg0: i32, %arg1: i32, %arg2: memref<1x16x4xf32, #tpu.memory_space<vmem>>, %arg3: memref<1x16x4xf32, #tpu.memory_space<vmem>>, %arg4: memref<1x16x4xi32, #tpu.memory_space<vmem>>, %arg5: memref<4x8xf32, #tpu.memory_space<vmem>>, %arg6: memref<4x8xf32, #tpu.memory_space<vmem>>, %arg7: memref<1x8xf32, #tpu.memory_space<vmem>>, %arg8: memref<1x8xf32, #tpu.memory_space<vmem>>, %arg9: memref<1x8xf32, #tpu.memory_space<vmem>>, %arg10: memref<8x16xf32, #tpu.memory_space<vmem>>, %arg11: memref<1x16xf32, #tpu.memory_space<vmem>>, %arg12: memref<2x16xf32, #tpu.memory_space<vmem>>) attributes {dimension_semantics = [#tpu.dimension_semantics<arbitrary>, #tpu.dimension_semantics<arbitrary>], iteration_bounds = array<i64: 2, 1>, scalar_prefetch = 0 : i64, scratch_operands = 0 : i64, tpu.core_type = #tpu.core_type<tc>, window_params = [{transform_indices = @transform_0, window_bounds = array<i64: 1, 16, 4>}, {transform_indices = @transform_1, window_bounds = array<i64: 1, 16, 4>}, {transform_indices = @transform_2, window_bounds = array<i64: 1, 16, 4>}, {pipeline_mode = #tpu.pipeline_mode<synchronous>, transform_indices = @transform_3, window_bounds = array<i64: 4, 8>}, {pipeline_mode = #tpu.pipeline_mode<synchronous>, transform_indices = @transform_4, window_bounds = array<i64: 4, 8>}, {pipeline_mode = #tpu.pipeline_mode<synchronous>, transform_indices = @transform_5, window_bounds = array<i64: 1, 8>}, {pipeline_mode = #tpu.pipeline_mode<synchronous>, transform_indices = @transform_6, window_bounds = array<i64: 1, 8>}, {pipeline_mode = #tpu.pipeline_mode<synchronous>, transform_indices = @transform_7, window_bounds = array<i64: 1, 8>}, {pipeline_mode = #tpu.pipeline_mode<synchronous>, transform_indices = @transform_8, window_bounds = array<i64: 8, 16>}, {pipeline_mode = #tpu.pipeline_mode<synchronous>, transform_indices = @transform_9, window_bounds = array<i64: 1, 16>}, {pipeline_mode = #tpu.pipeline_mode<synchronous>, transform_indices = @transform_10, window_bounds = array<i64: 2, 16>}]} {
    %c0_i32 = arith.constant 0 : i32
    %0 = arith.cmpi eq, %arg0, %c0_i32 : i32
    %c0_i32_0 = arith.constant 0 : i32
    %1 = arith.cmpi eq, %arg1, %c0_i32_0 : i32
    %2 = arith.andi %0, %1 : i1
    %c1_i32 = arith.constant 1 : i32
    %3 = arith.cmpi eq, %arg0, %c1_i32 : i32
    %c0_i32_1 = arith.constant 0 : i32
    %4 = arith.cmpi eq, %arg1, %c0_i32_1 : i32
    %5 = arith.andi %3, %4 : i1
    %6 = arith.extui %2 : i1 to i32
    %c0_i32_2 = arith.constant 0 : i32
    %7 = arith.cmpi ne, %6, %c0_i32_2 : i32
    scf.if %7 {
      %cst_56 = arith.constant 0.000000e+00 : f32
      %136 = vector.broadcast %cst_56 : f32 to vector<2x16xf32>
      %c0_57 = arith.constant 0 : index
      %c0_58 = arith.constant 0 : index
      %137 = vector.load %arg12[%c0_57, %c0_58] : memref<2x16xf32, #tpu.memory_space<vmem>>, vector<2x16xf32>
      tpu.vector_store %arg12[%c0_57, %c0_58], %136 {strides = array<i32>} : memref<2x16xf32, #tpu.memory_space<vmem>>, vector<2x16xf32>,
    } else {
    }
    %c0 = arith.constant 0 : index
    %c0_3 = arith.constant 0 : index
    %c0_4 = arith.constant 0 : index
    %8 = vector.load %arg2[%c0, %c0_3, %c0_4] : memref<1x16x4xf32, #tpu.memory_space<vmem>>, vector<1x16x4xf32>
    %9 = vector.shape_cast %8 : vector<1x16x4xf32> to vector<16x4xf32>
    %c0_5 = arith.constant 0 : index
    %c0_6 = arith.constant 0 : index
    %c0_7 = arith.constant 0 : index
    %10 = vector.load %arg3[%c0_5, %c0_6, %c0_7] : memref<1x16x4xf32, #tpu.memory_space<vmem>>, vector<1x16x4xf32>
    %11 = vector.shape_cast %10 : vector<1x16x4xf32> to vector<16x4xf32>
    %c0_8 = arith.constant 0 : index
    %c0_9 = arith.constant 0 : index
    %c0_10 = arith.constant 0 : index
    %12 = vector.load %arg4[%c0_8, %c0_9, %c0_10] : memref<1x16x4xi32, #tpu.memory_space<vmem>>, vector<1x16x4xi32>
    %13 = vector.shape_cast %12 : vector<1x16x4xi32> to vector<16x4xi32>
    %c0_11 = arith.constant 0 : index
    %c0_12 = arith.constant 0 : index
    %14 = vector.load %arg5[%c0_11, %c0_12] : memref<4x8xf32, #tpu.memory_space<vmem>>, vector<4x8xf32>
    %c0_13 = arith.constant 0 : index
    %c0_14 = arith.constant 0 : index
    %15 = vector.load %arg6[%c0_13, %c0_14] : memref<4x8xf32, #tpu.memory_space<vmem>>, vector<4x8xf32>
    %c0_15 = arith.constant 0 : index
    %c0_16 = arith.constant 0 : index
    %16 = vector.load %arg7[%c0_15, %c0_16] : memref<1x8xf32, #tpu.memory_space<vmem>>, vector<1x8xf32>
    %c0_17 = arith.constant 0 : index
    %c0_18 = arith.constant 0 : index
    %17 = vector.load %arg8[%c0_17, %c0_18] : memref<1x8xf32, #tpu.memory_space<vmem>>, vector<1x8xf32>
    %c0_19 = arith.constant 0 : index
    %c0_20 = arith.constant 0 : index
    %18 = vector.load %arg9[%c0_19, %c0_20] : memref<1x8xf32, #tpu.memory_space<vmem>>, vector<1x8xf32>
    %c0_21 = arith.constant 0 : index
    %c0_22 = arith.constant 0 : index
    %19 = vector.load %arg10[%c0_21, %c0_22] : memref<8x16xf32, #tpu.memory_space<vmem>>, vector<8x16xf32>
    %c0_23 = arith.constant 0 : index
    %c0_24 = arith.constant 0 : index
    %20 = vector.load %arg11[%c0_23, %c0_24] : memref<1x16xf32, #tpu.memory_space<vmem>>, vector<1x16xf32>
    %cst = arith.constant dense<0.000000e+00> : vector<16x8xf32>
    %21 = tpu.matmul %9, %14, %cst {dimension_numbers = #tpu.dot_dimension_numbers<[1], [0], [0], [1], [0, 0, 1, 1], [], []>} : vector<16x4xf32>, vector<4x8xf32>, vector<16x8xf32> -> vector<16x8xf32>
    %22 = vector.broadcast %16 : vector<1x8xf32> to vector<16x8xf32>
    %23 = arith.addf %21, %22 : vector<16x8xf32>
    %cst_25 = arith.constant 0.000000e+00 : f32
    %24 = vector.broadcast %cst_25 : f32 to vector<1x16xf32>
    %cst_26 = arith.constant 0.000000e+00 : f32
    %25 = vector.broadcast %cst_26 : f32 to vector<1x16xf32>
    %26 = vector.extract_strided_slice %13 {offsets = [0, 0], sizes = [16, 1], strides = [1, 1]} : vector<16x4xi32> to vector<16x1xi32>
    %27 = tpu.iota {dimensions = array<i32: 1>} : vector<1x16xi32>
    %28 = vector.broadcast %26 : vector<16x1xi32> to vector<16x16xi32>
    %29 = vector.broadcast %27 : vector<1x16xi32> to vector<16x16xi32>
    %30 = arith.cmpi eq, %28, %29 : vector<16x16xi32>
    %31 = arith.extui %30 : vector<16x16xi1> to vector<16x16xi32>
    %32 = arith.sitofp %31 : vector<16x16xi32> to vector<16x16xf32>
    %cst_27 = arith.constant dense<0.000000e+00> : vector<16x4xf32>
    %33 = tpu.matmul %32, %11, %cst_27 {dimension_numbers = #tpu.dot_dimension_numbers<[1], [0], [0], [1], [0, 0, 1, 1], [], []>} : vector<16x16xf32>, vector<16x4xf32>, vector<16x4xf32> -> vector<16x4xf32>
    %cst_28 = arith.constant dense<0.000000e+00> : vector<16x8xf32>
    %34 = tpu.matmul %33, %15, %cst_28 {dimension_numbers = #tpu.dot_dimension_numbers<[1], [0], [0], [1], [0, 0, 1, 1], [], []>} : vector<16x4xf32>, vector<4x8xf32>, vector<16x8xf32> -> vector<16x8xf32>
    %35 = arith.addf %23, %34 : vector<16x8xf32>
    %36 = vector.broadcast %17 : vector<1x8xf32> to vector<16x8xf32>
    %37 = arith.mulf %35, %36 : vector<16x8xf32>
    %38 = vector.broadcast %18 : vector<1x8xf32> to vector<16x8xf32>
    %39 = arith.addf %37, %38 : vector<16x8xf32>
    %cst_29 = arith.constant 0.000000e+00 : f32
    %40 = vector.broadcast %cst_29 : f32 to vector<16x8xf32>
    %41 = arith.maximumf %39, %40 : vector<16x8xf32>
    %cst_30 = arith.constant dense<0.000000e+00> : vector<16x16xf32>
    %42 = tpu.matmul %41, %19, %cst_30 {dimension_numbers = #tpu.dot_dimension_numbers<[1], [0], [0], [1], [0, 0, 1, 1], [], []>} : vector<16x8xf32>, vector<8x16xf32>, vector<16x16xf32> -> vector<16x16xf32>
    %43 = vector.broadcast %20 : vector<1x16xf32> to vector<16x16xf32>
    %44 = arith.addf %42, %43 : vector<16x16xf32>
    %cst_31 = arith.constant dense<0.000000e+00> : vector<16xf32>
    %45 = vector.multi_reduction <add>, %44, %cst_31 [0] : vector<16x16xf32> to vector<16xf32>
    %46 = vector.shape_cast %45 : vector<16xf32> to vector<1x16xf32>
    %47 = arith.addf %24, %46 : vector<1x16xf32>
    %48 = arith.mulf %44, %44 : vector<16x16xf32>
    %cst_32 = arith.constant dense<0.000000e+00> : vector<16xf32>
    %49 = vector.multi_reduction <add>, %48, %cst_32 [0] : vector<16x16xf32> to vector<16xf32>
    %50 = vector.shape_cast %49 : vector<16xf32> to vector<1x16xf32>
    %51 = arith.addf %25, %50 : vector<1x16xf32>
    %52 = vector.extract_strided_slice %13 {offsets = [0, 1], sizes = [16, 1], strides = [1, 1]} : vector<16x4xi32> to vector<16x1xi32>
    %53 = tpu.iota {dimensions = array<i32: 1>} : vector<1x16xi32>
    %54 = vector.broadcast %52 : vector<16x1xi32> to vector<16x16xi32>
    %55 = vector.broadcast %53 : vector<1x16xi32> to vector<16x16xi32>
    %56 = arith.cmpi eq, %54, %55 : vector<16x16xi32>
    %57 = arith.extui %56 : vector<16x16xi1> to vector<16x16xi32>
    %58 = arith.sitofp %57 : vector<16x16xi32> to vector<16x16xf32>
    %cst_33 = arith.constant dense<0.000000e+00> : vector<16x4xf32>
    %59 = tpu.matmul %58, %11, %cst_33 {dimension_numbers = #tpu.dot_dimension_numbers<[1], [0], [0], [1], [0, 0, 1, 1], [], []>} : vector<16x16xf32>, vector<16x4xf32>, vector<16x4xf32> -> vector<16x4xf32>
    %cst_34 = arith.constant dense<0.000000e+00> : vector<16x8xf32>
    %60 = tpu.matmul %59, %15, %cst_34 {dimension_numbers = #tpu.dot_dimension_numbers<[1], [0], [0], [1], [0, 0, 1, 1], [], []>} : vector<16x4xf32>, vector<4x8xf32>, vector<16x8xf32> -> vector<16x8xf32>
    %61 = arith.addf %23, %60 : vector<16x8xf32>
    %62 = vector.broadcast %17 : vector<1x8xf32> to vector<16x8xf32>
    %63 = arith.mulf %61, %62 : vector<16x8xf32>
    %64 = vector.broadcast %18 : vector<1x8xf32> to vector<16x8xf32>
    %65 = arith.addf %63, %64 : vector<16x8xf32>
    %cst_35 = arith.constant 0.000000e+00 : f32
    %66 = vector.broadcast %cst_35 : f32 to vector<16x8xf32>
    %67 = arith.maximumf %65, %66 : vector<16x8xf32>
    %cst_36 = arith.constant dense<0.000000e+00> : vector<16x16xf32>
    %68 = tpu.matmul %67, %19, %cst_36 {dimension_numbers = #tpu.dot_dimension_numbers<[1], [0], [0], [1], [0, 0, 1, 1], [], []>} : vector<16x8xf32>, vector<8x16xf32>, vector<16x16xf32> -> vector<16x16xf32>
    %69 = vector.broadcast %20 : vector<1x16xf32> to vector<16x16xf32>
    %70 = arith.addf %68, %69 : vector<16x16xf32>
    %cst_37 = arith.constant dense<0.000000e+00> : vector<16xf32>
    %71 = vector.multi_reduction <add>, %70, %cst_37 [0] : vector<16x16xf32> to vector<16xf32>
    %72 = vector.shape_cast %71 : vector<16xf32> to vector<1x16xf32>
    %73 = arith.addf %47, %72 : vector<1x16xf32>
    %74 = arith.mulf %70, %70 : vector<16x16xf32>
    %cst_38 = arith.constant dense<0.000000e+00> : vector<16xf32>
    %75 = vector.multi_reduction <add>, %74, %cst_38 [0] : vector<16x16xf32> to vector<16xf32>
    %76 = vector.shape_cast %75 : vector<16xf32> to vector<1x16xf32>
    %77 = arith.addf %51, %76 : vector<1x16xf32>
    %78 = vector.extract_strided_slice %13 {offsets = [0, 2], sizes = [16, 1], strides = [1, 1]} : vector<16x4xi32> to vector<16x1xi32>
    %79 = tpu.iota {dimensions = array<i32: 1>} : vector<1x16xi32>
    %80 = vector.broadcast %78 : vector<16x1xi32> to vector<16x16xi32>
    %81 = vector.broadcast %79 : vector<1x16xi32> to vector<16x16xi32>
    %82 = arith.cmpi eq, %80, %81 : vector<16x16xi32>
    %83 = arith.extui %82 : vector<16x16xi1> to vector<16x16xi32>
    %84 = arith.sitofp %83 : vector<16x16xi32> to vector<16x16xf32>
    %cst_39 = arith.constant dense<0.000000e+00> : vector<16x4xf32>
    %85 = tpu.matmul %84, %11, %cst_39 {dimension_numbers = #tpu.dot_dimension_numbers<[1], [0], [0], [1], [0, 0, 1, 1], [], []>} : vector<16x16xf32>, vector<16x4xf32>, vector<16x4xf32> -> vector<16x4xf32>
    %cst_40 = arith.constant dense<0.000000e+00> : vector<16x8xf32>
    %86 = tpu.matmul %85, %15, %cst_40 {dimension_numbers = #tpu.dot_dimension_numbers<[1], [0], [0], [1], [0, 0, 1, 1], [], []>} : vector<16x4xf32>, vector<4x8xf32>, vector<16x8xf32> -> vector<16x8xf32>
    %87 = arith.addf %23, %86 : vector<16x8xf32>
    %88 = vector.broadcast %17 : vector<1x8xf32> to vector<16x8xf32>
    %89 = arith.mulf %87, %88 : vector<16x8xf32>
    %90 = vector.broadcast %18 : vector<1x8xf32> to vector<16x8xf32>
    %91 = arith.addf %89, %90 : vector<16x8xf32>
    %cst_41 = arith.constant 0.000000e+00 : f32
    %92 = vector.broadcast %cst_41 : f32 to vector<16x8xf32>
    %93 = arith.maximumf %91, %92 : vector<16x8xf32>
    %cst_42 = arith.constant dense<0.000000e+00> : vector<16x16xf32>
    %94 = tpu.matmul %93, %19, %cst_42 {dimension_numbers = #tpu.dot_dimension_numbers<[1], [0], [0], [1], [0, 0, 1, 1], [], []>} : vector<16x8xf32>, vector<8x16xf32>, vector<16x16xf32> -> vector<16x16xf32>
    %95 = vector.broadcast %20 : vector<1x16xf32> to vector<16x16xf32>
    %96 = arith.addf %94, %95 : vector<16x16xf32>
    %cst_43 = arith.constant dense<0.000000e+00> : vector<16xf32>
    %97 = vector.multi_reduction <add>, %96, %cst_43 [0] : vector<16x16xf32> to vector<16xf32>
    %98 = vector.shape_cast %97 : vector<16xf32> to vector<1x16xf32>
    %99 = arith.addf %73, %98 : vector<1x16xf32>
    %100 = arith.mulf %96, %96 : vector<16x16xf32>
    %cst_44 = arith.constant dense<0.000000e+00> : vector<16xf32>
    %101 = vector.multi_reduction <add>, %100, %cst_44 [0] : vector<16x16xf32> to vector<16xf32>
    %102 = vector.shape_cast %101 : vector<16xf32> to vector<1x16xf32>
    %103 = arith.addf %77, %102 : vector<1x16xf32>
    %104 = vector.extract_strided_slice %13 {offsets = [0, 3], sizes = [16, 1], strides = [1, 1]} : vector<16x4xi32> to vector<16x1xi32>
    %105 = tpu.iota {dimensions = array<i32: 1>} : vector<1x16xi32>
    %106 = vector.broadcast %104 : vector<16x1xi32> to vector<16x16xi32>
    %107 = vector.broadcast %105 : vector<1x16xi32> to vector<16x16xi32>
    %108 = arith.cmpi eq, %106, %107 : vector<16x16xi32>
    %109 = arith.extui %108 : vector<16x16xi1> to vector<16x16xi32>
    %110 = arith.sitofp %109 : vector<16x16xi32> to vector<16x16xf32>
    %cst_45 = arith.constant dense<0.000000e+00> : vector<16x4xf32>
    %111 = tpu.matmul %110, %11, %cst_45 {dimension_numbers = #tpu.dot_dimension_numbers<[1], [0], [0], [1], [0, 0, 1, 1], [], []>} : vector<16x16xf32>, vector<16x4xf32>, vector<16x4xf32> -> vector<16x4xf32>
    %cst_46 = arith.constant dense<0.000000e+00> : vector<16x8xf32>
    %112 = tpu.matmul %111, %15, %cst_46 {dimension_numbers = #tpu.dot_dimension_numbers<[1], [0], [0], [1], [0, 0, 1, 1], [], []>} : vector<16x4xf32>, vector<4x8xf32>, vector<16x8xf32> -> vector<16x8xf32>
    %113 = arith.addf %23, %112 : vector<16x8xf32>
    %114 = vector.broadcast %17 : vector<1x8xf32> to vector<16x8xf32>
    %115 = arith.mulf %113, %114 : vector<16x8xf32>
    %116 = vector.broadcast %18 : vector<1x8xf32> to vector<16x8xf32>
    %117 = arith.addf %115, %116 : vector<16x8xf32>
    %cst_47 = arith.constant 0.000000e+00 : f32
    %118 = vector.broadcast %cst_47 : f32 to vector<16x8xf32>
    %119 = arith.maximumf %117, %118 : vector<16x8xf32>
    %cst_48 = arith.constant dense<0.000000e+00> : vector<16x16xf32>
    %120 = tpu.matmul %119, %19, %cst_48 {dimension_numbers = #tpu.dot_dimension_numbers<[1], [0], [0], [1], [0, 0, 1, 1], [], []>} : vector<16x8xf32>, vector<8x16xf32>, vector<16x16xf32> -> vector<16x16xf32>
    %121 = vector.broadcast %20 : vector<1x16xf32> to vector<16x16xf32>
    %122 = arith.addf %120, %121 : vector<16x16xf32>
    %cst_49 = arith.constant dense<0.000000e+00> : vector<16xf32>
    %123 = vector.multi_reduction <add>, %122, %cst_49 [0] : vector<16x16xf32> to vector<16xf32>
    %124 = vector.shape_cast %123 : vector<16xf32> to vector<1x16xf32>
    %125 = arith.addf %99, %124 : vector<1x16xf32>
    %126 = arith.mulf %122, %122 : vector<16x16xf32>
    %cst_50 = arith.constant dense<0.000000e+00> : vector<16xf32>
    %127 = vector.multi_reduction <add>, %126, %cst_50 [0] : vector<16x16xf32> to vector<16xf32>
    %128 = vector.shape_cast %127 : vector<16xf32> to vector<1x16xf32>
    %129 = arith.addf %103, %128 : vector<1x16xf32>
    %c0_51 = arith.constant 0 : index
    %c0_52 = arith.constant 0 : index
    %130 = vector.load %arg12[%c0_51, %c0_52] : memref<2x16xf32, #tpu.memory_space<vmem>>, vector<2x16xf32>
    %131 = tpu.concatenate %125, %129 in 0 : vector<1x16xf32>, vector<1x16xf32> -> vector<2x16xf32>
    %132 = arith.addf %130, %131 : vector<2x16xf32>
    %c0_53 = arith.constant 0 : index
    %c0_54 = arith.constant 0 : index
    %133 = vector.load %arg12[%c0_53, %c0_54] : memref<2x16xf32, #tpu.memory_space<vmem>>, vector<2x16xf32>
    tpu.vector_store %arg12[%c0_53, %c0_54], %132 {strides = array<i32>} : memref<2x16xf32, #tpu.memory_space<vmem>>, vector<2x16xf32>,
    %134 = arith.extui %5 : i1 to i32
    %c0_i32_55 = arith.constant 0 : i32
    %135 = arith.cmpi ne, %134, %c0_i32_55 : i32
    scf.if %135 {
      %c0_56 = arith.constant 0 : index
      %c0_57 = arith.constant 0 : index
      %136 = vector.load %arg12[%c0_56, %c0_57] : memref<2x16xf32, #tpu.memory_space<vmem>>, vector<2x16xf32>
      %137 = vector.extract_strided_slice %136 {offsets = [0, 0], sizes = [1, 16], strides = [1, 1]} : vector<2x16xf32> to vector<1x16xf32>
      %cst_58 = arith.constant 7.812500e-03 : f32
      %138 = vector.broadcast %cst_58 : f32 to vector<1x16xf32>
      %139 = arith.mulf %137, %138 : vector<1x16xf32>
      %140 = vector.extract_strided_slice %136 {offsets = [1, 0], sizes = [1, 16], strides = [1, 1]} : vector<2x16xf32> to vector<1x16xf32>
      %cst_59 = arith.constant 7.812500e-03 : f32
      %141 = vector.broadcast %cst_59 : f32 to vector<1x16xf32>
      %142 = arith.mulf %140, %141 : vector<1x16xf32>
      %143 = arith.mulf %139, %139 : vector<1x16xf32>
      %144 = arith.subf %142, %143 : vector<1x16xf32>
      %cst_60 = arith.constant 0.000000e+00 : f32
      %145 = vector.broadcast %cst_60 : f32 to vector<1x16xf32>
      %146 = arith.maximumf %144, %145 : vector<1x16xf32>
      %147 = tpu.concatenate %139, %146 in 0 : vector<1x16xf32>, vector<1x16xf32> -> vector<2x16xf32>
      %c0_61 = arith.constant 0 : index
      %c0_62 = arith.constant 0 : index
      %148 = vector.load %arg12[%c0_61, %c0_62] : memref<2x16xf32, #tpu.memory_space<vmem>>, vector<2x16xf32>
      tpu.vector_store %arg12[%c0_61, %c0_62], %147 {strides = array<i32>} : memref<2x16xf32, #tpu.memory_space<vmem>>, vector<2x16xf32>,
    } else {
    }
    return
  }
  func.func @transform_0(%arg0: i32, %arg1: i32) -> (i32, i32, i32) {
    %c0_i32 = arith.constant 0 : i32
    %c0_i32_0 = arith.constant 0 : i32
    return %arg0, %arg1, %c0_i32 : i32, i32, i32
  }
  func.func @transform_1(%arg0: i32, %arg1: i32) -> (i32, i32, i32) {
    %c0_i32 = arith.constant 0 : i32
    %c0_i32_0 = arith.constant 0 : i32
    %c0_i32_1 = arith.constant 0 : i32
    return %arg0, %c0_i32, %c0_i32_0 : i32, i32, i32
  }
  func.func @transform_2(%arg0: i32, %arg1: i32) -> (i32, i32, i32) {
    %c0_i32 = arith.constant 0 : i32
    %c0_i32_0 = arith.constant 0 : i32
    return %arg0, %arg1, %c0_i32 : i32, i32, i32
  }
  func.func @transform_3(%arg0: i32, %arg1: i32) -> (i32, i32) {
    %c0_i32 = arith.constant 0 : i32
    %c0_i32_0 = arith.constant 0 : i32
    %c0_i32_1 = arith.constant 0 : i32
    return %c0_i32, %c0_i32_0 : i32, i32
  }
  func.func @transform_4(%arg0: i32, %arg1: i32) -> (i32, i32) {
    %c0_i32 = arith.constant 0 : i32
    %c0_i32_0 = arith.constant 0 : i32
    %c0_i32_1 = arith.constant 0 : i32
    return %c0_i32, %c0_i32_0 : i32, i32
  }
  func.func @transform_5(%arg0: i32, %arg1: i32) -> (i32, i32) {
    %c0_i32 = arith.constant 0 : i32
    %c0_i32_0 = arith.constant 0 : i32
    %c0_i32_1 = arith.constant 0 : i32
    return %c0_i32, %c0_i32_0 : i32, i32
  }
  func.func @transform_6(%arg0: i32, %arg1: i32) -> (i32, i32) {
    %c0_i32 = arith.constant 0 : i32
    %c0_i32_0 = arith.constant 0 : i32
    %c0_i32_1 = arith.constant 0 : i32
    return %c0_i32, %c0_i32_0 : i32, i32
  }
  func.func @transform_7(%arg0: i32, %arg1: i32) -> (i32, i32) {
    %c0_i32 = arith.constant 0 : i32
    %c0_i32_0 = arith.constant 0 : i32
    %c0_i32_1 = arith.constant 0 : i32
    return %c0_i32, %c0_i32_0 : i32, i32
  }
  func.func @transform_8(%arg0: i32, %arg1: i32) -> (i32, i32) {
    %c0_i32 = arith.constant 0 : i32
    %c0_i32_0 = arith.constant 0 : i32
    %c0_i32_1 = arith.constant 0 : i32
    return %c0_i32, %c0_i32_0 : i32, i32
  }
  func.func @transform_9(%arg0: i32, %arg1: i32) -> (i32, i32) {
    %c0_i32 = arith.constant 0 : i32
    %c0_i32_0 = arith.constant 0 : i32
    %c0_i32_1 = arith.constant 0 : i32
    return %c0_i32, %c0_i32_0 : i32, i32
  }
  func.func @transform_10(%arg0: i32, %arg1: i32) -> (i32, i32) {
    %c0_i32 = arith.constant 0 : i32
    %c0_i32_0 = arith.constant 0 : i32
    %c0_i32_1 = arith.constant 0 : i32
    return %c0_i32, %c0_i32_0 : i32, i32
  }
}

module attributes {stable_mosaic.version = 11 : i64} {
  func.func @_edge_final_kernel(%arg0: i32, %arg1: i32, %arg2: memref<1x16x4xf32, #tpu.memory_space<vmem>>, %arg3: memref<1x16x4xf32, #tpu.memory_space<vmem>>, %arg4: memref<1x16x4xi32, #tpu.memory_space<vmem>>, %arg5: memref<4x8xf32, #tpu.memory_space<vmem>>, %arg6: memref<4x8xf32, #tpu.memory_space<vmem>>, %arg7: memref<1x8xf32, #tpu.memory_space<vmem>>, %arg8: memref<1x8xf32, #tpu.memory_space<vmem>>, %arg9: memref<1x8xf32, #tpu.memory_space<vmem>>, %arg10: memref<8x16xf32, #tpu.memory_space<vmem>>, %arg11: memref<1x16xf32, #tpu.memory_space<vmem>>, %arg12: memref<1x16xf32, #tpu.memory_space<vmem>>, %arg13: memref<1x16xf32, #tpu.memory_space<vmem>>, %arg14: memref<1x16x16xf32, #tpu.memory_space<vmem>>) attributes {dimension_semantics = [#tpu.dimension_semantics<parallel>, #tpu.dimension_semantics<parallel>], iteration_bounds = array<i64: 2, 1>, scalar_prefetch = 0 : i64, scratch_operands = 0 : i64, tpu.core_type = #tpu.core_type<tc>, window_params = [{transform_indices = @transform_0, window_bounds = array<i64: 1, 16, 4>}, {transform_indices = @transform_1, window_bounds = array<i64: 1, 16, 4>}, {transform_indices = @transform_2, window_bounds = array<i64: 1, 16, 4>}, {pipeline_mode = #tpu.pipeline_mode<synchronous>, transform_indices = @transform_3, window_bounds = array<i64: 4, 8>}, {pipeline_mode = #tpu.pipeline_mode<synchronous>, transform_indices = @transform_4, window_bounds = array<i64: 4, 8>}, {pipeline_mode = #tpu.pipeline_mode<synchronous>, transform_indices = @transform_5, window_bounds = array<i64: 1, 8>}, {pipeline_mode = #tpu.pipeline_mode<synchronous>, transform_indices = @transform_6, window_bounds = array<i64: 1, 8>}, {pipeline_mode = #tpu.pipeline_mode<synchronous>, transform_indices = @transform_7, window_bounds = array<i64: 1, 8>}, {pipeline_mode = #tpu.pipeline_mode<synchronous>, transform_indices = @transform_8, window_bounds = array<i64: 8, 16>}, {pipeline_mode = #tpu.pipeline_mode<synchronous>, transform_indices = @transform_9, window_bounds = array<i64: 1, 16>}, {pipeline_mode = #tpu.pipeline_mode<synchronous>, transform_indices = @transform_10, window_bounds = array<i64: 1, 16>}, {pipeline_mode = #tpu.pipeline_mode<synchronous>, transform_indices = @transform_11, window_bounds = array<i64: 1, 16>}, {transform_indices = @transform_12, window_bounds = array<i64: 1, 16, 16>}]} {
    %c0 = arith.constant 0 : index
    %c0_0 = arith.constant 0 : index
    %c0_1 = arith.constant 0 : index
    %0 = vector.load %arg2[%c0, %c0_0, %c0_1] : memref<1x16x4xf32, #tpu.memory_space<vmem>>, vector<1x16x4xf32>
    %1 = vector.shape_cast %0 : vector<1x16x4xf32> to vector<16x4xf32>
    %c0_2 = arith.constant 0 : index
    %c0_3 = arith.constant 0 : index
    %c0_4 = arith.constant 0 : index
    %2 = vector.load %arg3[%c0_2, %c0_3, %c0_4] : memref<1x16x4xf32, #tpu.memory_space<vmem>>, vector<1x16x4xf32>
    %3 = vector.shape_cast %2 : vector<1x16x4xf32> to vector<16x4xf32>
    %c0_5 = arith.constant 0 : index
    %c0_6 = arith.constant 0 : index
    %c0_7 = arith.constant 0 : index
    %4 = vector.load %arg4[%c0_5, %c0_6, %c0_7] : memref<1x16x4xi32, #tpu.memory_space<vmem>>, vector<1x16x4xi32>
    %5 = vector.shape_cast %4 : vector<1x16x4xi32> to vector<16x4xi32>
    %c0_8 = arith.constant 0 : index
    %c0_9 = arith.constant 0 : index
    %6 = vector.load %arg5[%c0_8, %c0_9] : memref<4x8xf32, #tpu.memory_space<vmem>>, vector<4x8xf32>
    %c0_10 = arith.constant 0 : index
    %c0_11 = arith.constant 0 : index
    %7 = vector.load %arg6[%c0_10, %c0_11] : memref<4x8xf32, #tpu.memory_space<vmem>>, vector<4x8xf32>
    %c0_12 = arith.constant 0 : index
    %c0_13 = arith.constant 0 : index
    %8 = vector.load %arg7[%c0_12, %c0_13] : memref<1x8xf32, #tpu.memory_space<vmem>>, vector<1x8xf32>
    %c0_14 = arith.constant 0 : index
    %c0_15 = arith.constant 0 : index
    %9 = vector.load %arg8[%c0_14, %c0_15] : memref<1x8xf32, #tpu.memory_space<vmem>>, vector<1x8xf32>
    %c0_16 = arith.constant 0 : index
    %c0_17 = arith.constant 0 : index
    %10 = vector.load %arg9[%c0_16, %c0_17] : memref<1x8xf32, #tpu.memory_space<vmem>>, vector<1x8xf32>
    %c0_18 = arith.constant 0 : index
    %c0_19 = arith.constant 0 : index
    %11 = vector.load %arg10[%c0_18, %c0_19] : memref<8x16xf32, #tpu.memory_space<vmem>>, vector<8x16xf32>
    %c0_20 = arith.constant 0 : index
    %c0_21 = arith.constant 0 : index
    %12 = vector.load %arg11[%c0_20, %c0_21] : memref<1x16xf32, #tpu.memory_space<vmem>>, vector<1x16xf32>
    %c0_22 = arith.constant 0 : index
    %c0_23 = arith.constant 0 : index
    %13 = vector.load %arg12[%c0_22, %c0_23] : memref<1x16xf32, #tpu.memory_space<vmem>>, vector<1x16xf32>
    %c0_24 = arith.constant 0 : index
    %c0_25 = arith.constant 0 : index
    %14 = vector.load %arg13[%c0_24, %c0_25] : memref<1x16xf32, #tpu.memory_space<vmem>>, vector<1x16xf32>
    %cst = arith.constant dense<0.000000e+00> : vector<16x8xf32>
    %15 = tpu.matmul %1, %6, %cst {dimension_numbers = #tpu.dot_dimension_numbers<[1], [0], [0], [1], [0, 0, 1, 1], [], []>} : vector<16x4xf32>, vector<4x8xf32>, vector<16x8xf32> -> vector<16x8xf32>
    %16 = vector.broadcast %8 : vector<1x8xf32> to vector<16x8xf32>
    %17 = arith.addf %15, %16 : vector<16x8xf32>
    %18 = vector.extract_strided_slice %5 {offsets = [0, 0], sizes = [16, 1], strides = [1, 1]} : vector<16x4xi32> to vector<16x1xi32>
    %19 = tpu.iota {dimensions = array<i32: 1>} : vector<1x16xi32>
    %20 = vector.broadcast %18 : vector<16x1xi32> to vector<16x16xi32>
    %21 = vector.broadcast %19 : vector<1x16xi32> to vector<16x16xi32>
    %22 = arith.cmpi eq, %20, %21 : vector<16x16xi32>
    %23 = arith.extui %22 : vector<16x16xi1> to vector<16x16xi32>
    %24 = arith.sitofp %23 : vector<16x16xi32> to vector<16x16xf32>
    %cst_26 = arith.constant dense<0.000000e+00> : vector<16x4xf32>
    %25 = tpu.matmul %24, %3, %cst_26 {dimension_numbers = #tpu.dot_dimension_numbers<[1], [0], [0], [1], [0, 0, 1, 1], [], []>} : vector<16x16xf32>, vector<16x4xf32>, vector<16x4xf32> -> vector<16x4xf32>
    %cst_27 = arith.constant dense<0.000000e+00> : vector<16x8xf32>
    %26 = tpu.matmul %25, %7, %cst_27 {dimension_numbers = #tpu.dot_dimension_numbers<[1], [0], [0], [1], [0, 0, 1, 1], [], []>} : vector<16x4xf32>, vector<4x8xf32>, vector<16x8xf32> -> vector<16x8xf32>
    %27 = arith.addf %17, %26 : vector<16x8xf32>
    %28 = vector.broadcast %9 : vector<1x8xf32> to vector<16x8xf32>
    %29 = arith.mulf %27, %28 : vector<16x8xf32>
    %30 = vector.broadcast %10 : vector<1x8xf32> to vector<16x8xf32>
    %31 = arith.addf %29, %30 : vector<16x8xf32>
    %cst_28 = arith.constant 0.000000e+00 : f32
    %32 = vector.broadcast %cst_28 : f32 to vector<16x8xf32>
    %33 = arith.maximumf %31, %32 : vector<16x8xf32>
    %cst_29 = arith.constant dense<0.000000e+00> : vector<16x16xf32>
    %34 = tpu.matmul %33, %11, %cst_29 {dimension_numbers = #tpu.dot_dimension_numbers<[1], [0], [0], [1], [0, 0, 1, 1], [], []>} : vector<16x8xf32>, vector<8x16xf32>, vector<16x16xf32> -> vector<16x16xf32>
    %35 = vector.broadcast %12 : vector<1x16xf32> to vector<16x16xf32>
    %36 = arith.addf %34, %35 : vector<16x16xf32>
    %37 = vector.broadcast %13 : vector<1x16xf32> to vector<16x16xf32>
    %38 = arith.mulf %36, %37 : vector<16x16xf32>
    %39 = vector.broadcast %14 : vector<1x16xf32> to vector<16x16xf32>
    %40 = arith.addf %38, %39 : vector<16x16xf32>
    %cst_30 = arith.constant 0.000000e+00 : f32
    %41 = vector.broadcast %cst_30 : f32 to vector<16x16xf32>
    %42 = arith.maximumf %40, %41 : vector<16x16xf32>
    %43 = vector.extract_strided_slice %5 {offsets = [0, 1], sizes = [16, 1], strides = [1, 1]} : vector<16x4xi32> to vector<16x1xi32>
    %44 = tpu.iota {dimensions = array<i32: 1>} : vector<1x16xi32>
    %45 = vector.broadcast %43 : vector<16x1xi32> to vector<16x16xi32>
    %46 = vector.broadcast %44 : vector<1x16xi32> to vector<16x16xi32>
    %47 = arith.cmpi eq, %45, %46 : vector<16x16xi32>
    %48 = arith.extui %47 : vector<16x16xi1> to vector<16x16xi32>
    %49 = arith.sitofp %48 : vector<16x16xi32> to vector<16x16xf32>
    %cst_31 = arith.constant dense<0.000000e+00> : vector<16x4xf32>
    %50 = tpu.matmul %49, %3, %cst_31 {dimension_numbers = #tpu.dot_dimension_numbers<[1], [0], [0], [1], [0, 0, 1, 1], [], []>} : vector<16x16xf32>, vector<16x4xf32>, vector<16x4xf32> -> vector<16x4xf32>
    %cst_32 = arith.constant dense<0.000000e+00> : vector<16x8xf32>
    %51 = tpu.matmul %50, %7, %cst_32 {dimension_numbers = #tpu.dot_dimension_numbers<[1], [0], [0], [1], [0, 0, 1, 1], [], []>} : vector<16x4xf32>, vector<4x8xf32>, vector<16x8xf32> -> vector<16x8xf32>
    %52 = arith.addf %17, %51 : vector<16x8xf32>
    %53 = vector.broadcast %9 : vector<1x8xf32> to vector<16x8xf32>
    %54 = arith.mulf %52, %53 : vector<16x8xf32>
    %55 = vector.broadcast %10 : vector<1x8xf32> to vector<16x8xf32>
    %56 = arith.addf %54, %55 : vector<16x8xf32>
    %cst_33 = arith.constant 0.000000e+00 : f32
    %57 = vector.broadcast %cst_33 : f32 to vector<16x8xf32>
    %58 = arith.maximumf %56, %57 : vector<16x8xf32>
    %cst_34 = arith.constant dense<0.000000e+00> : vector<16x16xf32>
    %59 = tpu.matmul %58, %11, %cst_34 {dimension_numbers = #tpu.dot_dimension_numbers<[1], [0], [0], [1], [0, 0, 1, 1], [], []>} : vector<16x8xf32>, vector<8x16xf32>, vector<16x16xf32> -> vector<16x16xf32>
    %60 = vector.broadcast %12 : vector<1x16xf32> to vector<16x16xf32>
    %61 = arith.addf %59, %60 : vector<16x16xf32>
    %62 = vector.broadcast %13 : vector<1x16xf32> to vector<16x16xf32>
    %63 = arith.mulf %61, %62 : vector<16x16xf32>
    %64 = vector.broadcast %14 : vector<1x16xf32> to vector<16x16xf32>
    %65 = arith.addf %63, %64 : vector<16x16xf32>
    %cst_35 = arith.constant 0.000000e+00 : f32
    %66 = vector.broadcast %cst_35 : f32 to vector<16x16xf32>
    %67 = arith.maximumf %65, %66 : vector<16x16xf32>
    %68 = arith.maximumf %42, %67 : vector<16x16xf32>
    %69 = vector.extract_strided_slice %5 {offsets = [0, 2], sizes = [16, 1], strides = [1, 1]} : vector<16x4xi32> to vector<16x1xi32>
    %70 = tpu.iota {dimensions = array<i32: 1>} : vector<1x16xi32>
    %71 = vector.broadcast %69 : vector<16x1xi32> to vector<16x16xi32>
    %72 = vector.broadcast %70 : vector<1x16xi32> to vector<16x16xi32>
    %73 = arith.cmpi eq, %71, %72 : vector<16x16xi32>
    %74 = arith.extui %73 : vector<16x16xi1> to vector<16x16xi32>
    %75 = arith.sitofp %74 : vector<16x16xi32> to vector<16x16xf32>
    %cst_36 = arith.constant dense<0.000000e+00> : vector<16x4xf32>
    %76 = tpu.matmul %75, %3, %cst_36 {dimension_numbers = #tpu.dot_dimension_numbers<[1], [0], [0], [1], [0, 0, 1, 1], [], []>} : vector<16x16xf32>, vector<16x4xf32>, vector<16x4xf32> -> vector<16x4xf32>
    %cst_37 = arith.constant dense<0.000000e+00> : vector<16x8xf32>
    %77 = tpu.matmul %76, %7, %cst_37 {dimension_numbers = #tpu.dot_dimension_numbers<[1], [0], [0], [1], [0, 0, 1, 1], [], []>} : vector<16x4xf32>, vector<4x8xf32>, vector<16x8xf32> -> vector<16x8xf32>
    %78 = arith.addf %17, %77 : vector<16x8xf32>
    %79 = vector.broadcast %9 : vector<1x8xf32> to vector<16x8xf32>
    %80 = arith.mulf %78, %79 : vector<16x8xf32>
    %81 = vector.broadcast %10 : vector<1x8xf32> to vector<16x8xf32>
    %82 = arith.addf %80, %81 : vector<16x8xf32>
    %cst_38 = arith.constant 0.000000e+00 : f32
    %83 = vector.broadcast %cst_38 : f32 to vector<16x8xf32>
    %84 = arith.maximumf %82, %83 : vector<16x8xf32>
    %cst_39 = arith.constant dense<0.000000e+00> : vector<16x16xf32>
    %85 = tpu.matmul %84, %11, %cst_39 {dimension_numbers = #tpu.dot_dimension_numbers<[1], [0], [0], [1], [0, 0, 1, 1], [], []>} : vector<16x8xf32>, vector<8x16xf32>, vector<16x16xf32> -> vector<16x16xf32>
    %86 = vector.broadcast %12 : vector<1x16xf32> to vector<16x16xf32>
    %87 = arith.addf %85, %86 : vector<16x16xf32>
    %88 = vector.broadcast %13 : vector<1x16xf32> to vector<16x16xf32>
    %89 = arith.mulf %87, %88 : vector<16x16xf32>
    %90 = vector.broadcast %14 : vector<1x16xf32> to vector<16x16xf32>
    %91 = arith.addf %89, %90 : vector<16x16xf32>
    %cst_40 = arith.constant 0.000000e+00 : f32
    %92 = vector.broadcast %cst_40 : f32 to vector<16x16xf32>
    %93 = arith.maximumf %91, %92 : vector<16x16xf32>
    %94 = arith.maximumf %68, %93 : vector<16x16xf32>
    %95 = vector.extract_strided_slice %5 {offsets = [0, 3], sizes = [16, 1], strides = [1, 1]} : vector<16x4xi32> to vector<16x1xi32>
    %96 = tpu.iota {dimensions = array<i32: 1>} : vector<1x16xi32>
    %97 = vector.broadcast %95 : vector<16x1xi32> to vector<16x16xi32>
    %98 = vector.broadcast %96 : vector<1x16xi32> to vector<16x16xi32>
    %99 = arith.cmpi eq, %97, %98 : vector<16x16xi32>
    %100 = arith.extui %99 : vector<16x16xi1> to vector<16x16xi32>
    %101 = arith.sitofp %100 : vector<16x16xi32> to vector<16x16xf32>
    %cst_41 = arith.constant dense<0.000000e+00> : vector<16x4xf32>
    %102 = tpu.matmul %101, %3, %cst_41 {dimension_numbers = #tpu.dot_dimension_numbers<[1], [0], [0], [1], [0, 0, 1, 1], [], []>} : vector<16x16xf32>, vector<16x4xf32>, vector<16x4xf32> -> vector<16x4xf32>
    %cst_42 = arith.constant dense<0.000000e+00> : vector<16x8xf32>
    %103 = tpu.matmul %102, %7, %cst_42 {dimension_numbers = #tpu.dot_dimension_numbers<[1], [0], [0], [1], [0, 0, 1, 1], [], []>} : vector<16x4xf32>, vector<4x8xf32>, vector<16x8xf32> -> vector<16x8xf32>
    %104 = arith.addf %17, %103 : vector<16x8xf32>
    %105 = vector.broadcast %9 : vector<1x8xf32> to vector<16x8xf32>
    %106 = arith.mulf %104, %105 : vector<16x8xf32>
    %107 = vector.broadcast %10 : vector<1x8xf32> to vector<16x8xf32>
    %108 = arith.addf %106, %107 : vector<16x8xf32>
    %cst_43 = arith.constant 0.000000e+00 : f32
    %109 = vector.broadcast %cst_43 : f32 to vector<16x8xf32>
    %110 = arith.maximumf %108, %109 : vector<16x8xf32>
    %cst_44 = arith.constant dense<0.000000e+00> : vector<16x16xf32>
    %111 = tpu.matmul %110, %11, %cst_44 {dimension_numbers = #tpu.dot_dimension_numbers<[1], [0], [0], [1], [0, 0, 1, 1], [], []>} : vector<16x8xf32>, vector<8x16xf32>, vector<16x16xf32> -> vector<16x16xf32>
    %112 = vector.broadcast %12 : vector<1x16xf32> to vector<16x16xf32>
    %113 = arith.addf %111, %112 : vector<16x16xf32>
    %114 = vector.broadcast %13 : vector<1x16xf32> to vector<16x16xf32>
    %115 = arith.mulf %113, %114 : vector<16x16xf32>
    %116 = vector.broadcast %14 : vector<1x16xf32> to vector<16x16xf32>
    %117 = arith.addf %115, %116 : vector<16x16xf32>
    %cst_45 = arith.constant 0.000000e+00 : f32
    %118 = vector.broadcast %cst_45 : f32 to vector<16x16xf32>
    %119 = arith.maximumf %117, %118 : vector<16x16xf32>
    %120 = arith.maximumf %94, %119 : vector<16x16xf32>
    %121 = tpu.transpose %120, [1, 0] : vector<16x16xf32> -> vector<16x16xf32>
    %c0_46 = arith.constant 0 : index
    %c0_47 = arith.constant 0 : index
    %c0_48 = arith.constant 0 : index
    %122 = vector.load %arg14[%c0_46, %c0_47, %c0_48] : memref<1x16x16xf32, #tpu.memory_space<vmem>>, vector<1x16x16xf32>
    %123 = vector.shape_cast %122 : vector<1x16x16xf32> to vector<16x16xf32>
    %124 = vector.shape_cast %121 : vector<16x16xf32> to vector<1x16x16xf32>
    tpu.vector_store %arg14[%c0_46, %c0_47, %c0_48], %124 {strides = array<i32>} : memref<1x16x16xf32, #tpu.memory_space<vmem>>, vector<1x16x16xf32>,
    return
  }
  func.func @transform_0(%arg0: i32, %arg1: i32) -> (i32, i32, i32) {
    %c0_i32 = arith.constant 0 : i32
    %c0_i32_0 = arith.constant 0 : i32
    return %arg0, %arg1, %c0_i32 : i32, i32, i32
  }
  func.func @transform_1(%arg0: i32, %arg1: i32) -> (i32, i32, i32) {
    %c0_i32 = arith.constant 0 : i32
    %c0_i32_0 = arith.constant 0 : i32
    %c0_i32_1 = arith.constant 0 : i32
    return %arg0, %c0_i32, %c0_i32_0 : i32, i32, i32
  }
  func.func @transform_2(%arg0: i32, %arg1: i32) -> (i32, i32, i32) {
    %c0_i32 = arith.constant 0 : i32
    %c0_i32_0 = arith.constant 0 : i32
    return %arg0, %arg1, %c0_i32 : i32, i32, i32
  }
  func.func @transform_3(%arg0: i32, %arg1: i32) -> (i32, i32) {
    %c0_i32 = arith.constant 0 : i32
    %c0_i32_0 = arith.constant 0 : i32
    %c0_i32_1 = arith.constant 0 : i32
    return %c0_i32, %c0_i32_0 : i32, i32
  }
  func.func @transform_4(%arg0: i32, %arg1: i32) -> (i32, i32) {
    %c0_i32 = arith.constant 0 : i32
    %c0_i32_0 = arith.constant 0 : i32
    %c0_i32_1 = arith.constant 0 : i32
    return %c0_i32, %c0_i32_0 : i32, i32
  }
  func.func @transform_5(%arg0: i32, %arg1: i32) -> (i32, i32) {
    %c0_i32 = arith.constant 0 : i32
    %c0_i32_0 = arith.constant 0 : i32
    %c0_i32_1 = arith.constant 0 : i32
    return %c0_i32, %c0_i32_0 : i32, i32
  }
  func.func @transform_6(%arg0: i32, %arg1: i32) -> (i32, i32) {
    %c0_i32 = arith.constant 0 : i32
    %c0_i32_0 = arith.constant 0 : i32
    %c0_i32_1 = arith.constant 0 : i32
    return %c0_i32, %c0_i32_0 : i32, i32
  }
  func.func @transform_7(%arg0: i32, %arg1: i32) -> (i32, i32) {
    %c0_i32 = arith.constant 0 : i32
    %c0_i32_0 = arith.constant 0 : i32
    %c0_i32_1 = arith.constant 0 : i32
    return %c0_i32, %c0_i32_0 : i32, i32
  }
  func.func @transform_8(%arg0: i32, %arg1: i32) -> (i32, i32) {
    %c0_i32 = arith.constant 0 : i32
    %c0_i32_0 = arith.constant 0 : i32
    %c0_i32_1 = arith.constant 0 : i32
    return %c0_i32, %c0_i32_0 : i32, i32
  }
  func.func @transform_9(%arg0: i32, %arg1: i32) -> (i32, i32) {
    %c0_i32 = arith.constant 0 : i32
    %c0_i32_0 = arith.constant 0 : i32
    %c0_i32_1 = arith.constant 0 : i32
    return %c0_i32, %c0_i32_0 : i32, i32
  }
  func.func @transform_10(%arg0: i32, %arg1: i32) -> (i32, i32) {
    %c0_i32 = arith.constant 0 : i32
    %c0_i32_0 = arith.constant 0 : i32
    %c0_i32_1 = arith.constant 0 : i32
    return %c0_i32, %c0_i32_0 : i32, i32
  }
  func.func @transform_11(%arg0: i32, %arg1: i32) -> (i32, i32) {
    %c0_i32 = arith.constant 0 : i32
    %c0_i32_0 = arith.constant 0 : i32
    %c0_i32_1 = arith.constant 0 : i32
    return %c0_i32, %c0_i32_0 : i32, i32
  }
  func.func @transform_12(%arg0: i32, %arg1: i32) -> (i32, i32, i32) {
    %c0_i32 = arith.constant 0 : i32
    %c0_i32_0 = arith.constant 0 : i32
    return %arg0, %c0_i32, %arg1 : i32, i32, i32
  }
}

</mosaic_0001>

<llo_original>
// kernel: neg.1
$region0: #{neg.1}
  #allocation0 [shape = 's32[1]{0}', space=sflag, size = 0x4, scoped, tag = 'scoped memory for neg.1']
  %s0 = inlined_call_operand.vmem [shape: f32[2,16,16], index: 0, kind: input, shape index: {}]
  %s1 = inlined_call_operand.vmem [shape: f32[2,16,16], index: 1, kind: output, shape index: {}]
  %v2 = vld [vmem:[%s0] sm:$0xff]
  %3 = xla_tuple %v2
  %4 = xla_tuple %3
  %v5 = vxor.u32 %v2, 2147483648
  %6 = xla_tuple %v5
  %7 = vst [vmem:[%s1] sm:$0xff] %v5
  %s8 = scalar_lea.vmem %s0, 16
  %v9 = vld [vmem:[%s8] sm:$0xff]
  %10 = xla_tuple %v9
  %11 = xla_tuple %10
  %v12 = vxor.u32 %v9, 2147483648
  %13 = xla_tuple %v12
  %s14 = scalar_lea.vmem %s1, 16
  %15 = vst [vmem:[%s14] sm:$0xff] %v12
  %s16 = scalar_lea.vmem %s0, 8
  %v17 = vld [vmem:[%s16] sm:$0xff]
  %18 = xla_tuple %v17
  %19 = xla_tuple %18
  %v20 = vxor.u32 %v17, 2147483648
  %21 = xla_tuple %v20
  %s22 = scalar_lea.vmem %s1, 8
  %23 = vst [vmem:[%s22] sm:$0xff] %v20
  %s24 = scalar_lea.vmem %s0, 24
  %v25 = vld [vmem:[%s24] sm:$0xff]
  %26 = xla_tuple %v25
  %27 = xla_tuple %26
  %v28 = vxor.u32 %v25, 2147483648
  %29 = xla_tuple %v28
  %s30 = scalar_lea.vmem %s1, 24
  %31 = vst [vmem:[%s30] sm:$0xff] %v28

// kernel: edge_conv.4
$region0: #{edge_conv.4}
  #allocation0 [shape = 'u32[]', space=smem, size = 0x4, offset = 0x4, fixed_abs, tag = 'smem constant byte address 0x4 - core index']
  #allocation1 [shape = 'u32[144,128]{1,0:T(1,128)}', space=vmem, size = 0x12000, scoped, tag = 'internal scratch']
  %s0 = inlined_call_operand.vmem [shape: f32[2,16,4], index: 0, kind: input, shape index: {}, may-alias: {0,1}]
  %s1 = inlined_call_operand.vmem [shape: f32[2,16,4], index: 1, kind: input, shape index: {}, may-alias: {0,1}]
  %s2 = inlined_call_operand.vmem [shape: f32[2,16,16], index: 2, kind: output, shape index: {}]
  %s3 = sld [smem:[#allocation0]]
  $region41: #{edge_conv.4} parent=0
    _
  %s5 = ssub.s32 1, %s3
  %s6 = scalar_select 0, %s5, %s3
  loop: start=0, step=1, limit=4
  $region2: #{edge_conv.4} parent=0 // loop_pre_header
    _
  $region3: #{edge_conv.4} parent=0 // loop_header
    %s8 = sphi 0, %s12
    %p9 = scmp.ge.s32.totalorder %s8, 4
    %s15 = sphi 0, %s27
    %s16 = sphi 0, %s23
    %s17 = sphi 0, %s15
    %s18 = sphi 0, %s16
    %s19 = sphi 0, %s17
    %s20 = sphi 0, %s18
    %s32 = sphi 0, %s34
    %s35 = sphi 0, %s32
    %s36 = sphi 0, %s35
    %s52 = sphi 0, %s36
    %s58 = sphi 0, %s60
    %s61 = sphi 0, %s58
    %s62 = sphi 0, %s61
    %s78 = sphi 0, %s62
    %s86 = sphi 0, %s88
    %s89 = sphi 0, %s86
    %s90 = sphi 0, %s89
    %s106 = sphi 0, %s90
  $region4: #{edge_conv.4} parent=0 // loop_header_branch
    %11 = sbr.rel (%p9) target = $region8
  $region5: #{edge_conv.4} parent=0 // loop_body
    %s13 = ssub.s32 %s8, 1
    %s14 = ssub.s32 %s8, 2
    %s21 = sadd.s32 1, %s16
    %p22 = scmp.ge.s32.totalorder %s21, 1
    %s23 = scalar_select %p22, 0, %s21
    %s24 = sadd.s32 1, %s15
    %s25 = scalar_select %p22, %s24, %s15
    %p26 = scmp.ge.s32.totalorder %s25, 2
    %s27 = scalar_select %p26, 0, %s25
    %s28 = ssub.s32 %s15, %s27
    %s29 = ssub.s32 %s16, %s23
    %s30 = sor.u32 %s28, %s29
    %p31 = scmp.eq.s32.totalorder %s30, 0
    %s33 = sadd.s32 %s32, 1
    %s34 = scalar_select %p31, %s32, %s33
    %p37 = pneg %p31
    %p38 = scmp.eq.s32.totalorder %s8, 1
    %p39 = por %p37, %p38
    %p40 = scmp.ne.s32.totalorder %s32, %s35
    %p41 = scmp.eq.s32.totalorder %s8, 0
    %p42 = por %p40, %p41
    %p43 = scmp.ne.s32.totalorder %s32, %s35
    %p44 = scmp.eq.s32.totalorder %s13, 1
    %p45 = por %p43, %p44
    %p46 = scmp.ne.s32.totalorder %s35, %s36
    %p47 = scmp.eq.s32.totalorder %s13, 0
    %p48 = por %p46, %p47
    %p49 = scmp.ne.s32.totalorder %s35, %s36
    %p50 = scmp.eq.s32.totalorder %s14, 1
    %p51 = por %p49, %p50
    %p53 = scmp.ne.s32.totalorder %s36, %s52
    %p54 = scmp.eq.s32.totalorder %s14, 0
    %p55 = por %p53, %p54
    %s56 = ssub.s32 %s15, %s27
    %p57 = scmp.eq.s32.totalorder %s56, 0
    %s59 = sadd.s32 %s58, 1
    %s60 = scalar_select %p57, %s58, %s59
    %p63 = pneg %p57
    %p64 = scmp.eq.s32.totalorder %s8, 1
    %p65 = por %p63, %p64
    %p66 = scmp.ne.s32.totalorder %s58, %s61
    %p67 = scmp.eq.s32.totalorder %s8, 0
    %p68 = por %p66, %p67
    %p69 = scmp.ne.s32.totalorder %s58, %s61
    %p70 = scmp.eq.s32.totalorder %s13, 1
    %p71 = por %p69, %p70
    %p72 = scmp.ne.s32.totalorder %s61, %s62
    %p73 = scmp.eq.s32.totalorder %s13, 0
    %p74 = por %p72, %p73
    %p75 = scmp.ne.s32.totalorder %s61, %s62
    %p76 = scmp.eq.s32.totalorder %s14, 1
    %p77 = por %p75, %p76
    %p79 = scmp.ne.s32.totalorder %s62, %s78
    %p80 = scmp.eq.s32.totalorder %s14, 0
    %p81 = por %p79, %p80
    %s82 = ssub.s32 %s15, %s27
    %s83 = ssub.s32 %s16, %s23
    %s84 = sor.u32 %s82, %s83
    %p85 = scmp.eq.s32.totalorder %s84, 0
    %s87 = sadd.s32 %s86, 1
    %s88 = scalar_select %p85, %s86, %s87
    %p91 = pneg %p85
    %p92 = scmp.eq.s32.totalorder %s8, 1
    %p93 = por %p91, %p92
    %p94 = scmp.ne.s32.totalorder %s86, %s89
    %p95 = scmp.eq.s32.totalorder %s8, 0
    %p96 = por %p94, %p95
    %p97 = scmp.ne.s32.totalorder %s86, %s89
    %p98 = scmp.eq.s32.totalorder %s13, 1
    %p99 = por %p97, %p98
    %p100 = scmp.ne.s32.totalorder %s89, %s90
    %p101 = scmp.eq.s32.totalorder %s13, 0
    %p102 = por %p100, %p101
    %p103 = scmp.ne.s32.totalorder %s89, %s90
    %p104 = scmp.eq.s32.totalorder %s14, 1
    %p105 = por %p103, %p104
    %p107 = scmp.ne.s32.totalorder %s90, %s106
    %p108 = scmp.eq.s32.totalorder %s14, 0
    %p109 = por %p107, %p108
    %p110 = scmp.le.s32.totalorder 1, %s8
    %p111 = scmp.lt.s32.totalorder %s8, 3
    %p112 = pnand %p110, %p111
    %p113 = pneg %p112
    // Predicated region
    $region9: #{edge_conv.4} parent=5 // pred_check
      _
    $region10: #{edge_conv.4} parent=5 // pred_check_branch
      %115 = sbr.rel (%p112) target = $region12
    $region11: #{edge_conv.4} parent=5 // pred_region
      %s116 = ssub.s32 %s8, 1
    $region12: #{edge_conv.4} parent=5 // pred_fallthru
      _
    %p117 = scmp.lt.s32.totalorder %s8, 2
    // Predicated region
    $region13: #{edge_conv.4} parent=5 // pred_check
      %p118 = pneg %p117
    $region14: #{edge_conv.4} parent=5 // pred_check_branch
      %120 = sbr.rel (%p118) target = $region16
    $region15: #{edge_conv.4} parent=5 // pred_region
      // Predicated region
      $region17: #{edge_conv.4} parent=15 // pred_check
        %p121 = pneg %p42
      $region18: #{edge_conv.4} parent=15 // pred_check_branch
        %123 = sbr.rel (%p121) target = $region20
      $region19: #{edge_conv.4} parent=15 // pred_region
        %s124 = smul.u32 2, %s16
        %p125 = scmp.lt.s32.totalorder %s15, 1
        %s126 = scalar_select %p125, %s15, 1
        %p127 = scmp.lt.s32.totalorder %s124, 1
        %s128 = scalar_select %p127, %s124, 1
        %s129 = smul.addr %s126, 2
        %s130 = sadd.s32 %s128, %s129
        %s131 = smul.addr %s130, 8
        %s132 = scalar_lea.vmem %s0, %s131
        %s133 = smul.u32 2, %s16
      $region20: #{edge_conv.4} parent=15 // pred_fallthru
        _
      // Predicated region
      $region21: #{edge_conv.4} parent=15 // pred_check
        %p134 = pneg %p68
      $region22: #{edge_conv.4} parent=15 // pred_check_branch
        %136 = sbr.rel (%p134) target = $region24
      $region23: #{edge_conv.4} parent=15 // pred_region
        %p137 = scmp.lt.s32.totalorder %s15, 1
        %s138 = scalar_select %p137, %s15, 1
        %s139 = smul.addr %s138, 2
        %s140 = smul.addr %s139, 8
        %s141 = scalar_lea.vmem %s1, %s140
      $region24: #{edge_conv.4} parent=15 // pred_fallthru
        _
    $region16: #{edge_conv.4} parent=5 // pred_fallthru
      _
    %p142 = scmp.le.s32.totalorder 1, %s8
    %p143 = scmp.lt.s32.totalorder %s8, 3
    %p144 = pnand %p142, %p143
    %p145 = pneg %p144
    // Predicated region
    $region25: #{edge_conv.4} parent=5 // pred_check
      _
    $region26: #{edge_conv.4} parent=5 // pred_check_branch
      %147 = sbr.rel (%p144) target = $region28
    $region27: #{edge_conv.4} parent=5 // pred_region
      %s148 = ssub.s32 %s8, 1
      %s149 = smul.u32 2, %s18
      %p150 = scmp.lt.s32.totalorder %s17, 1
      %s151 = scalar_select %p150, %s17, 1
      %p152 = scmp.lt.s32.totalorder %s149, 1
      %s153 = scalar_select %p152, %s149, 1
      %s154 = smul.addr %s151, 2
      %s155 = sadd.s32 %s153, %s154
      %s156 = smul.addr %s155, 8
      %s157 = scalar_lea.vmem %s0, %s156
      %p158 = pneg %p48
      %p159 = pneg %p45
      %p160 = scmp.lt.s32.totalorder %s17, 1
      %s161 = scalar_select %p160, %s17, 1
      %s162 = smul.addr %s161, 2
      %s163 = smul.addr %s162, 8
      %s164 = scalar_lea.vmem %s1, %s163
      %p165 = pneg %p74
      %p166 = pneg %p71
      %p167 = pneg %p102
      %p168 = pneg %p99
      %s169 = smul.u32 2, %s18
      %p170 = scmp.lt.s32.totalorder %s17, 1
      %s171 = scalar_select %p170, %s17, 1
      %p172 = scmp.lt.s32.totalorder %s169, 1
      %s173 = scalar_select %p172, %s169, 1
      %s174 = smul.addr %s171, 2
      %s175 = sadd.s32 %s173, %s174
      %s176 = smul.addr %s175, 8
      %s177 = scalar_lea.vmem %s2, %s176
      %s178 = smul.u32 2, %s18
      %p179 = scmp.lt.s32.totalorder %s17, 1
      %s180 = scalar_select %p179, %s17, 1
      %p181 = scmp.lt.s32.totalorder %s178, 1
      %s182 = scalar_select %p181, %s178, 1
      %s183 = smul.addr %s180, 2
      %s184 = sadd.s32 %s182, %s183
      %s185 = smul.addr %s184, 8
      %s186 = scalar_lea.vmem %s0, %s185
      %s187 = smul.u32 2, %s18
      %p188 = scmp.lt.s32.totalorder %s17, 1
      %s189 = scalar_select %p188, %s17, 1
      %s190 = smul.addr %s189, 2
      %s191 = smul.addr %s190, 8
      %s192 = scalar_lea.vmem %s1, %s191
      %s193 = smul.u32 2, %s18
      %p194 = scmp.lt.s32.totalorder %s17, 1
      %s195 = scalar_select %p194, %s17, 1
      %p196 = scmp.lt.s32.totalorder %s193, 1
      %s197 = scalar_select %p196, %s193, 1
      %s198 = smul.addr %s195, 2
      %s199 = sadd.s32 %s197, %s198
      %s200 = smul.addr %s199, 8
      %s201 = scalar_lea.vmem %s2, %s200
      %s202 = smul.u32 2, %s18
      %v203 = vld [vmem:[%s186] sm:$0xff]
      %v204 = vld [vmem:[%s186 + $0x8] sm:$0xff]
      %v205 = vld [vmem:[%s192] sm:$0xff]
      %v206 = vld [vmem:[%s192 + $0x8] sm:$0xff]
      %v207 = vmul.f32 %v203, %v203
      %v208 = vmul.f32 %v204, %v204
      %vm209 = vcmask 31744
      %v210 = vsel %vm209, %v207, 0.0
      %211 = vadd.xlane.f32.xlu0 %v210
      %v212 = vpop.xlane.xlu0 %211
      %v213 = vsel %vm209, %v208, 0.0
      %214 = vadd.xlane.f32.xlu0 %v213
      %v215 = vpop.xlane.xlu0 %214
      %v216 = vmul.f32 %v205, %v205
      %v217 = vmul.f32 %v206, %v206
      %v218 = vsel %vm209, %v216, 0.0
      %219 = vadd.xlane.f32.xlu0 %v218
      %v220 = vpop.xlane.xlu0 %219
      %v221 = vsel %vm209, %v217, 0.0
      %222 = vadd.xlane.f32.xlu0 %v221
      %v223 = vpop.xlane.xlu0 %222
      %v225 = vsel %vm209, %v203, 0
      %v228 = vsel %vm209, %v204, 0
      %v231 = vsel %vm209, %v205, 0
      %v234 = vsel %vm209, %v206, 0
      %236 = vmatprep.subr.mxu0 0.0
      %237 = vmatpush1.xpose.msra.mxu0 %v231
      %238 = vmatprep.subr.mxu0 0.0
      %239 = vmatpush1.xpose.msra.mxu0 %v234
      %240 = vmatprep.subr.mxu0 0.0
      %241 = vmatpush1.xpose.msra.mxu0 0.0
      %242 = vmatprep.subr.mxu0 0.0
      %243 = vmatpush1.xpose.msra.mxu0 0.0
      %244 = vmatprep.subr.mxu0 0.0
      %245 = vmatpush1.xpose.msra.mxu0 0.0
      %246 = vmatprep.subr.mxu0 0.0
      %247 = vmatpush1.xpose.msra.mxu0 0.0
      %248 = vmatprep.subr.mxu0 0.0
      %249 = vmatpush1.xpose.msra.mxu0 0.0
      %250 = vmatprep.subr.mxu0 0.0
      %251 = vmatpush1.xpose.msra.mxu0 0.0
      %252 = vmatprep.subr.mxu0 0.0
      %253 = vmatpush1.xpose.msra.mxu0 0.0
      %254 = vmatprep.subr.mxu0 0.0
      %255 = vmatpush1.xpose.msra.mxu0 0.0
      %256 = vmatprep.subr.mxu0 0.0
      %257 = vmatpush1.xpose.msra.mxu0 0.0
      %258 = vmatprep.subr.mxu0 0.0
      %259 = vmatpush1.xpose.msra.mxu0 0.0
      %260 = vmatprep.subr.mxu0 0.0
      %261 = vmatpush1.xpose.msra.mxu0 0.0
      %262 = vmatprep.subr.mxu0 0.0
      %263 = vmatpush1.xpose.msra.mxu0 0.0
      %264 = vmatprep.subr.mxu0 0.0
      %265 = vmatpush1.xpose.msra.mxu0 0.0
      %266 = vmatprep.subr.mxu0 0.0
      %267 = vmatpush1.xpose.msra.mxu0 0.0
      %268 = vmatprep.subr.mxu0 0.0
      %269 = vmatpush1.xpose.msra.mxu0 0.0
      %270 = vmatprep.subr.mxu0 0.0
      %271 = vmatpush1.xpose.msra.mxu0 0.0
      %272 = vmatprep.subr.mxu0 0.0
      %273 = vmatpush1.xpose.msra.mxu0 0.0
      %274 = vmatprep.subr.mxu0 0.0
      %275 = vmatpush1.xpose.msra.mxu0 0.0
      %276 = vmatprep.subr.mxu0 0.0
      %277 = vmatpush1.xpose.msra.mxu0 0.0
      %278 = vmatprep.subr.mxu0 0.0
      %279 = vmatpush1.xpose.msra.mxu0 0.0
      %280 = vmatprep.subr.mxu0 0.0
      %281 = vmatpush1.xpose.msra.mxu0 0.0
      %282 = vmatprep.subr.mxu0 0.0
      %283 = vmatpush1.xpose.msra.mxu0 0.0
      %284 = vmatprep.subr.mxu0 0.0
      %285 = vmatpush1.xpose.msra.mxu0 0.0
      %286 = vmatprep.subr.mxu0 0.0
      %287 = vmatpush1.xpose.msra.mxu0 0.0
      %288 = vmatprep.subr.mxu0 0.0
      %289 = vmatpush1.xpose.msra.mxu0 0.0
      %290 = vmatprep.subr.mxu0 0.0
      %291 = vmatpush1.xpose.msra.mxu0 0.0
      %292 = vmatprep.subr.mxu0 0.0
      %293 = vmatpush1.xpose.msra.mxu0 0.0
      %294 = vmatprep.subr.mxu0 0.0
      %295 = vmatpush1.xpose.msra.mxu0 0.0
      %296 = vmatprep.subr.mxu0 0.0
      %297 = vmatpush1.xpose.msra.mxu0 0.0
      %298 = vmatprep.subr.mxu0 0.0
      %299 = vmatpush1.xpose.msra.mxu0 0.0
      %300 = vmatprep.mubr.f32.mxu0 0.0
      %301 = vmatmul.mubr.f32.gmra.mrb[0].mxu0 %v225
      %v302 = vpop.f32.mrb[0].mxu0
      %v303 = vadd.f32 0.0, %v302
      %v304 = vpop.f32.mrb[0].mxu0
      %305 = vmatprep.mubr.f32.mxu0 0.0
      %306 = vmatmul.mubr.f32.gmra.mrb[0].mxu0 %v228
      %v307 = vpop.f32.mrb[0].mxu0
      %v308 = vadd.f32 0.0, %v307
      %v309 = vpop.f32.mrb[0].mxu0
      %310 = vdwg.mxu0
      %v313 = vlaneseq
      %v314 = vand.u32 %v313, 127
      %v315 = vlaneseq
      %v316 = vshrl.u32 %v315, 7
      %v317 = vsub.s32 %v314, %v316
      %v318 = vrot.slane %v220, %v317
      %v319 = vadd.s32 %v314, 4294967288
      %v320 = vlaneseq
      %v321 = vshrl.u32 %v320, 7
      %v322 = vsub.s32 %v319, %v321
      %v323 = vrot.slane %v223, %v322
      %vm324 = vcmask 130112
      %v325 = vsel %vm324, %v323, %v318
      %vm326 = vcmask 1042434
      %v327 = vsel %vm326, %v325, %v325
      %vm328 = vcmask 1043459
      %v329 = vsel %vm328, %v325, %v327
      %vm330 = vcmask 1044484
      %v331 = vsel %vm330, %v325, %v329
      %vm332 = vcmask 1045509
      %v333 = vsel %vm332, %v325, %v331
      %vm334 = vcmask 1046534
      %v335 = vsel %vm334, %v325, %v333
      %vm336 = vcmask 1047559
      %v337 = vsel %vm336, %v325, %v335
      %v339 = vadd.f32 %v212, %v337
      %v340 = vadd.f32 %v215, %v337
      %v341 = vmul.f32 %v303, 2.0
      %v342 = vmul.f32 %v308, 2.0
      %v343 = vsub.f32 %v339, %v341
      %v344 = vsub.f32 %v340, %v342
      %vm345 = vcmask 130048
      %346 = vst.msk [vmem:[%s201] sm:$0xff] %vm345, %v343
      %347 = vst.msk [vmem:[%s201 + $0x8] sm:$0xff] %vm345, %v344
      %s348 = smul.u32 2, %s18
      %p349 = scmp.lt.s32.totalorder %s17, 1
      %s350 = scalar_select %p349, %s17, 1
      %p351 = scmp.lt.s32.totalorder %s348, 1
      %s352 = scalar_select %p351, %s348, 1
      %s353 = smul.addr %s350, 2
      %s354 = sadd.s32 %s352, %s353
      %s355 = smul.addr %s354, 8
      %s356 = scalar_lea.vmem %s2, %s355
      // Predicated region
      $region29: #{edge_conv.4} parent=27 // pred_check
        %p357 = pneg %p99
      $region30: #{edge_conv.4} parent=27 // pred_check_branch
        %359 = sbr.rel (%p357) target = $region32
      $region31: #{edge_conv.4} parent=27 // pred_region
        %s360 = smul.u32 2, %s18
      $region32: #{edge_conv.4} parent=27 // pred_fallthru
        _
    $region28: #{edge_conv.4} parent=5 // pred_fallthru
      _
    %p361 = scmp.le.s32.totalorder 2, %s8
    // Predicated region
    $region33: #{edge_conv.4} parent=5 // pred_check
      %p362 = pneg %p361
    $region34: #{edge_conv.4} parent=5 // pred_check_branch
      %364 = sbr.rel (%p362) target = $region36
    $region35: #{edge_conv.4} parent=5 // pred_region
      %s365 = ssub.s32 %s8, 2
      // Predicated region
      $region37: #{edge_conv.4} parent=35 // pred_check
        %p366 = pneg %p105
      $region38: #{edge_conv.4} parent=35 // pred_check_branch
        %368 = sbr.rel (%p366) target = $region40
      $region39: #{edge_conv.4} parent=35 // pred_region
        %s369 = smul.u32 2, %s20
        %p370 = scmp.lt.s32.totalorder %s19, 1
        %s371 = scalar_select %p370, %s19, 1
        %p372 = scmp.lt.s32.totalorder %s369, 1
        %s373 = scalar_select %p372, %s369, 1
        %s374 = smul.addr %s371, 2
        %s375 = sadd.s32 %s373, %s374
        %s376 = smul.addr %s375, 8
        %s377 = scalar_lea.vmem %s2, %s376
      $region40: #{edge_conv.4} parent=35 // pred_fallthru
        _
    $region36: #{edge_conv.4} parent=5 // pred_fallthru
      _
  $region6: #{edge_conv.4} parent=0 // loop_footer
    %s12 = sadd.s32 1, %s8
  $region7: #{edge_conv.4} parent=0 // loop_footer_branch
    %7 = sbr.rel target = $region3
  $region8: #{edge_conv.4} parent=0 // loop_exit
    _

// kernel: edge_conv.5
$region0: #{edge_conv.5}
  #allocation0 [shape = 'u32[]', space=smem, size = 0x4, offset = 0x4, fixed_abs, tag = 'smem constant byte address 0x4 - core index']
  #allocation1 [shape = 'u32[144,128]{1,0:T(1,128)}', space=vmem, size = 0x12000, scoped, tag = 'internal scratch']
  %s0 = inlined_call_operand.vmem [shape: f32[2,16,4], index: 0, kind: input, shape index: {}, may-alias: {0,1}]
  %s1 = inlined_call_operand.vmem [shape: f32[2,16,4], index: 1, kind: input, shape index: {}, may-alias: {0,1}]
  %s2 = inlined_call_operand.vmem [shape: s32[2,16,4], index: 2, kind: input, shape index: {}]
  %s3 = inlined_call_operand.vmem [shape: f32[4,8], index: 3, kind: input, shape index: {}]
  %s4 = inlined_call_operand.vmem [shape: f32[4,8], index: 4, kind: input, shape index: {}]
  %s5 = inlined_call_operand.vmem [shape: f32[1,8], index: 5, kind: input, shape index: {}]
  %s6 = inlined_call_operand.vmem [shape: f32[2,8], index: 6, kind: output, shape index: {}]
  %s7 = sld [smem:[#allocation0]]
  $region65: #{edge_conv.5} parent=0
    _
  %s9 = ssub.s32 1, %s7
  %s10 = scalar_select 0, %s9, %s7
  loop: start=0, step=1, limit=4
  $region2: #{edge_conv.5} parent=0 // loop_pre_header
    _
  $region3: #{edge_conv.5} parent=0 // loop_header
    %s12 = sphi 0, %s16
    %p13 = scmp.ge.s32.totalorder %s12, 4
    %s19 = sphi 0, %s31
    %s20 = sphi 0, %s27
    %s21 = sphi 0, %s19
    %s22 = sphi 0, %s20
    %s23 = sphi 0, %s21
    %s24 = sphi 0, %s22
    %s36 = sphi 0, %s38
    %s39 = sphi 0, %s36
    %s40 = sphi 0, %s39
    %s56 = sphi 0, %s40
    %s62 = sphi 0, %s64
    %s65 = sphi 0, %s62
    %s66 = sphi 0, %s65
    %s82 = sphi 0, %s66
    %s90 = sphi 0, %s92
    %s93 = sphi 0, %s90
    %s94 = sphi 0, %s93
    %s110 = sphi 0, %s94
    %s114 = sphi 0, %s114
    %s116 = sphi 0, %s114
    %s117 = sphi 0, %s116
    %s131 = sphi 0, %s117
    %s135 = sphi 0, %s135
    %s137 = sphi 0, %s135
    %s138 = sphi 0, %s137
    %s152 = sphi 0, %s138
    %s156 = sphi 0, %s156
    %s158 = sphi 0, %s156
    %s159 = sphi 0, %s158
    %s173 = sphi 0, %s159
    %s177 = sphi 0, %s177
    %s179 = sphi 0, %s177
    %s180 = sphi 0, %s179
    %s194 = sphi 0, %s180
  $region4: #{edge_conv.5} parent=0 // loop_header_branch
    %15 = sbr.rel (%p13) target = $region8
  $region5: #{edge_conv.5} parent=0 // loop_body
    %s17 = ssub.s32 %s12, 1
    %s18 = ssub.s32 %s12, 2
    %s25 = sadd.s32 1, %s20
    %p26 = scmp.ge.s32.totalorder %s25, 1
    %s27 = scalar_select %p26, 0, %s25
    %s28 = sadd.s32 1, %s19
    %s29 = scalar_select %p26, %s28, %s19
    %p30 = scmp.ge.s32.totalorder %s29, 2
    %s31 = scalar_select %p30, 0, %s29
    %s32 = ssub.s32 %s19, %s31
    %s33 = ssub.s32 %s20, %s27
    %s34 = sor.u32 %s32, %s33
    %p35 = scmp.eq.s32.totalorder %s34, 0
    %s37 = sadd.s32 %s36, 1
    %s38 = scalar_select %p35, %s36, %s37
    %p41 = pneg %p35
    %p42 = scmp.eq.s32.totalorder %s12, 1
    %p43 = por %p41, %p42
    %p44 = scmp.ne.s32.totalorder %s36, %s39
    %p45 = scmp.eq.s32.totalorder %s12, 0
    %p46 = por %p44, %p45
    %p47 = scmp.ne.s32.totalorder %s36, %s39
    %p48 = scmp.eq.s32.totalorder %s17, 1
    %p49 = por %p47, %p48
    %p50 = scmp.ne.s32.totalorder %s39, %s40
    %p51 = scmp.eq.s32.totalorder %s17, 0
    %p52 = por %p50, %p51
    %p53 = scmp.ne.s32.totalorder %s39, %s40
    %p54 = scmp.eq.s32.totalorder %s18, 1
    %p55 = por %p53, %p54
    %p57 = scmp.ne.s32.totalorder %s40, %s56
    %p58 = scmp.eq.s32.totalorder %s18, 0
    %p59 = por %p57, %p58
    %s60 = ssub.s32 %s19, %s31
    %p61 = scmp.eq.s32.totalorder %s60, 0
    %s63 = sadd.s32 %s62, 1
    %s64 = scalar_select %p61, %s62, %s63
    %p67 = pneg %p61
    %p68 = scmp.eq.s32.totalorder %s12, 1
    %p69 = por %p67, %p68
    %p70 = scmp.ne.s32.totalorder %s62, %s65
    %p71 = scmp.eq.s32.totalorder %s12, 0
    %p72 = por %p70, %p71
    %p73 = scmp.ne.s32.totalorder %s62, %s65
    %p74 = scmp.eq.s32.totalorder %s17, 1
    %p75 = por %p73, %p74
    %p76 = scmp.ne.s32.totalorder %s65, %s66
    %p77 = scmp.eq.s32.totalorder %s17, 0
    %p78 = por %p76, %p77
    %p79 = scmp.ne.s32.totalorder %s65, %s66
    %p80 = scmp.eq.s32.totalorder %s18, 1
    %p81 = por %p79, %p80
    %p83 = scmp.ne.s32.totalorder %s66, %s82
    %p84 = scmp.eq.s32.totalorder %s18, 0
    %p85 = por %p83, %p84
    %s86 = ssub.s32 %s19, %s31
    %s87 = ssub.s32 %s20, %s27
    %s88 = sor.u32 %s86, %s87
    %p89 = scmp.eq.s32.totalorder %s88, 0
    %s91 = sadd.s32 %s90, 1
    %s92 = scalar_select %p89, %s90, %s91
    %p95 = pneg %p89
    %p96 = scmp.eq.s32.totalorder %s12, 1
    %p97 = por %p95, %p96
    %p98 = scmp.ne.s32.totalorder %s90, %s93
    %p99 = scmp.eq.s32.totalorder %s12, 0
    %p100 = por %p98, %p99
    %p101 = scmp.ne.s32.totalorder %s90, %s93
    %p102 = scmp.eq.s32.totalorder %s17, 1
    %p103 = por %p101, %p102
    %p104 = scmp.ne.s32.totalorder %s93, %s94
    %p105 = scmp.eq.s32.totalorder %s17, 0
    %p106 = por %p104, %p105
    %p107 = scmp.ne.s32.totalorder %s93, %s94
    %p108 = scmp.eq.s32.totalorder %s18, 1
    %p109 = por %p107, %p108
    %p111 = scmp.ne.s32.totalorder %s94, %s110
    %p112 = scmp.eq.s32.totalorder %s18, 0
    %p113 = por %p111, %p112
    %s115 = sadd.s32 %s114, 1
    %p118 = scmp.eq.s32.totalorder %s12, 1
    %p119 = scmp.ne.s32.totalorder %s114, %s116
    %p120 = scmp.eq.s32.totalorder %s12, 0
    %p121 = por %p119, %p120
    %p122 = scmp.ne.s32.totalorder %s114, %s116
    %p123 = scmp.eq.s32.totalorder %s17, 1
    %p124 = por %p122, %p123
    %p125 = scmp.ne.s32.totalorder %s116, %s117
    %p126 = scmp.eq.s32.totalorder %s17, 0
    %p127 = por %p125, %p126
    %p128 = scmp.ne.s32.totalorder %s116, %s117
    %p129 = scmp.eq.s32.totalorder %s18, 1
    %p130 = por %p128, %p129
    %p132 = scmp.ne.s32.totalorder %s117, %s131
    %p133 = scmp.eq.s32.totalorder %s18, 0
    %p134 = por %p132, %p133
    %s136 = sadd.s32 %s135, 1
    %p139 = scmp.eq.s32.totalorder %s12, 1
    %p140 = scmp.ne.s32.totalorder %s135, %s137
    %p141 = scmp.eq.s32.totalorder %s12, 0
    %p142 = por %p140, %p141
    %p143 = scmp.ne.s32.totalorder %s135, %s137
    %p144 = scmp.eq.s32.totalorder %s17, 1
    %p145 = por %p143, %p144
    %p146 = scmp.ne.s32.totalorder %s137, %s138
    %p147 = scmp.eq.s32.totalorder %s17, 0
    %p148 = por %p146, %p147
    %p149 = scmp.ne.s32.totalorder %s137, %s138
    %p150 = scmp.eq.s32.totalorder %s18, 1
    %p151 = por %p149, %p150
    %p153 = scmp.ne.s32.totalorder %s138, %s152
    %p154 = scmp.eq.s32.totalorder %s18, 0
    %p155 = por %p153, %p154
    %s157 = sadd.s32 %s156, 1
    %p160 = scmp.eq.s32.totalorder %s12, 1
    %p161 = scmp.ne.s32.totalorder %s156, %s158
    %p162 = scmp.eq.s32.totalorder %s12, 0
    %p163 = por %p161, %p162
    %p164 = scmp.ne.s32.totalorder %s156, %s158
    %p165 = scmp.eq.s32.totalorder %s17, 1
    %p166 = por %p164, %p165
    %p167 = scmp.ne.s32.totalorder %s158, %s159
    %p168 = scmp.eq.s32.totalorder %s17, 0
    %p169 = por %p167, %p168
    %p170 = scmp.ne.s32.totalorder %s158, %s159
    %p171 = scmp.eq.s32.totalorder %s18, 1
    %p172 = por %p170, %p171
    %p174 = scmp.ne.s32.totalorder %s159, %s173
    %p175 = scmp.eq.s32.totalorder %s18, 0
    %p176 = por %p174, %p175
    %s178 = sadd.s32 %s177, 1
    %p181 = scmp.eq.s32.totalorder %s12, 1
    %p182 = scmp.ne.s32.totalorder %s177, %s179
    %p183 = scmp.eq.s32.totalorder %s12, 0
    %p184 = por %p182, %p183
    %p185 = scmp.ne.s32.totalorder %s177, %s179
    %p186 = scmp.eq.s32.totalorder %s17, 1
    %p187 = por %p185, %p186
    %p188 = scmp.ne.s32.totalorder %s179, %s180
    %p189 = scmp.eq.s32.totalorder %s17, 0
    %p190 = por %p188, %p189
    %p191 = scmp.ne.s32.totalorder %s179, %s180
    %p192 = scmp.eq.s32.totalorder %s18, 1
    %p193 = por %p191, %p192
    %p195 = scmp.ne.s32.totalorder %s180, %s194
    %p196 = scmp.eq.s32.totalorder %s18, 0
    %p197 = por %p195, %p196
    %p198 = scmp.le.s32.totalorder 1, %s12
    %p199 = scmp.lt.s32.totalorder %s12, 3
    %p200 = pnand %p198, %p199
    %p201 = pneg %p200
    // Predicated region
    $region9: #{edge_conv.5} parent=5 // pred_check
      _
    $region10: #{edge_conv.5} parent=5 // pred_check_branch
      %203 = sbr.rel (%p200) target = $region12
    $region11: #{edge_conv.5} parent=5 // pred_region
      %s204 = ssub.s32 %s12, 1
      // Predicated region
      $region13: #{edge_conv.5} parent=11 // pred_check
        %p205 = pneg %p127
      $region14: #{edge_conv.5} parent=11 // pred_check_branch
        %207 = sbr.rel (%p205) target = $region16
      $region15: #{edge_conv.5} parent=11 // pred_region
        _
      $region16: #{edge_conv.5} parent=11 // pred_fallthru
        _
      // Predicated region
      $region17: #{edge_conv.5} parent=11 // pred_check
        %p208 = pneg %p148
      $region18: #{edge_conv.5} parent=11 // pred_check_branch
        %210 = sbr.rel (%p208) target = $region20
      $region19: #{edge_conv.5} parent=11 // pred_region
        _
      $region20: #{edge_conv.5} parent=11 // pred_fallthru
        _
      // Predicated region
      $region21: #{edge_conv.5} parent=11 // pred_check
        %p211 = pneg %p169
      $region22: #{edge_conv.5} parent=11 // pred_check_branch
        %213 = sbr.rel (%p211) target = $region24
      $region23: #{edge_conv.5} parent=11 // pred_region
        _
      $region24: #{edge_conv.5} parent=11 // pred_fallthru
        _
    $region12: #{edge_conv.5} parent=5 // pred_fallthru
      _
    %p214 = scmp.lt.s32.totalorder %s12, 2
    // Predicated region
    $region25: #{edge_conv.5} parent=5 // pred_check
      %p215 = pneg %p214
    $region26: #{edge_conv.5} parent=5 // pred_check_branch
      %217 = sbr.rel (%p215) target = $region28
    $region27: #{edge_conv.5} parent=5 // pred_region
      // Predicated region
      $region29: #{edge_conv.5} parent=27 // pred_check
        %p218 = pneg %p46
      $region30: #{edge_conv.5} parent=27 // pred_check_branch
        %220 = sbr.rel (%p218) target = $region32
      $region31: #{edge_conv.5} parent=27 // pred_region
        %s221 = smul.u32 2, %s20
        %p222 = scmp.lt.s32.totalorder %s19, 1
        %s223 = scalar_select %p222, %s19, 1
        %p224 = scmp.lt.s32.totalorder %s221, 1
        %s225 = scalar_select %p224, %s221, 1
        %s226 = smul.addr %s223, 2
        %s227 = sadd.s32 %s225, %s226
        %s228 = smul.addr %s227, 8
        %s229 = scalar_lea.vmem %s0, %s228
        %s230 = smul.u32 2, %s20
      $region32: #{edge_conv.5} parent=27 // pred_fallthru
        _
      // Predicated region
      $region33: #{edge_conv.5} parent=27 // pred_check
        %p231 = pneg %p72
      $region34: #{edge_conv.5} parent=27 // pred_check_branch
        %233 = sbr.rel (%p231) target = $region36
      $region35: #{edge_conv.5} parent=27 // pred_region
        %p234 = scmp.lt.s32.totalorder %s19, 1
        %s235 = scalar_select %p234, %s19, 1
        %s236 = smul.addr %s235, 2
        %s237 = smul.addr %s236, 8
        %s238 = scalar_lea.vmem %s1, %s237
      $region36: #{edge_conv.5} parent=27 // pred_fallthru
        _
      // Predicated region
      $region37: #{edge_conv.5} parent=27 // pred_check
        %p239 = pneg %p100
      $region38: #{edge_conv.5} parent=27 // pred_check_branch
        %241 = sbr.rel (%p239) target = $region40
      $region39: #{edge_conv.5} parent=27 // pred_region
        %s242 = smul.u32 2, %s20
        %p243 = scmp.lt.s32.totalorder %s19, 1
        %s244 = scalar_select %p243, %s19, 1
        %p245 = scmp.lt.s32.totalorder %s242, 1
        %s246 = scalar_select %p245, %s242, 1
        %s247 = smul.addr %s244, 2
        %s248 = sadd.s32 %s246, %s247
        %s249 = smul.addr %s248, 8
        %s250 = scalar_lea.vmem %s2, %s249
        %s251 = smul.u32 2, %s20
      $region40: #{edge_conv.5} parent=27 // pred_fallthru
        _
    $region28: #{edge_conv.5} parent=5 // pred_fallthru
      _
    %p252 = scmp.le.s32.totalorder 1, %s12
    %p253 = scmp.lt.s32.totalorder %s12, 3
    %p254 = pnand %p252, %p253
    %p255 = pneg %p254
    // Predicated region
    $region41: #{edge_conv.5} parent=5 // pred_check
      _
    $region42: #{edge_conv.5} parent=5 // pred_check_branch
      %257 = sbr.rel (%p254) target = $region44
    $region43: #{edge_conv.5} parent=5 // pred_region
      %s258 = ssub.s32 %s12, 1
      %s259 = smul.u32 2, %s22
      %p260 = scmp.lt.s32.totalorder %s21, 1
      %s261 = scalar_select %p260, %s21, 1
      %p262 = scmp.lt.s32.totalorder %s259, 1
      %s263 = scalar_select %p262, %s259, 1
      %s264 = smul.addr %s261, 2
      %s265 = sadd.s32 %s263, %s264
      %s266 = smul.addr %s265, 8
      %s267 = scalar_lea.vmem %s0, %s266
      %p268 = pneg %p52
      %p269 = pneg %p49
      %p270 = scmp.lt.s32.totalorder %s21, 1
      %s271 = scalar_select %p270, %s21, 1
      %s272 = smul.addr %s271, 2
      %s273 = smul.addr %s272, 8
      %s274 = scalar_lea.vmem %s1, %s273
      %p275 = pneg %p78
      %p276 = pneg %p75
      %s277 = smul.u32 2, %s22
      %p278 = scmp.lt.s32.totalorder %s21, 1
      %s279 = scalar_select %p278, %s21, 1
      %p280 = scmp.lt.s32.totalorder %s277, 1
      %s281 = scalar_select %p280, %s277, 1
      %s282 = smul.addr %s279, 2
      %s283 = sadd.s32 %s281, %s282
      %s284 = smul.addr %s283, 8
      %s285 = scalar_lea.vmem %s2, %s284
      %p286 = pneg %p106
      %p287 = pneg %p103
      %p288 = pneg %p127
      %p289 = pneg %p124
      %p290 = pneg %p148
      %p291 = pneg %p145
      %p292 = pneg %p169
      %p293 = pneg %p166
      %p294 = pneg %p190
      %p295 = pneg %p187
      %s296 = smul.u32 2, %s22
      %p297 = scmp.lt.s32.totalorder %s21, 1
      %s298 = scalar_select %p297, %s21, 1
      %p299 = scmp.lt.s32.totalorder %s296, 1
      %s300 = scalar_select %p299, %s296, 1
      %s301 = smul.addr %s298, 2
      %s302 = sadd.s32 %s300, %s301
      %s303 = smul.addr %s302, 8
      %s304 = scalar_lea.vmem %s0, %s303
      %s305 = smul.u32 2, %s22
      %p306 = scmp.lt.s32.totalorder %s21, 1
      %s307 = scalar_select %p306, %s21, 1
      %s308 = smul.addr %s307, 2
      %s309 = smul.addr %s308, 8
      %s310 = scalar_lea.vmem %s1, %s309
      %s311 = smul.u32 2, %s22
      %p312 = scmp.lt.s32.totalorder %s21, 1
      %s313 = scalar_select %p312, %s21, 1
      %p314 = scmp.lt.s32.totalorder %s311, 1
      %s315 = scalar_select %p314, %s311, 1
      %s316 = smul.addr %s313, 2
      %s317 = sadd.s32 %s315, %s316
      %s318 = smul.addr %s317, 8
      %s319 = scalar_lea.vmem %s2, %s318
      %s320 = smul.u32 2, %s22
      %p321 = scmp.eq.s32.totalorder %s21, 0
      %p322 = scmp.eq.s32.totalorder %s22, 0
      %p323 = pnand %p321, %p322
      %p324 = pneg %p323
      %p325 = scmp.eq.s32.totalorder %s21, 1
      %p326 = pnand %p325, %p322
      %p327 = pneg %p326
      // Predicated region
      $region45: #{edge_conv.5} parent=43 // pred_check
        _
      $region46: #{edge_conv.5} parent=43 // pred_check_branch
        %329 = sbr.rel (%p323) target = $region48
      $region47: #{edge_conv.5} parent=43 // pred_region
        %vm330 = vcmask 58368
        %331 = vst.msk [vmem:[%s6] sm:$0x3] %vm330, 0.0
      $region48: #{edge_conv.5} parent=43 // pred_fallthru
        _
      %v332 = vld [vmem:[%s304] sm:$0xff]
      %v333 = vld [vmem:[%s304 + $0x8] sm:$0xff]
      %v334 = vld [vmem:[%s310] sm:$0xff]
      %v335 = vld [vmem:[%s310 + $0x8] sm:$0xff]
      %v336 = vld [vmem:[%s319] sm:$0xff]
      %v337 = vld [vmem:[%s319 + $0x8] sm:$0xff]
      %v338 = vld [vmem:[%s3] sm:$0xf]
      %v339 = vld [vmem:[%s4] sm:$0xf]
      %v340 = vld [vmem:[%s5] sm:$0x1]
      %v342 = vlaneseq
      %v343 = vshrl.u32 %v342, 7
      %v344 = vsub.s32 0, %v343
      %v345 = vrot.slane %v340, %v344
      %vm347 = vcmask 31744
      %v349 = vsel %vm347, %v332, 0
      %v352 = vsel %vm347, %v333, 0
      %vm354 = vcmask 1043456
      %v356 = vsel %vm354, %v338, 0
      %358 = vmatprep.subr.mxu0 0.0
      %359 = vmatpush1.msra.mxu0 %v356
      %360 = vmatprep.subr.mxu0 0.0
      %361 = vmatpush1.msra.mxu0 0.0
      %362 = vmatprep.subr.mxu0 0.0
      %363 = vmatpush1.msra.mxu0 0.0
      %364 = vmatprep.subr.mxu0 0.0
      %365 = vmatpush1.msra.mxu0 0.0
      %366 = vmatprep.subr.mxu0 0.0
      %367 = vmatpush1.msra.mxu0 0.0
      %368 = vmatprep.subr.mxu0 0.0
      %369 = vmatpush1.msra.mxu0 0.0
      %370 = vmatprep.subr.mxu0 0.0
      %371 = vmatpush1.msra.mxu0 0.0
      %372 = vmatprep.subr.mxu0 0.0
      %373 = vmatpush1.msra.mxu0 0.0
      %374 = vmatprep.subr.mxu0 0.0
      %375 = vmatpush1.msra.mxu0 0.0
      %376 = vmatprep.subr.mxu0 0.0
      %377 = vmatpush1.msra.mxu0 0.0
      %378 = vmatprep.subr.mxu0 0.0
      %379 = vmatpush1.msra.mxu0 0.0
      %380 = vmatprep.subr.mxu0 0.0
      %381 = vmatpush1.msra.mxu0 0.0
      %382 = vmatprep.subr.mxu0 0.0
      %383 = vmatpush1.msra.mxu0 0.0
      %384 = vmatprep.subr.mxu0 0.0
      %385 = vmatpush1.msra.mxu0 0.0
      %386 = vmatprep.subr.mxu0 0.0
      %387 = vmatpush1.msra.mxu0 0.0
      %388 = vmatprep.subr.mxu0 0.0
      %389 = vmatpush1.msra.mxu0 0.0
      %390 = vmatprep.subr.mxu0 0.0
      %391 = vmatpush1.msra.mxu0 0.0
      %392 = vmatprep.subr.mxu0 0.0
      %393 = vmatpush1.msra.mxu0 0.0
      %394 = vmatprep.subr.mxu0 0.0
      %395 = vmatpush1.msra.mxu0 0.0
      %396 = vmatprep.subr.mxu0 0.0
      %397 = vmatpush1.msra.mxu0 0.0
      %398 = vmatprep.subr.mxu0 0.0
      %399 = vmatpush1.msra.mxu0 0.0
      %400 = vmatprep.subr.mxu0 0.0
      %401 = vmatpush1.msra.mxu0 0.0
      %402 = vmatprep.subr.mxu0 0.0
      %403 = vmatpush1.msra.mxu0 0.0
      %404 = vmatprep.subr.mxu0 0.0
      %405 = vmatpush1.msra.mxu0 0.0
      %406 = vmatprep.subr.mxu0 0.0
      %407 = vmatpush1.msra.mxu0 0.0
      %408 = vmatprep.subr.mxu0 0.0
      %409 = vmatpush1.msra.mxu0 0.0
      %410 = vmatprep.subr.mxu0 0.0
      %411 = vmatpush1.msra.mxu0 0.0
      %412 = vmatprep.subr.mxu0 0.0
      %413 = vmatpush1.msra.mxu0 0.0
      %414 = vmatprep.subr.mxu0 0.0
      %415 = vmatpush1.msra.mxu0 0.0
      %416 = vmatprep.subr.mxu0 0.0
      %417 = vmatpush1.msra.mxu0 0.0
      %418 = vmatprep.subr.mxu0 0.0
      %419 = vmatpush1.msra.mxu0 0.0
      %420 = vmatprep.subr.mxu0 0.0
      %421 = vmatpush1.msra.mxu0 0.0
      %422 = vmatprep.mubr.f32.mxu0 0.0
      %423 = vmatmul.mubr.f32.gmra.mrb[0].mxu0 %v349
      %v424 = vpop.f32.mrb[0].mxu0
      %v425 = vadd.f32 %v345, %v424
      %v426 = vpop.f32.mrb[0].mxu0
      %427 = vmatprep.mubr.f32.mxu0 0.0
      %428 = vmatmul.mubr.f32.gmra.mrb[0].mxu0 %v352
      %v429 = vpop.f32.mrb[0].mxu0
      %v430 = vadd.f32 %v345, %v429
      %v431 = vpop.f32.mrb[0].mxu0
      %432 = vdwg.mxu0
      %v433 = vlaneseq
      %v434 = vand.u32 %v433, 127
      %435 = vset.pattern.permute.xlu0 0
      %436 = vperm.xlu0 %435, %v336
      %v437 = vpop.permute.xlu0 %436
      %438 = vset.pattern.permute.xlu0 0
      %439 = vperm.xlu0 %438, %v337
      %v440 = vpop.permute.xlu0 %439
      %vm441 = vcmp.eq.s32.totalorder %v437, %v434
      %vm442 = vcmp.eq.s32.totalorder %v440, %v434
      %v443 = vsel %vm441, 1, 0
      %v444 = vsel %vm442, 1, 0
      %v445 = vcvt.s32.f32 %v443
      %v446 = vcvt.s32.f32 %v444
      %vm447 = vcmask 130048
      %v449 = vsel %vm447, %v445, 0
      %v452 = vsel %vm447, %v446, 0
      %454 = vmatprep.subr.mxu0 0.0
      %455 = vmatpush1.msra.mxu0 %v334
      %456 = vmatprep.subr.mxu0 0.0
      %457 = vmatpush1.msra.mxu0 %v335
      %458 = vmatprep.subr.mxu0 0.0
      %459 = vmatpush1.msra.mxu0 0.0
      %460 = vmatprep.subr.mxu0 0.0
      %461 = vmatpush1.msra.mxu0 0.0
      %462 = vmatprep.subr.mxu0 0.0
      %463 = vmatpush1.msra.mxu0 0.0
      %464 = vmatprep.subr.mxu0 0.0
      %465 = vmatpush1.msra.mxu0 0.0
      %466 = vmatprep.subr.mxu0 0.0
      %467 = vmatpush1.msra.mxu0 0.0
      %468 = vmatprep.subr.mxu0 0.0
      %469 = vmatpush1.msra.mxu0 0.0
      %470 = vmatprep.subr.mxu0 0.0
      %471 = vmatpush1.msra.mxu0 0.0
      %472 = vmatprep.subr.mxu0 0.0
      %473 = vmatpush1.msra.mxu0 0.0
      %474 = vmatprep.subr.mxu0 0.0
      %475 = vmatpush1.msra.mxu0 0.0
      %476 = vmatprep.subr.mxu0 0.0
      %477 = vmatpush1.msra.mxu0 0.0
      %478 = vmatprep.subr.mxu0 0.0
      %479 = vmatpush1.msra.mxu0 0.0
      %480 = vmatprep.subr.mxu0 0.0
      %481 = vmatpush1.msra.mxu0 0.0
      %482 = vmatprep.subr.mxu0 0.0
      %483 = vmatpush1.msra.mxu0 0.0
      %484 = vmatprep.subr.mxu0 0.0
      %485 = vmatpush1.msra.mxu0 0.0
      %486 = vmatprep.subr.mxu0 0.0
      %487 = vmatpush1.msra.mxu0 0.0
      %488 = vmatprep.subr.mxu0 0.0
      %489 = vmatpush1.msra.mxu0 0.0
      %490 = vmatprep.subr.mxu0 0.0
      %491 = vmatpush1.msra.mxu0 0.0
      %492 = vmatprep.subr.mxu0 0.0
      %493 = vmatpush1.msra.mxu0 0.0
      %494 = vmatprep.subr.mxu0 0.0
      %495 = vmatpush1.msra.mxu0 0.0
      %496 = vmatprep.subr.mxu0 0.0
      %497 = vmatpush1.msra.mxu0 0.0
      %498 = vmatprep.subr.mxu0 0.0
      %499 = vmatpush1.msra.mxu0 0.0
      %500 = vmatprep.subr.mxu0 0.0
      %501 = vmatpush1.msra.mxu0 0.0
      %502 = vmatprep.subr.mxu0 0.0
      %503 = vmatpush1.msra.mxu0 0.0
      %504 = vmatprep.subr.mxu0 0.0
      %505 = vmatpush1.msra.mxu0 0.0
      %506 = vmatprep.subr.mxu0 0.0
      %507 = vmatpush1.msra.mxu0 0.0
      %508 = vmatprep.subr.mxu0 0.0
      %509 = vmatpush1.msra.mxu0 0.0
      %510 = vmatprep.subr.mxu0 0.0
      %511 = vmatpush1.msra.mxu0 0.0
      %512 = vmatprep.subr.mxu0 0.0
      %513 = vmatpush1.msra.mxu0 0.0
      %514 = vmatprep.subr.mxu0 0.0
      %515 = vmatpush1.msra.mxu0 0.0
      %516 = vmatprep.subr.mxu0 0.0
      %517 = vmatpush1.msra.mxu0 0.0
      %518 = vmatprep.mubr.f32.mxu0 0.0
      %519 = vmatmul.mubr.f32.gmra.mrb[0].mxu0 %v449
      %v520 = vpop.f32.mrb[0].mxu0
      %v521 = vadd.f32 0.0, %v520
      %v522 = vpop.f32.mrb[0].mxu0
      %523 = vmatprep.mubr.f32.mxu0 0.0
      %524 = vmatmul.mubr.f32.gmra.mrb[0].mxu0 %v452
      %v525 = vpop.f32.mrb[0].mxu0
      %v526 = vadd.f32 0.0, %v525
      %v527 = vpop.f32.mrb[0].mxu0
      %528 = vdwg.mxu0
      %v530 = vsel %vm347, %v521, 0
      %v533 = vsel %vm347, %v526, 0
      %v536 = vsel %vm354, %v339, 0
      %538 = vmatprep.subr.mxu0 0.0
      %539 = vmatpush1.msra.mxu0 %v536
      %540 = vmatprep.subr.mxu0 0.0
      %541 = vmatpush1.msra.mxu0 0.0
      %542 = vmatprep.subr.mxu0 0.0
      %543 = vmatpush1.msra.mxu0 0.0
      %544 = vmatprep.subr.mxu0 0.0
      %545 = vmatpush1.msra.mxu0 0.0
      %546 = vmatprep.subr.mxu0 0.0
      %547 = vmatpush1.msra.mxu0 0.0
      %548 = vmatprep.subr.mxu0 0.0
      %549 = vmatpush1.msra.mxu0 0.0
      %550 = vmatprep.subr.mxu0 0.0
      %551 = vmatpush1.msra.mxu0 0.0
      %552 = vmatprep.subr.mxu0 0.0
      %553 = vmatpush1.msra.mxu0 0.0
      %554 = vmatprep.subr.mxu0 0.0
      %555 = vmatpush1.msra.mxu0 0.0
      %556 = vmatprep.subr.mxu0 0.0
      %557 = vmatpush1.msra.mxu0 0.0
      %558 = vmatprep.subr.mxu0 0.0
      %559 = vmatpush1.msra.mxu0 0.0
      %560 = vmatprep.subr.mxu0 0.0
      %561 = vmatpush1.msra.mxu0 0.0
      %562 = vmatprep.subr.mxu0 0.0
      %563 = vmatpush1.msra.mxu0 0.0
      %564 = vmatprep.subr.mxu0 0.0
      %565 = vmatpush1.msra.mxu0 0.0
      %566 = vmatprep.subr.mxu0 0.0
      %567 = vmatpush1.msra.mxu0 0.0
      %568 = vmatprep.subr.mxu0 0.0
      %569 = vmatpush1.msra.mxu0 0.0
      %570 = vmatprep.subr.mxu0 0.0
      %571 = vmatpush1.msra.mxu0 0.0
      %572 = vmatprep.subr.mxu0 0.0
      %573 = vmatpush1.msra.mxu0 0.0
      %574 = vmatprep.subr.mxu0 0.0
      %575 = vmatpush1.msra.mxu0 0.0
      %576 = vmatprep.subr.mxu0 0.0
      %577 = vmatpush1.msra.mxu0 0.0
      %578 = vmatprep.subr.mxu0 0.0
      %579 = vmatpush1.msra.mxu0 0.0
      %580 = vmatprep.subr.mxu0 0.0
      %581 = vmatpush1.msra.mxu0 0.0
      %582 = vmatprep.subr.mxu0 0.0
      %583 = vmatpush1.msra.mxu0 0.0
      %584 = vmatprep.subr.mxu0 0.0
      %585 = vmatpush1.msra.mxu0 0.0
      %586 = vmatprep.subr.mxu0 0.0
      %587 = vmatpush1.msra.mxu0 0.0
      %588 = vmatprep.subr.mxu0 0.0
      %589 = vmatpush1.msra.mxu0 0.0
      %590 = vmatprep.subr.mxu0 0.0
      %591 = vmatpush1.msra.mxu0 0.0
      %592 = vmatprep.subr.mxu0 0.0
      %593 = vmatpush1.msra.mxu0 0.0
      %594 = vmatprep.subr.mxu0 0.0
      %595 = vmatpush1.msra.mxu0 0.0
      %596 = vmatprep.subr.mxu0 0.0
      %597 = vmatpush1.msra.mxu0 0.0
      %598 = vmatprep.subr.mxu0 0.0
      %599 = vmatpush1.msra.mxu0 0.0
      %600 = vmatprep.subr.mxu0 0.0
      %601 = vmatpush1.msra.mxu0 0.0
      %602 = vmatprep.mubr.f32.mxu0 0.0
      %603 = vmatmul.mubr.f32.gmra.mrb[0].mxu0 %v530
      %v604 = vpop.f32.mrb[0].mxu0
      %v605 = vadd.f32 0.0, %v604
      %v606 = vpop.f32.mrb[0].mxu0
      %607 = vmatprep.mubr.f32.mxu0 0.0
      %608 = vmatmul.mubr.f32.gmra.mrb[0].mxu0 %v533
      %v609 = vpop.f32.mrb[0].mxu0
      %v610 = vadd.f32 0.0, %v609
      %v611 = vpop.f32.mrb[0].mxu0
      %612 = vdwg.mxu0
      %v613 = vadd.f32 %v425, %v605
      %v614 = vadd.f32 %v430, %v610
      %vm615 = vcmask 64512
      %v616 = vsel %vm615, %v613, 0.0
      %v617 = vsel %vm615, %v614, 0.0
      %v618 = vadd.f32 %v616, %v617
      %v619 = vrot.slane %v618, 4
      %v620 = vadd.f32 %v618, %v619
      %v621 = vrot.slane %v620, 2
      %v622 = vadd.f32 %v620, %v621
      %v623 = vrot.slane %v622, 1
      %v624 = vadd.f32 %v622, %v623
      %v625 = vadd.f32 %v624, 0.0
      %v626 = vmul.f32 %v613, %v613
      %v627 = vmul.f32 %v614, %v614
      %v628 = vsel %vm615, %v626, 0.0
      %v629 = vsel %vm615, %v627, 0.0
      %v630 = vadd.f32 %v628, %v629
      %v631 = vrot.slane %v630, 4
      %v632 = vadd.f32 %v630, %v631
      %v633 = vrot.slane %v632, 2
      %v634 = vadd.f32 %v632, %v633
      %v635 = vrot.slane %v634, 1
      %v636 = vadd.f32 %v634, %v635
      %v637 = vadd.f32 %v636, 0.0
      %638 = vset.pattern.permute.xlu0 1
      %639 = vperm.xlu0 %638, %v336
      %v640 = vpop.permute.xlu0 %639
      %641 = vset.pattern.permute.xlu0 1
      %642 = vperm.xlu0 %641, %v337
      %v643 = vpop.permute.xlu0 %642
      %vm644 = vcmp.eq.s32.totalorder %v640, %v434
      %vm645 = vcmp.eq.s32.totalorder %v643, %v434
      %v646 = vsel %vm644, 1, 0
      %v647 = vsel %vm645, 1, 0
      %v648 = vcvt.s32.f32 %v646
      %v649 = vcvt.s32.f32 %v647
      %v651 = vsel %vm447, %v648, 0
      %v654 = vsel %vm447, %v649, 0
      %656 = vmatprep.subr.mxu0 0.0
      %657 = vmatpush1.msra.mxu0 %v334
      %658 = vmatprep.subr.mxu0 0.0
      %659 = vmatpush1.msra.mxu0 %v335
      %660 = vmatprep.subr.mxu0 0.0
      %661 = vmatpush1.msra.mxu0 0.0
      %662 = vmatprep.subr.mxu0 0.0
      %663 = vmatpush1.msra.mxu0 0.0
      %664 = vmatprep.subr.mxu0 0.0
      %665 = vmatpush1.msra.mxu0 0.0
      %666 = vmatprep.subr.mxu0 0.0
      %667 = vmatpush1.msra.mxu0 0.0
      %668 = vmatprep.subr.mxu0 0.0
      %669 = vmatpush1.msra.mxu0 0.0
      %670 = vmatprep.subr.mxu0 0.0
      %671 = vmatpush1.msra.mxu0 0.0
      %672 = vmatprep.subr.mxu0 0.0
      %673 = vmatpush1.msra.mxu0 0.0
      %674 = vmatprep.subr.mxu0 0.0
      %675 = vmatpush1.msra.mxu0 0.0
      %676 = vmatprep.subr.mxu0 0.0
      %677 = vmatpush1.msra.mxu0 0.0
      %678 = vmatprep.subr.mxu0 0.0
      %679 = vmatpush1.msra.mxu0 0.0
      %680 = vmatprep.subr.mxu0 0.0
      %681 = vmatpush1.msra.mxu0 0.0
      %682 = vmatprep.subr.mxu0 0.0
      %683 = vmatpush1.msra.mxu0 0.0
      %684 = vmatprep.subr.mxu0 0.0
      %685 = vmatpush1.msra.mxu0 0.0
      %686 = vmatprep.subr.mxu0 0.0
      %687 = vmatpush1.msra.mxu0 0.0
      %688 = vmatprep.subr.mxu0 0.0
      %689 = vmatpush1.msra.mxu0 0.0
      %690 = vmatprep.subr.mxu0 0.0
      %691 = vmatpush1.msra.mxu0 0.0
      %692 = vmatprep.subr.mxu0 0.0
      %693 = vmatpush1.msra.mxu0 0.0
      %694 = vmatprep.subr.mxu0 0.0
      %695 = vmatpush1.msra.mxu0 0.0
      %696 = vmatprep.subr.mxu0 0.0
      %697 = vmatpush1.msra.mxu0 0.0
      %698 = vmatprep.subr.mxu0 0.0
      %699 = vmatpush1.msra.mxu0 0.0
      %700 = vmatprep.subr.mxu0 0.0
      %701 = vmatpush1.msra.mxu0 0.0
      %702 = vmatprep.subr.mxu0 0.0
      %703 = vmatpush1.msra.mxu0 0.0
      %704 = vmatprep.subr.mxu0 0.0
      %705 = vmatpush1.msra.mxu0 0.0
      %706 = vmatprep.subr.mxu0 0.0
      %707 = vmatpush1.msra.mxu0 0.0
      %708 = vmatprep.subr.mxu0 0.0
      %709 = vmatpush1.msra.mxu0 0.0
      %710 = vmatprep.subr.mxu0 0.0
      %711 = vmatpush1.msra.mxu0 0.0
      %712 = vmatprep.subr.mxu0 0.0
      %713 = vmatpush1.msra.mxu0 0.0
      %714 = vmatprep.subr.mxu0 0.0
      %715 = vmatpush1.msra.mxu0 0.0
      %716 = vmatprep.subr.mxu0 0.0
      %717 = vmatpush1.msra.mxu0 0.0
      %718 = vmatprep.subr.mxu0 0.0
      %719 = vmatpush1.msra.mxu0 0.0
      %720 = vmatprep.mubr.f32.mxu0 0.0
      %721 = vmatmul.mubr.f32.gmra.mrb[0].mxu0 %v651
      %v722 = vpop.f32.mrb[0].mxu0
      %v723 = vadd.f32 0.0, %v722
      %v724 = vpop.f32.mrb[0].mxu0
      %725 = vmatprep.mubr.f32.mxu0 0.0
      %726 = vmatmul.mubr.f32.gmra.mrb[0].mxu0 %v654
      %v727 = vpop.f32.mrb[0].mxu0
      %v728 = vadd.f32 0.0, %v727
      %v729 = vpop.f32.mrb[0].mxu0
      %730 = vdwg.mxu0
      %v732 = vsel %vm347, %v723, 0
      %v735 = vsel %vm347, %v728, 0
      %737 = vmatprep.subr.mxu0 0.0
      %738 = vmatpush1.msra.mxu0 %v536
      %739 = vmatprep.subr.mxu0 0.0
      %740 = vmatpush1.msra.mxu0 0.0
      %741 = vmatprep.subr.mxu0 0.0
      %742 = vmatpush1.msra.mxu0 0.0
      %743 = vmatprep.subr.mxu0 0.0
      %744 = vmatpush1.msra.mxu0 0.0
      %745 = vmatprep.subr.mxu0 0.0
      %746 = vmatpush1.msra.mxu0 0.0
      %747 = vmatprep.subr.mxu0 0.0
      %748 = vmatpush1.msra.mxu0 0.0
      %749 = vmatprep.subr.mxu0 0.0
      %750 = vmatpush1.msra.mxu0 0.0
      %751 = vmatprep.subr.mxu0 0.0
      %752 = vmatpush1.msra.mxu0 0.0
      %753 = vmatprep.subr.mxu0 0.0
      %754 = vmatpush1.msra.mxu0 0.0
      %755 = vmatprep.subr.mxu0 0.0
      %756 = vmatpush1.msra.mxu0 0.0
      %757 = vmatprep.subr.mxu0 0.0
      %758 = vmatpush1.msra.mxu0 0.0
      %759 = vmatprep.subr.mxu0 0.0
      %760 = vmatpush1.msra.mxu0 0.0
      %761 = vmatprep.subr.mxu0 0.0
      %762 = vmatpush1.msra.mxu0 0.0
      %763 = vmatprep.subr.mxu0 0.0
      %764 = vmatpush1.msra.mxu0 0.0
      %765 = vmatprep.subr.mxu0 0.0
      %766 = vmatpush1.msra.mxu0 0.0
      %767 = vmatprep.subr.mxu0 0.0
      %768 = vmatpush1.msra.mxu0 0.0
      %769 = vmatprep.subr.mxu0 0.0
      %770 = vmatpush1.msra.mxu0 0.0
      %771 = vmatprep.subr.mxu0 0.0
      %772 = vmatpush1.msra.mxu0 0.0
      %773 = vmatprep.subr.mxu0 0.0
      %774 = vmatpush1.msra.mxu0 0.0
      %775 = vmatprep.subr.mxu0 0.0
      %776 = vmatpush1.msra.mxu0 0.0
      %777 = vmatprep.subr.mxu0 0.0
      %778 = vmatpush1.msra.mxu0 0.0
      %779 = vmatprep.subr.mxu0 0.0
      %780 = vmatpush1.msra.mxu0 0.0
      %781 = vmatprep.subr.mxu0 0.0
      %782 = vmatpush1.msra.mxu0 0.0
      %783 = vmatprep.subr.mxu0 0.0
      %784 = vmatpush1.msra.mxu0 0.0
      %785 = vmatprep.subr.mxu0 0.0
      %786 = vmatpush1.msra.mxu0 0.0
      %787 = vmatprep.subr.mxu0 0.0
      %788 = vmatpush1.msra.mxu0 0.0
      %789 = vmatprep.subr.mxu0 0.0
      %790 = vmatpush1.msra.mxu0 0.0
      %791 = vmatprep.subr.mxu0 0.0
      %792 = vmatpush1.msra.mxu0 0.0
      %793 = vmatprep.subr.mxu0 0.0
      %794 = vmatpush1.msra.mxu0 0.0
      %795 = vmatprep.subr.mxu0 0.0
      %796 = vmatpush1.msra.mxu0 0.0
      %797 = vmatprep.subr.mxu0 0.0
      %798 = vmatpush1.msra.mxu0 0.0
      %799 = vmatprep.subr.mxu0 0.0
      %800 = vmatpush1.msra.mxu0 0.0
      %801 = vmatprep.mubr.f32.mxu0 0.0
      %802 = vmatmul.mubr.f32.gmra.mrb[0].mxu0 %v732
      %v803 = vpop.f32.mrb[0].mxu0
      %v804 = vadd.f32 0.0, %v803
      %v805 = vpop.f32.mrb[0].mxu0
      %806 = vmatprep.mubr.f32.mxu0 0.0
      %807 = vmatmul.mubr.f32.gmra.mrb[0].mxu0 %v735
      %v808 = vpop.f32.mrb[0].mxu0
      %v809 = vadd.f32 0.0, %v808
      %v810 = vpop.f32.mrb[0].mxu0
      %811 = vdwg.mxu0
      %v812 = vadd.f32 %v425, %v804
      %v813 = vadd.f32 %v430, %v809
      %v814 = vsel %vm615, %v812, 0.0
      %v815 = vsel %vm615, %v813, 0.0
      %v816 = vadd.f32 %v814, %v815
      %v817 = vrot.slane %v816, 4
      %v818 = vadd.f32 %v816, %v817
      %v819 = vrot.slane %v818, 2
      %v820 = vadd.f32 %v818, %v819
      %v821 = vrot.slane %v820, 1
      %v822 = vadd.f32 %v820, %v821
      %v823 = vadd.f32 %v625, %v822
      %v824 = vmul.f32 %v812, %v812
      %v825 = vmul.f32 %v813, %v813
      %v826 = vsel %vm615, %v824, 0.0
      %v827 = vsel %vm615, %v825, 0.0
      %v828 = vadd.f32 %v826, %v827
      %v829 = vrot.slane %v828, 4
      %v830 = vadd.f32 %v828, %v829
      %v831 = vrot.slane %v830, 2
      %v832 = vadd.f32 %v830, %v831
      %v833 = vrot.slane %v832, 1
      %v834 = vadd.f32 %v832, %v833
      %v835 = vadd.f32 %v637, %v834
      %836 = vset.pattern.permute.xlu0 2
      %837 = vperm.xlu0 %836, %v336
      %v838 = vpop.permute.xlu0 %837
      %839 = vset.pattern.permute.xlu0 2
      %840 = vperm.xlu0 %839, %v337
      %v841 = vpop.permute.xlu0 %840
      %vm842 = vcmp.eq.s32.totalorder %v838, %v434
      %vm843 = vcmp.eq.s32.totalorder %v841, %v434
      %v844 = vsel %vm842, 1, 0
      %v845 = vsel %vm843, 1, 0
      %v846 = vcvt.s32.f32 %v844
      %v847 = vcvt.s32.f32 %v845
      %v849 = vsel %vm447, %v846, 0
      %v852 = vsel %vm447, %v847, 0
      %854 = vmatprep.subr.mxu0 0.0
      %855 = vmatpush1.msra.mxu0 %v334
      %856 = vmatprep.subr.mxu0 0.0
      %857 = vmatpush1.msra.mxu0 %v335
      %858 = vmatprep.subr.mxu0 0.0
      %859 = vmatpush1.msra.mxu0 0.0
      %860 = vmatprep.subr.mxu0 0.0
      %861 = vmatpush1.msra.mxu0 0.0
      %862 = vmatprep.subr.mxu0 0.0
      %863 = vmatpush1.msra.mxu0 0.0
      %864 = vmatprep.subr.mxu0 0.0
      %865 = vmatpush1.msra.mxu0 0.0
      %866 = vmatprep.subr.mxu0 0.0
      %867 = vmatpush1.msra.mxu0 0.0
      %868 = vmatprep.subr.mxu0 0.0
      %869 = vmatpush1.msra.mxu0 0.0
      %870 = vmatprep.subr.mxu0 0.0
      %871 = vmatpush1.msra.mxu0 0.0
      %872 = vmatprep.subr.mxu0 0.0
      %873 = vmatpush1.msra.mxu0 0.0
      %874 = vmatprep.subr.mxu0 0.0
      %875 = vmatpush1.msra.mxu0 0.0
      %876 = vmatprep.subr.mxu0 0.0
      %877 = vmatpush1.msra.mxu0 0.0
      %878 = vmatprep.subr.mxu0 0.0
      %879 = vmatpush1.msra.mxu0 0.0
      %880 = vmatprep.subr.mxu0 0.0
      %881 = vmatpush1.msra.mxu0 0.0
      %882 = vmatprep.subr.mxu0 0.0
      %883 = vmatpush1.msra.mxu0 0.0
      %884 = vmatprep.subr.mxu0 0.0
      %885 = vmatpush1.msra.mxu0 0.0
      %886 = vmatprep.subr.mxu0 0.0
      %887 = vmatpush1.msra.mxu0 0.0
      %888 = vmatprep.subr.mxu0 0.0
      %889 = vmatpush1.msra.mxu0 0.0
      %890 = vmatprep.subr.mxu0 0.0
      %891 = vmatpush1.msra.mxu0 0.0
      %892 = vmatprep.subr.mxu0 0.0
      %893 = vmatpush1.msra.mxu0 0.0
      %894 = vmatprep.subr.mxu0 0.0
      %895 = vmatpush1.msra.mxu0 0.0
      %896 = vmatprep.subr.mxu0 0.0
      %897 = vmatpush1.msra.mxu0 0.0
      %898 = vmatprep.subr.mxu0 0.0
      %899 = vmatpush1.msra.mxu0 0.0
      %900 = vmatprep.subr.mxu0 0.0
      %901 = vmatpush1.msra.mxu0 0.0
      %902 = vmatprep.subr.mxu0 0.0
      %903 = vmatpush1.msra.mxu0 0.0
      %904 = vmatprep.subr.mxu0 0.0
      %905 = vmatpush1.msra.mxu0 0.0
      %906 = vmatprep.subr.mxu0 0.0
      %907 = vmatpush1.msra.mxu0 0.0
      %908 = vmatprep.subr.mxu0 0.0
      %909 = vmatpush1.msra.mxu0 0.0
      %910 = vmatprep.subr.mxu0 0.0
      %911 = vmatpush1.msra.mxu0 0.0
      %912 = vmatprep.subr.mxu0 0.0
      %913 = vmatpush1.msra.mxu0 0.0
      %914 = vmatprep.subr.mxu0 0.0
      %915 = vmatpush1.msra.mxu0 0.0
      %916 = vmatprep.subr.mxu0 0.0
      %917 = vmatpush1.msra.mxu0 0.0
      %918 = vmatprep.mubr.f32.mxu0 0.0
      %919 = vmatmul.mubr.f32.gmra.mrb[0].mxu0 %v849
      %v920 = vpop.f32.mrb[0].mxu0
      %v921 = vadd.f32 0.0, %v920
      %v922 = vpop.f32.mrb[0].mxu0
      %923 = vmatprep.mubr.f32.mxu0 0.0
      %924 = vmatmul.mubr.f32.gmra.mrb[0].mxu0 %v852
      %v925 = vpop.f32.mrb[0].mxu0
      %v926 = vadd.f32 0.0, %v925
      %v927 = vpop.f32.mrb[0].mxu0
      %928 = vdwg.mxu0
      %v930 = vsel %vm347, %v921, 0
      %v933 = vsel %vm347, %v926, 0
      %935 = vmatprep.subr.mxu0 0.0
      %936 = vmatpush1.msra.mxu0 %v536
      %937 = vmatprep.subr.mxu0 0.0
      %938 = vmatpush1.msra.mxu0 0.0
      %939 = vmatprep.subr.mxu0 0.0
      %940 = vmatpush1.msra.mxu0 0.0
      %941 = vmatprep.subr.mxu0 0.0
      %942 = vmatpush1.msra.mxu0 0.0
      %943 = vmatprep.subr.mxu0 0.0
      %944 = vmatpush1.msra.mxu0 0.0
      %945 = vmatprep.subr.mxu0 0.0
      %946 = vmatpush1.msra.mxu0 0.0
      %947 = vmatprep.subr.mxu0 0.0
      %948 = vmatpush1.msra.mxu0 0.0
      %949 = vmatprep.subr.mxu0 0.0
      %950 = vmatpush1.msra.mxu0 0.0
      %951 = vmatprep.subr.mxu0 0.0
      %952 = vmatpush1.msra.mxu0 0.0
      %953 = vmatprep.subr.mxu0 0.0
      %954 = vmatpush1.msra.mxu0 0.0
      %955 = vmatprep.subr.mxu0 0.0
      %956 = vmatpush1.msra.mxu0 0.0
      %957 = vmatprep.subr.mxu0 0.0
      %958 = vmatpush1.msra.mxu0 0.0
      %959 = vmatprep.subr.mxu0 0.0
      %960 = vmatpush1.msra.mxu0 0.0
      %961 = vmatprep.subr.mxu0 0.0
      %962 = vmatpush1.msra.mxu0 0.0
      %963 = vmatprep.subr.mxu0 0.0
      %964 = vmatpush1.msra.mxu0 0.0
      %965 = vmatprep.subr.mxu0 0.0
      %966 = vmatpush1.msra.mxu0 0.0
      %967 = vmatprep.subr.mxu0 0.0
      %968 = vmatpush1.msra.mxu0 0.0
      %969 = vmatprep.subr.mxu0 0.0
      %970 = vmatpush1.msra.mxu0 0.0
      %971 = vmatprep.subr.mxu0 0.0
      %972 = vmatpush1.msra.mxu0 0.0
      %973 = vmatprep.subr.mxu0 0.0
      %974 = vmatpush1.msra.mxu0 0.0
      %975 = vmatprep.subr.mxu0 0.0
      %976 = vmatpush1.msra.mxu0 0.0
      %977 = vmatprep.subr.mxu0 0.0
      %978 = vmatpush1.msra.mxu0 0.0
      %979 = vmatprep.subr.mxu0 0.0
      %980 = vmatpush1.msra.mxu0 0.0
      %981 = vmatprep.subr.mxu0 0.0
      %982 = vmatpush1.msra.mxu0 0.0
      %983 = vmatprep.subr.mxu0 0.0
      %984 = vmatpush1.msra.mxu0 0.0
      %985 = vmatprep.subr.mxu0 0.0
      %986 = vmatpush1.msra.mxu0 0.0
      %987 = vmatprep.subr.mxu0 0.0
      %988 = vmatpush1.msra.mxu0 0.0
      %989 = vmatprep.subr.mxu0 0.0
      %990 = vmatpush1.msra.mxu0 0.0
      %991 = vmatprep.subr.mxu0 0.0
      %992 = vmatpush1.msra.mxu0 0.0
      %993 = vmatprep.subr.mxu0 0.0
      %994 = vmatpush1.msra.mxu0 0.0
      %995 = vmatprep.subr.mxu0 0.0
      %996 = vmatpush1.msra.mxu0 0.0
      %997 = vmatprep.subr.mxu0 0.0
      %998 = vmatpush1.msra.mxu0 0.0
      %999 = vmatprep.mubr.f32.mxu0 0.0
      %1000 = vmatmul.mubr.f32.gmra.mrb[0].mxu0 %v930
      %v1001 = vpop.f32.mrb[0].mxu0
      %v1002 = vadd.f32 0.0, %v1001
      %v1003 = vpop.f32.mrb[0].mxu0
      %1004 = vmatprep.mubr.f32.mxu0 0.0
      %1005 = vmatmul.mubr.f32.gmra.mrb[0].mxu0 %v933
      %v1006 = vpop.f32.mrb[0].mxu0
      %v1007 = vadd.f32 0.0, %v1006
      %v1008 = vpop.f32.mrb[0].mxu0
      %1009 = vdwg.mxu0
      %v1010 = vadd.f32 %v425, %v1002
      %v1011 = vadd.f32 %v430, %v1007
      %v1012 = vsel %vm615, %v1010, 0.0
      %v1013 = vsel %vm615, %v1011, 0.0
      %v1014 = vadd.f32 %v1012, %v1013
      %v1015 = vrot.slane %v1014, 4
      %v1016 = vadd.f32 %v1014, %v1015
      %v1017 = vrot.slane %v1016, 2
      %v1018 = vadd.f32 %v1016, %v1017
      %v1019 = vrot.slane %v1018, 1
      %v1020 = vadd.f32 %v1018, %v1019
      %v1021 = vadd.f32 %v823, %v1020
      %v1022 = vmul.f32 %v1010, %v1010
      %v1023 = vmul.f32 %v1011, %v1011
      %v1024 = vsel %vm615, %v1022, 0.0
      %v1025 = vsel %vm615, %v1023, 0.0
      %v1026 = vadd.f32 %v1024, %v1025
      %v1027 = vrot.slane %v1026, 4
      %v1028 = vadd.f32 %v1026, %v1027
      %v1029 = vrot.slane %v1028, 2
      %v1030 = vadd.f32 %v1028, %v1029
      %v1031 = vrot.slane %v1030, 1
      %v1032 = vadd.f32 %v1030, %v1031
      %v1033 = vadd.f32 %v835, %v1032
      %1034 = vset.pattern.permute.xlu0 3
      %1035 = vperm.xlu0 %1034, %v336
      %v1036 = vpop.permute.xlu0 %1035
      %1037 = vset.pattern.permute.xlu0 3
      %1038 = vperm.xlu0 %1037, %v337
      %v1039 = vpop.permute.xlu0 %1038
      %vm1040 = vcmp.eq.s32.totalorder %v1036, %v434
      %vm1041 = vcmp.eq.s32.totalorder %v1039, %v434
      %v1042 = vsel %vm1040, 1, 0
      %v1043 = vsel %vm1041, 1, 0
      %v1044 = vcvt.s32.f32 %v1042
      %v1045 = vcvt.s32.f32 %v1043
      %v1047 = vsel %vm447, %v1044, 0
      %v1050 = vsel %vm447, %v1045, 0
      %1052 = vmatprep.subr.mxu0 0.0
      %1053 = vmatpush1.msra.mxu0 %v334
      %1054 = vmatprep.subr.mxu0 0.0
      %1055 = vmatpush1.msra.mxu0 %v335
      %1056 = vmatprep.subr.mxu0 0.0
      %1057 = vmatpush1.msra.mxu0 0.0
      %1058 = vmatprep.subr.mxu0 0.0
      %1059 = vmatpush1.msra.mxu0 0.0
      %1060 = vmatprep.subr.mxu0 0.0
      %1061 = vmatpush1.msra.mxu0 0.0
      %1062 = vmatprep.subr.mxu0 0.0
      %1063 = vmatpush1.msra.mxu0 0.0
      %1064 = vmatprep.subr.mxu0 0.0
      %1065 = vmatpush1.msra.mxu0 0.0
      %1066 = vmatprep.subr.mxu0 0.0
      %1067 = vmatpush1.msra.mxu0 0.0
      %1068 = vmatprep.subr.mxu0 0.0
      %1069 = vmatpush1.msra.mxu0 0.0
      %1070 = vmatprep.subr.mxu0 0.0
      %1071 = vmatpush1.msra.mxu0 0.0
      %1072 = vmatprep.subr.mxu0 0.0
      %1073 = vmatpush1.msra.mxu0 0.0
      %1074 = vmatprep.subr.mxu0 0.0
      %1075 = vmatpush1.msra.mxu0 0.0
      %1076 = vmatprep.subr.mxu0 0.0
      %1077 = vmatpush1.msra.mxu0 0.0
      %1078 = vmatprep.subr.mxu0 0.0
      %1079 = vmatpush1.msra.mxu0 0.0
      %1080 = vmatprep.subr.mxu0 0.0
      %1081 = vmatpush1.msra.mxu0 0.0
      %1082 = vmatprep.subr.mxu0 0.0
      %1083 = vmatpush1.msra.mxu0 0.0
      %1084 = vmatprep.subr.mxu0 0.0
      %1085 = vmatpush1.msra.mxu0 0.0
      %1086 = vmatprep.subr.mxu0 0.0
      %1087 = vmatpush1.msra.mxu0 0.0
      %1088 = vmatprep.subr.mxu0 0.0
      %1089 = vmatpush1.msra.mxu0 0.0
      %1090 = vmatprep.subr.mxu0 0.0
      %1091 = vmatpush1.msra.mxu0 0.0
      %1092 = vmatprep.subr.mxu0 0.0
      %1093 = vmatpush1.msra.mxu0 0.0
      %1094 = vmatprep.subr.mxu0 0.0
      %1095 = vmatpush1.msra.mxu0 0.0
      %1096 = vmatprep.subr.mxu0 0.0
      %1097 = vmatpush1.msra.mxu0 0.0
      %1098 = vmatprep.subr.mxu0 0.0
      %1099 = vmatpush1.msra.mxu0 0.0
      %1100 = vmatprep.subr.mxu0 0.0
      %1101 = vmatpush1.msra.mxu0 0.0
      %1102 = vmatprep.subr.mxu0 0.0
      %1103 = vmatpush1.msra.mxu0 0.0
      %1104 = vmatprep.subr.mxu0 0.0
      %1105 = vmatpush1.msra.mxu0 0.0
      %1106 = vmatprep.subr.mxu0 0.0
      %1107 = vmatpush1.msra.mxu0 0.0
      %1108 = vmatprep.subr.mxu0 0.0
      %1109 = vmatpush1.msra.mxu0 0.0
      %1110 = vmatprep.subr.mxu0 0.0
      %1111 = vmatpush1.msra.mxu0 0.0
      %1112 = vmatprep.subr.mxu0 0.0
      %1113 = vmatpush1.msra.mxu0 0.0
      %1114 = vmatprep.subr.mxu0 0.0
      %1115 = vmatpush1.msra.mxu0 0.0
      %1116 = vmatprep.mubr.f32.mxu0 0.0
      %1117 = vmatmul.mubr.f32.gmra.mrb[0].mxu0 %v1047
      %v1118 = vpop.f32.mrb[0].mxu0
      %v1119 = vadd.f32 0.0, %v1118
      %v1120 = vpop.f32.mrb[0].mxu0
      %1121 = vmatprep.mubr.f32.mxu0 0.0
      %1122 = vmatmul.mubr.f32.gmra.mrb[0].mxu0 %v1050
      %v1123 = vpop.f32.mrb[0].mxu0
      %v1124 = vadd.f32 0.0, %v1123
      %v1125 = vpop.f32.mrb[0].mxu0
      %1126 = vdwg.mxu0
      %v1128 = vsel %vm347, %v1119, 0
      %v1131 = vsel %vm347, %v1124, 0
      %1133 = vmatprep.subr.mxu0 0.0
      %1134 = vmatpush1.msra.mxu0 %v536
      %1135 = vmatprep.subr.mxu0 0.0
      %1136 = vmatpush1.msra.mxu0 0.0
      %1137 = vmatprep.subr.mxu0 0.0
      %1138 = vmatpush1.msra.mxu0 0.0
      %1139 = vmatprep.subr.mxu0 0.0
      %1140 = vmatpush1.msra.mxu0 0.0
      %1141 = vmatprep.subr.mxu0 0.0
      %1142 = vmatpush1.msra.mxu0 0.0
      %1143 = vmatprep.subr.mxu0 0.0
      %1144 = vmatpush1.msra.mxu0 0.0
      %1145 = vmatprep.subr.mxu0 0.0
      %1146 = vmatpush1.msra.mxu0 0.0
      %1147 = vmatprep.subr.mxu0 0.0
      %1148 = vmatpush1.msra.mxu0 0.0
      %1149 = vmatprep.subr.mxu0 0.0
      %1150 = vmatpush1.msra.mxu0 0.0
      %1151 = vmatprep.subr.mxu0 0.0
      %1152 = vmatpush1.msra.mxu0 0.0
      %1153 = vmatprep.subr.mxu0 0.0
      %1154 = vmatpush1.msra.mxu0 0.0
      %1155 = vmatprep.subr.mxu0 0.0
      %1156 = vmatpush1.msra.mxu0 0.0
      %1157 = vmatprep.subr.mxu0 0.0
      %1158 = vmatpush1.msra.mxu0 0.0
      %1159 = vmatprep.subr.mxu0 0.0
      %1160 = vmatpush1.msra.mxu0 0.0
      %1161 = vmatprep.subr.mxu0 0.0
      %1162 = vmatpush1.msra.mxu0 0.0
      %1163 = vmatprep.subr.mxu0 0.0
      %1164 = vmatpush1.msra.mxu0 0.0
      %1165 = vmatprep.subr.mxu0 0.0
      %1166 = vmatpush1.msra.mxu0 0.0
      %1167 = vmatprep.subr.mxu0 0.0
      %1168 = vmatpush1.msra.mxu0 0.0
      %1169 = vmatprep.subr.mxu0 0.0
      %1170 = vmatpush1.msra.mxu0 0.0
      %1171 = vmatprep.subr.mxu0 0.0
      %1172 = vmatpush1.msra.mxu0 0.0
      %1173 = vmatprep.subr.mxu0 0.0
      %1174 = vmatpush1.msra.mxu0 0.0
      %1175 = vmatprep.subr.mxu0 0.0
      %1176 = vmatpush1.msra.mxu0 0.0
      %1177 = vmatprep.subr.mxu0 0.0
      %1178 = vmatpush1.msra.mxu0 0.0
      %1179 = vmatprep.subr.mxu0 0.0
      %1180 = vmatpush1.msra.mxu0 0.0
      %1181 = vmatprep.subr.mxu0 0.0
      %1182 = vmatpush1.msra.mxu0 0.0
      %1183 = vmatprep.subr.mxu0 0.0
      %1184 = vmatpush1.msra.mxu0 0.0
      %1185 = vmatprep.subr.mxu0 0.0
      %1186 = vmatpush1.msra.mxu0 0.0
      %1187 = vmatprep.subr.mxu0 0.0
      %1188 = vmatpush1.msra.mxu0 0.0
      %1189 = vmatprep.subr.mxu0 0.0
      %1190 = vmatpush1.msra.mxu0 0.0
      %1191 = vmatprep.subr.mxu0 0.0
      %1192 = vmatpush1.msra.mxu0 0.0
      %1193 = vmatprep.subr.mxu0 0.0
      %1194 = vmatpush1.msra.mxu0 0.0
      %1195 = vmatprep.subr.mxu0 0.0
      %1196 = vmatpush1.msra.mxu0 0.0
      %1197 = vmatprep.mubr.f32.mxu0 0.0
      %1198 = vmatmul.mubr.f32.gmra.mrb[0].mxu0 %v1128
      %v1199 = vpop.f32.mrb[0].mxu0
      %v1200 = vadd.f32 0.0, %v1199
      %v1201 = vpop.f32.mrb[0].mxu0
      %1202 = vmatprep.mubr.f32.mxu0 0.0
      %1203 = vmatmul.mubr.f32.gmra.mrb[0].mxu0 %v1131
      %v1204 = vpop.f32.mrb[0].mxu0
      %v1205 = vadd.f32 0.0, %v1204
      %v1206 = vpop.f32.mrb[0].mxu0
      %1207 = vdwg.mxu0
      %v1208 = vadd.f32 %v425, %v1200
      %v1209 = vadd.f32 %v430, %v1205
      %v1210 = vsel %vm615, %v1208, 0.0
      %v1211 = vsel %vm615, %v1209, 0.0
      %v1212 = vadd.f32 %v1210, %v1211
      %v1213 = vrot.slane %v1212, 4
      %v1214 = vadd.f32 %v1212, %v1213
      %v1215 = vrot.slane %v1214, 2
      %v1216 = vadd.f32 %v1214, %v1215
      %v1217 = vrot.slane %v1216, 1
      %v1218 = vadd.f32 %v1216, %v1217
      %v1219 = vadd.f32 %v1021, %v1218
      %v1220 = vmul.f32 %v1208, %v1208
      %v1221 = vmul.f32 %v1209, %v1209
      %v1222 = vsel %vm615, %v1220, 0.0
      %v1223 = vsel %vm615, %v1221, 0.0
      %v1224 = vadd.f32 %v1222, %v1223
      %v1225 = vrot.slane %v1224, 4
      %v1226 = vadd.f32 %v1224, %v1225
      %v1227 = vrot.slane %v1226, 2
      %v1228 = vadd.f32 %v1226, %v1227
      %v1229 = vrot.slane %v1228, 1
      %v1230 = vadd.f32 %v1228, %v1229
      %v1231 = vadd.f32 %v1033, %v1230
      %v1232 = vld [vmem:[%s6] sm:$0x3]
      %vm1233 = vcmask 1040384
      %v1234 = vsel %vm1233, %v1219, %v1231
      %v1235 = vadd.f32 %v1232, %v1234
      %vm1236 = vcmask 58368
      %1237 = vst.msk [vmem:[%s6] sm:$0x3] %vm1236, %v1235
      // Predicated region
      $region49: #{edge_conv.5} parent=43 // pred_check
        _
      $region50: #{edge_conv.5} parent=43 // pred_check_branch
        %1239 = sbr.rel (%p326) target = $region52
      $region51: #{edge_conv.5} parent=43 // pred_region
        %v1240 = vld [vmem:[%s6] sm:$0x3]
        %v1241 = vmul.f32 %v1240, 0.0078125
        %v1242 = vmul.f32 %v1241, %v1241
        %v1244 = vrot.slane %v1242, 7
        %v1246 = vsub.f32 %v1241, %v1244
        %v1247 = vmax.f32 %v1246, 0.0
        %v1248 = vsel %vm1233, %v1241, %v1247
        %1249 = vst.msk [vmem:[%s6] sm:$0x3] %vm1236, %v1248
      $region52: #{edge_conv.5} parent=43 // pred_fallthru
        _
      // Predicated region
      $region53: #{edge_conv.5} parent=43 // pred_check
        %p1250 = pneg %p187
      $region54: #{edge_conv.5} parent=43 // pred_check_branch
        %1252 = sbr.rel (%p1250) target = $region56
      $region55: #{edge_conv.5} parent=43 // pred_region
        _
      $region56: #{edge_conv.5} parent=43 // pred_fallthru
        _
      // Predicated region
      $region57: #{edge_conv.5} parent=43 // pred_check
        %p1253 = pneg %p187
      $region58: #{edge_conv.5} parent=43 // pred_check_branch
        %1255 = sbr.rel (%p1253) target = $region60
      $region59: #{edge_conv.5} parent=43 // pred_region
        _
      $region60: #{edge_conv.5} parent=43 // pred_fallthru
        _
    $region44: #{edge_conv.5} parent=5 // pred_fallthru
      _
    %p1256 = scmp.le.s32.totalorder 2, %s12
    // Predicated region
    $region61: #{edge_conv.5} parent=5 // pred_check
      %p1257 = pneg %p1256
    $region62: #{edge_conv.5} parent=5 // pred_check_branch
      %1259 = sbr.rel (%p1257) target = $region64
    $region63: #{edge_conv.5} parent=5 // pred_region
      %s1260 = ssub.s32 %s12, 2
    $region64: #{edge_conv.5} parent=5 // pred_fallthru
      _
  $region6: #{edge_conv.5} parent=0 // loop_footer
    %s16 = sadd.s32 1, %s12
  $region7: #{edge_conv.5} parent=0 // loop_footer_branch
    %11 = sbr.rel target = $region3
  $region8: #{edge_conv.5} parent=0 // loop_exit
    _

// kernel: edge_conv.6
$region0: #{edge_conv.6}
  #allocation0 [shape = 'u32[]', space=smem, size = 0x4, offset = 0x4, fixed_abs, tag = 'smem constant byte address 0x4 - core index']
  #allocation1 [shape = 'u32[144,128]{1,0:T(1,128)}', space=vmem, size = 0x12000, scoped, tag = 'internal scratch']
  %s0 = inlined_call_operand.vmem [shape: f32[2,16,4], index: 0, kind: input, shape index: {}, may-alias: {0,1}]
  %s1 = inlined_call_operand.vmem [shape: f32[2,16,4], index: 1, kind: input, shape index: {}, may-alias: {0,1}]
  %s2 = inlined_call_operand.vmem [shape: s32[2,16,4], index: 2, kind: input, shape index: {}]
  %s3 = inlined_call_operand.vmem [shape: f32[4,8], index: 3, kind: input, shape index: {}]
  %s4 = inlined_call_operand.vmem [shape: f32[4,8], index: 4, kind: input, shape index: {}]
  %s5 = inlined_call_operand.vmem [shape: f32[1,8], index: 5, kind: input, shape index: {}]
  %s6 = inlined_call_operand.vmem [shape: f32[1,8], index: 6, kind: input, shape index: {}]
  %s7 = inlined_call_operand.vmem [shape: f32[1,8], index: 7, kind: input, shape index: {}]
  %s8 = inlined_call_operand.vmem [shape: f32[8,16], index: 8, kind: input, shape index: {}]
  %s9 = inlined_call_operand.vmem [shape: f32[1,16], index: 9, kind: input, shape index: {}]
  %s10 = inlined_call_operand.vmem [shape: f32[2,16], index: 10, kind: output, shape index: {}]
  %s11 = sld [smem:[#allocation0]]
  $region81: #{edge_conv.6} parent=0
    _
  %s13 = ssub.s32 1, %s11
  %s14 = scalar_select 0, %s13, %s11
  loop: start=0, step=1, limit=4
  $region2: #{edge_conv.6} parent=0 // loop_pre_header
    _
  $region3: #{edge_conv.6} parent=0 // loop_header
    %s16 = sphi 0, %s20
    %p17 = scmp.ge.s32.totalorder %s16, 4
    %s23 = sphi 0, %s35
    %s24 = sphi 0, %s31
    %s25 = sphi 0, %s23
    %s26 = sphi 0, %s24
    %s27 = sphi 0, %s25
    %s28 = sphi 0, %s26
    %s40 = sphi 0, %s42
    %s43 = sphi 0, %s40
    %s44 = sphi 0, %s43
    %s60 = sphi 0, %s44
    %s66 = sphi 0, %s68
    %s69 = sphi 0, %s66
    %s70 = sphi 0, %s69
    %s86 = sphi 0, %s70
    %s94 = sphi 0, %s96
    %s97 = sphi 0, %s94
    %s98 = sphi 0, %s97
    %s114 = sphi 0, %s98
    %s118 = sphi 0, %s118
    %s120 = sphi 0, %s118
    %s121 = sphi 0, %s120
    %s135 = sphi 0, %s121
    %s139 = sphi 0, %s139
    %s141 = sphi 0, %s139
    %s142 = sphi 0, %s141
    %s156 = sphi 0, %s142
    %s160 = sphi 0, %s160
    %s162 = sphi 0, %s160
    %s163 = sphi 0, %s162
    %s177 = sphi 0, %s163
    %s181 = sphi 0, %s181
    %s183 = sphi 0, %s181
    %s184 = sphi 0, %s183
    %s198 = sphi 0, %s184
    %s202 = sphi 0, %s202
    %s204 = sphi 0, %s202
    %s205 = sphi 0, %s204
    %s219 = sphi 0, %s205
    %s223 = sphi 0, %s223
    %s225 = sphi 0, %s223
    %s226 = sphi 0, %s225
    %s240 = sphi 0, %s226
    %s244 = sphi 0, %s244
    %s246 = sphi 0, %s244
    %s247 = sphi 0, %s246
    %s261 = sphi 0, %s247
    %s265 = sphi 0, %s265
    %s267 = sphi 0, %s265
    %s268 = sphi 0, %s267
    %s282 = sphi 0, %s268
  $region4: #{edge_conv.6} parent=0 // loop_header_branch
    %19 = sbr.rel (%p17) target = $region8
  $region5: #{edge_conv.6} parent=0 // loop_body
    %s21 = ssub.s32 %s16, 1
    %s22 = ssub.s32 %s16, 2
    %s29 = sadd.s32 1, %s24
    %p30 = scmp.ge.s32.totalorder %s29, 1
    %s31 = scalar_select %p30, 0, %s29
    %s32 = sadd.s32 1, %s23
    %s33 = scalar_select %p30, %s32, %s23
    %p34 = scmp.ge.s32.totalorder %s33, 2
    %s35 = scalar_select %p34, 0, %s33
    %s36 = ssub.s32 %s23, %s35
    %s37 = ssub.s32 %s24, %s31
    %s38 = sor.u32 %s36, %s37
    %p39 = scmp.eq.s32.totalorder %s38, 0
    %s41 = sadd.s32 %s40, 1
    %s42 = scalar_select %p39, %s40, %s41
    %p45 = pneg %p39
    %p46 = scmp.eq.s32.totalorder %s16, 1
    %p47 = por %p45, %p46
    %p48 = scmp.ne.s32.totalorder %s40, %s43
    %p49 = scmp.eq.s32.totalorder %s16, 0
    %p50 = por %p48, %p49
    %p51 = scmp.ne.s32.totalorder %s40, %s43
    %p52 = scmp.eq.s32.totalorder %s21, 1
    %p53 = por %p51, %p52
    %p54 = scmp.ne.s32.totalorder %s43, %s44
    %p55 = scmp.eq.s32.totalorder %s21, 0
    %p56 = por %p54, %p55
    %p57 = scmp.ne.s32.totalorder %s43, %s44
    %p58 = scmp.eq.s32.totalorder %s22, 1
    %p59 = por %p57, %p58
    %p61 = scmp.ne.s32.totalorder %s44, %s60
    %p62 = scmp.eq.s32.totalorder %s22, 0
    %p63 = por %p61, %p62
    %s64 = ssub.s32 %s23, %s35
    %p65 = scmp.eq.s32.totalorder %s64, 0
    %s67 = sadd.s32 %s66, 1
    %s68 = scalar_select %p65, %s66, %s67
    %p71 = pneg %p65
    %p72 = scmp.eq.s32.totalorder %s16, 1
    %p73 = por %p71, %p72
    %p74 = scmp.ne.s32.totalorder %s66, %s69
    %p75 = scmp.eq.s32.totalorder %s16, 0
    %p76 = por %p74, %p75
    %p77 = scmp.ne.s32.totalorder %s66, %s69
    %p78 = scmp.eq.s32.totalorder %s21, 1
    %p79 = por %p77, %p78
    %p80 = scmp.ne.s32.totalorder %s69, %s70
    %p81 = scmp.eq.s32.totalorder %s21, 0
    %p82 = por %p80, %p81
    %p83 = scmp.ne.s32.totalorder %s69, %s70
    %p84 = scmp.eq.s32.totalorder %s22, 1
    %p85 = por %p83, %p84
    %p87 = scmp.ne.s32.totalorder %s70, %s86
    %p88 = scmp.eq.s32.totalorder %s22, 0
    %p89 = por %p87, %p88
    %s90 = ssub.s32 %s23, %s35
    %s91 = ssub.s32 %s24, %s31
    %s92 = sor.u32 %s90, %s91
    %p93 = scmp.eq.s32.totalorder %s92, 0
    %s95 = sadd.s32 %s94, 1
    %s96 = scalar_select %p93, %s94, %s95
    %p99 = pneg %p93
    %p100 = scmp.eq.s32.totalorder %s16, 1
    %p101 = por %p99, %p100
    %p102 = scmp.ne.s32.totalorder %s94, %s97
    %p103 = scmp.eq.s32.totalorder %s16, 0
    %p104 = por %p102, %p103
    %p105 = scmp.ne.s32.totalorder %s94, %s97
    %p106 = scmp.eq.s32.totalorder %s21, 1
    %p107 = por %p105, %p106
    %p108 = scmp.ne.s32.totalorder %s97, %s98
    %p109 = scmp.eq.s32.totalorder %s21, 0
    %p110 = por %p108, %p109
    %p111 = scmp.ne.s32.totalorder %s97, %s98
    %p112 = scmp.eq.s32.totalorder %s22, 1
    %p113 = por %p111, %p112
    %p115 = scmp.ne.s32.totalorder %s98, %s114
    %p116 = scmp.eq.s32.totalorder %s22, 0
    %p117 = por %p115, %p116
    %s119 = sadd.s32 %s118, 1
    %p122 = scmp.eq.s32.totalorder %s16, 1
    %p123 = scmp.ne.s32.totalorder %s118, %s120
    %p124 = scmp.eq.s32.totalorder %s16, 0
    %p125 = por %p123, %p124
    %p126 = scmp.ne.s32.totalorder %s118, %s120
    %p127 = scmp.eq.s32.totalorder %s21, 1
    %p128 = por %p126, %p127
    %p129 = scmp.ne.s32.totalorder %s120, %s121
    %p130 = scmp.eq.s32.totalorder %s21, 0
    %p131 = por %p129, %p130
    %p132 = scmp.ne.s32.totalorder %s120, %s121
    %p133 = scmp.eq.s32.totalorder %s22, 1
    %p134 = por %p132, %p133
    %p136 = scmp.ne.s32.totalorder %s121, %s135
    %p137 = scmp.eq.s32.totalorder %s22, 0
    %p138 = por %p136, %p137
    %s140 = sadd.s32 %s139, 1
    %p143 = scmp.eq.s32.totalorder %s16, 1
    %p144 = scmp.ne.s32.totalorder %s139, %s141
    %p145 = scmp.eq.s32.totalorder %s16, 0
    %p146 = por %p144, %p145
    %p147 = scmp.ne.s32.totalorder %s139, %s141
    %p148 = scmp.eq.s32.totalorder %s21, 1
    %p149 = por %p147, %p148
    %p150 = scmp.ne.s32.totalorder %s141, %s142
    %p151 = scmp.eq.s32.totalorder %s21, 0
    %p152 = por %p150, %p151
    %p153 = scmp.ne.s32.totalorder %s141, %s142
    %p154 = scmp.eq.s32.totalorder %s22, 1
    %p155 = por %p153, %p154
    %p157 = scmp.ne.s32.totalorder %s142, %s156
    %p158 = scmp.eq.s32.totalorder %s22, 0
    %p159 = por %p157, %p158
    %s161 = sadd.s32 %s160, 1
    %p164 = scmp.eq.s32.totalorder %s16, 1
    %p165 = scmp.ne.s32.totalorder %s160, %s162
    %p166 = scmp.eq.s32.totalorder %s16, 0
    %p167 = por %p165, %p166
    %p168 = scmp.ne.s32.totalorder %s160, %s162
    %p169 = scmp.eq.s32.totalorder %s21, 1
    %p170 = por %p168, %p169
    %p171 = scmp.ne.s32.totalorder %s162, %s163
    %p172 = scmp.eq.s32.totalorder %s21, 0
    %p173 = por %p171, %p172
    %p174 = scmp.ne.s32.totalorder %s162, %s163
    %p175 = scmp.eq.s32.totalorder %s22, 1
    %p176 = por %p174, %p175
    %p178 = scmp.ne.s32.totalorder %s163, %s177
    %p179 = scmp.eq.s32.totalorder %s22, 0
    %p180 = por %p178, %p179
    %s182 = sadd.s32 %s181, 1
    %p185 = scmp.eq.s32.totalorder %s16, 1
    %p186 = scmp.ne.s32.totalorder %s181, %s183
    %p187 = scmp.eq.s32.totalorder %s16, 0
    %p188 = por %p186, %p187
    %p189 = scmp.ne.s32.totalorder %s181, %s183
    %p190 = scmp.eq.s32.totalorder %s21, 1
    %p191 = por %p189, %p190
    %p192 = scmp.ne.s32.totalorder %s183, %s184
    %p193 = scmp.eq.s32.totalorder %s21, 0
    %p194 = por %p192, %p193
    %p195 = scmp.ne.s32.totalorder %s183, %s184
    %p196 = scmp.eq.s32.totalorder %s22, 1
    %p197 = por %p195, %p196
    %p199 = scmp.ne.s32.totalorder %s184, %s198
    %p200 = scmp.eq.s32.totalorder %s22, 0
    %p201 = por %p199, %p200
    %s203 = sadd.s32 %s202, 1
    %p206 = scmp.eq.s32.totalorder %s16, 1
    %p207 = scmp.ne.s32.totalorder %s202, %s204
    %p208 = scmp.eq.s32.totalorder %s16, 0
    %p209 = por %p207, %p208
    %p210 = scmp.ne.s32.totalorder %s202, %s204
    %p211 = scmp.eq.s32.totalorder %s21, 1
    %p212 = por %p210, %p211
    %p213 = scmp.ne.s32.totalorder %s204, %s205
    %p214 = scmp.eq.s32.totalorder %s21, 0
    %p215 = por %p213, %p214
    %p216 = scmp.ne.s32.totalorder %s204, %s205
    %p217 = scmp.eq.s32.totalorder %s22, 1
    %p218 = por %p216, %p217
    %p220 = scmp.ne.s32.totalorder %s205, %s219
    %p221 = scmp.eq.s32.totalorder %s22, 0
    %p222 = por %p220, %p221
    %s224 = sadd.s32 %s223, 1
    %p227 = scmp.eq.s32.totalorder %s16, 1
    %p228 = scmp.ne.s32.totalorder %s223, %s225
    %p229 = scmp.eq.s32.totalorder %s16, 0
    %p230 = por %p228, %p229
    %p231 = scmp.ne.s32.totalorder %s223, %s225
    %p232 = scmp.eq.s32.totalorder %s21, 1
    %p233 = por %p231, %p232
    %p234 = scmp.ne.s32.totalorder %s225, %s226
    %p235 = scmp.eq.s32.totalorder %s21, 0
    %p236 = por %p234, %p235
    %p237 = scmp.ne.s32.totalorder %s225, %s226
    %p238 = scmp.eq.s32.totalorder %s22, 1
    %p239 = por %p237, %p238
    %p241 = scmp.ne.s32.totalorder %s226, %s240
    %p242 = scmp.eq.s32.totalorder %s22, 0
    %p243 = por %p241, %p242
    %s245 = sadd.s32 %s244, 1
    %p248 = scmp.eq.s32.totalorder %s16, 1
    %p249 = scmp.ne.s32.totalorder %s244, %s246
    %p250 = scmp.eq.s32.totalorder %s16, 0
    %p251 = por %p249, %p250
    %p252 = scmp.ne.s32.totalorder %s244, %s246
    %p253 = scmp.eq.s32.totalorder %s21, 1
    %p254 = por %p252, %p253
    %p255 = scmp.ne.s32.totalorder %s246, %s247
    %p256 = scmp.eq.s32.totalorder %s21, 0
    %p257 = por %p255, %p256
    %p258 = scmp.ne.s32.totalorder %s246, %s247
    %p259 = scmp.eq.s32.totalorder %s22, 1
    %p260 = por %p258, %p259
    %p262 = scmp.ne.s32.totalorder %s247, %s261
    %p263 = scmp.eq.s32.totalorder %s22, 0
    %p264 = por %p262, %p263
    %s266 = sadd.s32 %s265, 1
    %p269 = scmp.eq.s32.totalorder %s16, 1
    %p270 = scmp.ne.s32.totalorder %s265, %s267
    %p271 = scmp.eq.s32.totalorder %s16, 0
    %p272 = por %p270, %p271
    %p273 = scmp.ne.s32.totalorder %s265, %s267
    %p274 = scmp.eq.s32.totalorder %s21, 1
    %p275 = por %p273, %p274
    %p276 = scmp.ne.s32.totalorder %s267, %s268
    %p277 = scmp.eq.s32.totalorder %s21, 0
    %p278 = por %p276, %p277
    %p279 = scmp.ne.s32.totalorder %s267, %s268
    %p280 = scmp.eq.s32.totalorder %s22, 1
    %p281 = por %p279, %p280
    %p283 = scmp.ne.s32.totalorder %s268, %s282
    %p284 = scmp.eq.s32.totalorder %s22, 0
    %p285 = por %p283, %p284
    %p286 = scmp.le.s32.totalorder 1, %s16
    %p287 = scmp.lt.s32.totalorder %s16, 3
    %p288 = pnand %p286, %p287
    %p289 = pneg %p288
    // Predicated region
    $region9: #{edge_conv.6} parent=5 // pred_check
      _
    $region10: #{edge_conv.6} parent=5 // pred_check_branch
      %291 = sbr.rel (%p288) target = $region12
    $region11: #{edge_conv.6} parent=5 // pred_region
      %s292 = ssub.s32 %s16, 1
      // Predicated region
      $region13: #{edge_conv.6} parent=11 // pred_check
        %p293 = pneg %p131
      $region14: #{edge_conv.6} parent=11 // pred_check_branch
        %295 = sbr.rel (%p293) target = $region16
      $region15: #{edge_conv.6} parent=11 // pred_region
        _
      $region16: #{edge_conv.6} parent=11 // pred_fallthru
        _
      // Predicated region
      $region17: #{edge_conv.6} parent=11 // pred_check
        %p296 = pneg %p152
      $region18: #{edge_conv.6} parent=11 // pred_check_branch
        %298 = sbr.rel (%p296) target = $region20
      $region19: #{edge_conv.6} parent=11 // pred_region
        _
      $region20: #{edge_conv.6} parent=11 // pred_fallthru
        _
      // Predicated region
      $region21: #{edge_conv.6} parent=11 // pred_check
        %p299 = pneg %p173
      $region22: #{edge_conv.6} parent=11 // pred_check_branch
        %301 = sbr.rel (%p299) target = $region24
      $region23: #{edge_conv.6} parent=11 // pred_region
        _
      $region24: #{edge_conv.6} parent=11 // pred_fallthru
        _
      // Predicated region
      $region25: #{edge_conv.6} parent=11 // pred_check
        %p302 = pneg %p194
      $region26: #{edge_conv.6} parent=11 // pred_check_branch
        %304 = sbr.rel (%p302) target = $region28
      $region27: #{edge_conv.6} parent=11 // pred_region
        _
      $region28: #{edge_conv.6} parent=11 // pred_fallthru
        _
      // Predicated region
      $region29: #{edge_conv.6} parent=11 // pred_check
        %p305 = pneg %p215
      $region30: #{edge_conv.6} parent=11 // pred_check_branch
        %307 = sbr.rel (%p305) target = $region32
      $region31: #{edge_conv.6} parent=11 // pred_region
        _
      $region32: #{edge_conv.6} parent=11 // pred_fallthru
        _
      // Predicated region
      $region33: #{edge_conv.6} parent=11 // pred_check
        %p308 = pneg %p236
      $region34: #{edge_conv.6} parent=11 // pred_check_branch
        %310 = sbr.rel (%p308) target = $region36
      $region35: #{edge_conv.6} parent=11 // pred_region
        _
      $region36: #{edge_conv.6} parent=11 // pred_fallthru
        _
      // Predicated region
      $region37: #{edge_conv.6} parent=11 // pred_check
        %p311 = pneg %p257
      $region38: #{edge_conv.6} parent=11 // pred_check_branch
        %313 = sbr.rel (%p311) target = $region40
      $region39: #{edge_conv.6} parent=11 // pred_region
        _
      $region40: #{edge_conv.6} parent=11 // pred_fallthru
        _
    $region12: #{edge_conv.6} parent=5 // pred_fallthru
      _
    %p314 = scmp.lt.s32.totalorder %s16, 2
    // Predicated region
    $region41: #{edge_conv.6} parent=5 // pred_check
      %p315 = pneg %p314
    $region42: #{edge_conv.6} parent=5 // pred_check_branch
      %317 = sbr.rel (%p315) target = $region44
    $region43: #{edge_conv.6} parent=5 // pred_region
      // Predicated region
      $region45: #{edge_conv.6} parent=43 // pred_check
        %p318 = pneg %p50
      $region46: #{edge_conv.6} parent=43 // pred_check_branch
        %320 = sbr.rel (%p318) target = $region48
      $region47: #{edge_conv.6} parent=43 // pred_region
        %s321 = smul.u32 2, %s24
        %p322 = scmp.lt.s32.totalorder %s23, 1
        %s323 = scalar_select %p322, %s23, 1
        %p324 = scmp.lt.s32.totalorder %s321, 1
        %s325 = scalar_select %p324, %s321, 1
        %s326 = smul.addr %s323, 2
        %s327 = sadd.s32 %s325, %s326
        %s328 = smul.addr %s327, 8
        %s329 = scalar_lea.vmem %s0, %s328
        %s330 = smul.u32 2, %s24
      $region48: #{edge_conv.6} parent=43 // pred_fallthru
        _
      // Predicated region
      $region49: #{edge_conv.6} parent=43 // pred_check
        %p331 = pneg %p76
      $region50: #{edge_conv.6} parent=43 // pred_check_branch
        %333 = sbr.rel (%p331) target = $region52
      $region51: #{edge_conv.6} parent=43 // pred_region
        %p334 = scmp.lt.s32.totalorder %s23, 1
        %s335 = scalar_select %p334, %s23, 1
        %s336 = smul.addr %s335, 2
        %s337 = smul.addr %s336, 8
        %s338 = scalar_lea.vmem %s1, %s337
      $region52: #{edge_conv.6} parent=43 // pred_fallthru
        _
      // Predicated region
      $region53: #{edge_conv.6} parent=43 // pred_check
        %p339 = pneg %p104
      $region54: #{edge_conv.6} parent=43 // pred_check_branch
        %341 = sbr.rel (%p339) target = $region56
      $region55: #{edge_conv.6} parent=43 // pred_region
        %s342 = smul.u32 2, %s24
        %p343 = scmp.lt.s32.totalorder %s23, 1
        %s344 = scalar_select %p343, %s23, 1
        %p345 = scmp.lt.s32.totalorder %s342, 1
        %s346 = scalar_select %p345, %s342, 1
        %s347 = smul.addr %s344, 2
        %s348 = sadd.s32 %s346, %s347
        %s349 = smul.addr %s348, 8
        %s350 = scalar_lea.vmem %s2, %s349
        %s351 = smul.u32 2, %s24
      $region56: #{edge_conv.6} parent=43 // pred_fallthru
        _
    $region44: #{edge_conv.6} parent=5 // pred_fallthru
      _
    %p352 = scmp.le.s32.totalorder 1, %s16
    %p353 = scmp.lt.s32.totalorder %s16, 3
    %p354 = pnand %p352, %p353
    %p355 = pneg %p354
    // Predicated region
    $region57: #{edge_conv.6} parent=5 // pred_check
      _
    $region58: #{edge_conv.6} parent=5 // pred_check_branch
      %357 = sbr.rel (%p354) target = $region60
    $region59: #{edge_conv.6} parent=5 // pred_region
      %s358 = ssub.s32 %s16, 1
      %s359 = smul.u32 2, %s26
      %p360 = scmp.lt.s32.totalorder %s25, 1
      %s361 = scalar_select %p360, %s25, 1
      %p362 = scmp.lt.s32.totalorder %s359, 1
      %s363 = scalar_select %p362, %s359, 1
      %s364 = smul.addr %s361, 2
      %s365 = sadd.s32 %s363, %s364
      %s366 = smul.addr %s365, 8
      %s367 = scalar_lea.vmem %s0, %s366
      %p368 = pneg %p56
      %p369 = pneg %p53
      %p370 = scmp.lt.s32.totalorder %s25, 1
      %s371 = scalar_select %p370, %s25, 1
      %s372 = smul.addr %s371, 2
      %s373 = smul.addr %s372, 8
      %s374 = scalar_lea.vmem %s1, %s373
      %p375 = pneg %p82
      %p376 = pneg %p79
      %s377 = smul.u32 2, %s26
      %p378 = scmp.lt.s32.totalorder %s25, 1
      %s379 = scalar_select %p378, %s25, 1
      %p380 = scmp.lt.s32.totalorder %s377, 1
      %s381 = scalar_select %p380, %s377, 1
      %s382 = smul.addr %s379, 2
      %s383 = sadd.s32 %s381, %s382
      %s384 = smul.addr %s383, 8
      %s385 = scalar_lea.vmem %s2, %s384
      %p386 = pneg %p110
      %p387 = pneg %p107
      %p388 = pneg %p131
      %p389 = pneg %p128
      %p390 = pneg %p152
      %p391 = pneg %p149
      %p392 = pneg %p173
      %p393 = pneg %p170
      %p394 = pneg %p194
      %p395 = pneg %p191
      %p396 = pneg %p215
      %p397 = pneg %p212
      %p398 = pneg %p236
      %p399 = pneg %p233
      %p400 = pneg %p257
      %p401 = pneg %p254
      %p402 = pneg %p278
      %p403 = pneg %p275
      %s404 = smul.u32 2, %s26
      %p405 = scmp.lt.s32.totalorder %s25, 1
      %s406 = scalar_select %p405, %s25, 1
      %p407 = scmp.lt.s32.totalorder %s404, 1
      %s408 = scalar_select %p407, %s404, 1
      %s409 = smul.addr %s406, 2
      %s410 = sadd.s32 %s408, %s409
      %s411 = smul.addr %s410, 8
      %s412 = scalar_lea.vmem %s0, %s411
      %s413 = smul.u32 2, %s26
      %p414 = scmp.lt.s32.totalorder %s25, 1
      %s415 = scalar_select %p414, %s25, 1
      %s416 = smul.addr %s415, 2
      %s417 = smul.addr %s416, 8
      %s418 = scalar_lea.vmem %s1, %s417
      %s419 = smul.u32 2, %s26
      %p420 = scmp.lt.s32.totalorder %s25, 1
      %s421 = scalar_select %p420, %s25, 1
      %p422 = scmp.lt.s32.totalorder %s419, 1
      %s423 = scalar_select %p422, %s419, 1
      %s424 = smul.addr %s421, 2
      %s425 = sadd.s32 %s423, %s424
      %s426 = smul.addr %s425, 8
      %s427 = scalar_lea.vmem %s2, %s426
      %s428 = smul.u32 2, %s26
      %p429 = scmp.eq.s32.totalorder %s25, 0
      %p430 = scmp.eq.s32.totalorder %s26, 0
      %p431 = pnand %p429, %p430
      %p432 = pneg %p431
      %p433 = scmp.eq.s32.totalorder %s25, 1
      %p434 = pnand %p433, %p430
      %p435 = pneg %p434
      // Predicated region
      $region61: #{edge_conv.6} parent=59 // pred_check
        _
      $region62: #{edge_conv.6} parent=59 // pred_check_branch
        %437 = sbr.rel (%p431) target = $region64
      $region63: #{edge_conv.6} parent=59 // pred_region
        %vm438 = vcmask 123904
        %439 = vst.msk [vmem:[%s10] sm:$0x3] %vm438, 0.0
      $region64: #{edge_conv.6} parent=59 // pred_fallthru
        _
      %v440 = vld [vmem:[%s412] sm:$0xff]
      %v441 = vld [vmem:[%s412 + $0x8] sm:$0xff]
      %v442 = vld [vmem:[%s418] sm:$0xff]
      %v443 = vld [vmem:[%s418 + $0x8] sm:$0xff]
      %v444 = vld [vmem:[%s427] sm:$0xff]
      %v445 = vld [vmem:[%s427 + $0x8] sm:$0xff]
      %v446 = vld [vmem:[%s3] sm:$0xf]
      %v447 = vld [vmem:[%s4] sm:$0xf]
      %v448 = vld [vmem:[%s5] sm:$0x1]
      %v449 = vld [vmem:[%s6] sm:$0x1]
      %v450 = vld [vmem:[%s7] sm:$0x1]
      %v451 = vld [vmem:[%s8] sm:$0xff]
      %v452 = vld [vmem:[%s9] sm:$0x1]
      %v454 = vlaneseq
      %v455 = vshrl.u32 %v454, 7
      %v456 = vsub.s32 0, %v455
      %v457 = vrot.slane %v448, %v456
      %vm459 = vcmask 31744
      %v461 = vsel %vm459, %v440, 0
      %v464 = vsel %vm459, %v441, 0
      %vm466 = vcmask 1043456
      %v468 = vsel %vm466, %v446, 0
      %470 = vmatprep.subr.mxu0 0.0
      %471 = vmatpush1.msra.mxu0 %v468
      %472 = vmatprep.subr.mxu0 0.0
      %473 = vmatpush1.msra.mxu0 0.0
      %474 = vmatprep.subr.mxu0 0.0
      %475 = vmatpush1.msra.mxu0 0.0
      %476 = vmatprep.subr.mxu0 0.0
      %477 = vmatpush1.msra.mxu0 0.0
      %478 = vmatprep.subr.mxu0 0.0
      %479 = vmatpush1.msra.mxu0 0.0
      %480 = vmatprep.subr.mxu0 0.0
      %481 = vmatpush1.msra.mxu0 0.0
      %482 = vmatprep.subr.mxu0 0.0
      %483 = vmatpush1.msra.mxu0 0.0
      %484 = vmatprep.subr.mxu0 0.0
      %485 = vmatpush1.msra.mxu0 0.0
      %486 = vmatprep.subr.mxu0 0.0
      %487 = vmatpush1.msra.mxu0 0.0
      %488 = vmatprep.subr.mxu0 0.0
      %489 = vmatpush1.msra.mxu0 0.0
      %490 = vmatprep.subr.mxu0 0.0
      %491 = vmatpush1.msra.mxu0 0.0
      %492 = vmatprep.subr.mxu0 0.0
      %493 = vmatpush1.msra.mxu0 0.0
      %494 = vmatprep.subr.mxu0 0.0
      %495 = vmatpush1.msra.mxu0 0.0
      %496 = vmatprep.subr.mxu0 0.0
      %497 = vmatpush1.msra.mxu0 0.0
      %498 = vmatprep.subr.mxu0 0.0
      %499 = vmatpush1.msra.mxu0 0.0
      %500 = vmatprep.subr.mxu0 0.0
      %501 = vmatpush1.msra.mxu0 0.0
      %502 = vmatprep.subr.mxu0 0.0
      %503 = vmatpush1.msra.mxu0 0.0
      %504 = vmatprep.subr.mxu0 0.0
      %505 = vmatpush1.msra.mxu0 0.0
      %506 = vmatprep.subr.mxu0 0.0
      %507 = vmatpush1.msra.mxu0 0.0
      %508 = vmatprep.subr.mxu0 0.0
      %509 = vmatpush1.msra.mxu0 0.0
      %510 = vmatprep.subr.mxu0 0.0
      %511 = vmatpush1.msra.mxu0 0.0
      %512 = vmatprep.subr.mxu0 0.0
      %513 = vmatpush1.msra.mxu0 0.0
      %514 = vmatprep.subr.mxu0 0.0
      %515 = vmatpush1.msra.mxu0 0.0
      %516 = vmatprep.subr.mxu0 0.0
      %517 = vmatpush1.msra.mxu0 0.0
      %518 = vmatprep.subr.mxu0 0.0
      %519 = vmatpush1.msra.mxu0 0.0
      %520 = vmatprep.subr.mxu0 0.0
      %521 = vmatpush1.msra.mxu0 0.0
      %522 = vmatprep.subr.mxu0 0.0
      %523 = vmatpush1.msra.mxu0 0.0
      %524 = vmatprep.subr.mxu0 0.0
      %525 = vmatpush1.msra.mxu0 0.0
      %526 = vmatprep.subr.mxu0 0.0
      %527 = vmatpush1.msra.mxu0 0.0
      %528 = vmatprep.subr.mxu0 0.0
      %529 = vmatpush1.msra.mxu0 0.0
      %530 = vmatprep.subr.mxu0 0.0
      %531 = vmatpush1.msra.mxu0 0.0
      %532 = vmatprep.subr.mxu0 0.0
      %533 = vmatpush1.msra.mxu0 0.0
      %534 = vmatprep.mubr.f32.mxu0 0.0
      %535 = vmatmul.mubr.f32.gmra.mrb[0].mxu0 %v461
      %v536 = vpop.f32.mrb[0].mxu0
      %v537 = vadd.f32 %v457, %v536
      %v538 = vpop.f32.mrb[0].mxu0
      %539 = vmatprep.mubr.f32.mxu0 0.0
      %540 = vmatmul.mubr.f32.gmra.mrb[0].mxu0 %v464
      %v541 = vpop.f32.mrb[0].mxu0
      %v542 = vadd.f32 %v457, %v541
      %v543 = vpop.f32.mrb[0].mxu0
      %544 = vdwg.mxu0
      %v545 = vlaneseq
      %v546 = vand.u32 %v545, 127
      %547 = vset.pattern.permute.xlu0 0
      %548 = vperm.xlu0 %547, %v444
      %v549 = vpop.permute.xlu0 %548
      %550 = vset.pattern.permute.xlu0 0
      %551 = vperm.xlu0 %550, %v445
      %v552 = vpop.permute.xlu0 %551
      %vm553 = vcmp.eq.s32.totalorder %v549, %v546
      %vm554 = vcmp.eq.s32.totalorder %v552, %v546
      %v555 = vsel %vm553, 1, 0
      %v556 = vsel %vm554, 1, 0
      %v557 = vcvt.s32.f32 %v555
      %v558 = vcvt.s32.f32 %v556
      %vm559 = vcmask 130048
      %v561 = vsel %vm559, %v557, 0
      %v564 = vsel %vm559, %v558, 0
      %566 = vmatprep.subr.mxu0 0.0
      %567 = vmatpush1.msra.mxu0 %v442
      %568 = vmatprep.subr.mxu0 0.0
      %569 = vmatpush1.msra.mxu0 %v443
      %570 = vmatprep.subr.mxu0 0.0
      %571 = vmatpush1.msra.mxu0 0.0
      %572 = vmatprep.subr.mxu0 0.0
      %573 = vmatpush1.msra.mxu0 0.0
      %574 = vmatprep.subr.mxu0 0.0
      %575 = vmatpush1.msra.mxu0 0.0
      %576 = vmatprep.subr.mxu0 0.0
      %577 = vmatpush1.msra.mxu0 0.0
      %578 = vmatprep.subr.mxu0 0.0
      %579 = vmatpush1.msra.mxu0 0.0
      %580 = vmatprep.subr.mxu0 0.0
      %581 = vmatpush1.msra.mxu0 0.0
      %582 = vmatprep.subr.mxu0 0.0
      %583 = vmatpush1.msra.mxu0 0.0
      %584 = vmatprep.subr.mxu0 0.0
      %585 = vmatpush1.msra.mxu0 0.0
      %586 = vmatprep.subr.mxu0 0.0
      %587 = vmatpush1.msra.mxu0 0.0
      %588 = vmatprep.subr.mxu0 0.0
      %589 = vmatpush1.msra.mxu0 0.0
      %590 = vmatprep.subr.mxu0 0.0
      %591 = vmatpush1.msra.mxu0 0.0
      %592 = vmatprep.subr.mxu0 0.0
      %593 = vmatpush1.msra.mxu0 0.0
      %594 = vmatprep.subr.mxu0 0.0
      %595 = vmatpush1.msra.mxu0 0.0
      %596 = vmatprep.subr.mxu0 0.0
      %597 = vmatpush1.msra.mxu0 0.0
      %598 = vmatprep.subr.mxu0 0.0
      %599 = vmatpush1.msra.mxu0 0.0
      %600 = vmatprep.subr.mxu0 0.0
      %601 = vmatpush1.msra.mxu0 0.0
      %602 = vmatprep.subr.mxu0 0.0
      %603 = vmatpush1.msra.mxu0 0.0
      %604 = vmatprep.subr.mxu0 0.0
      %605 = vmatpush1.msra.mxu0 0.0
      %606 = vmatprep.subr.mxu0 0.0
      %607 = vmatpush1.msra.mxu0 0.0
      %608 = vmatprep.subr.mxu0 0.0
      %609 = vmatpush1.msra.mxu0 0.0
      %610 = vmatprep.subr.mxu0 0.0
      %611 = vmatpush1.msra.mxu0 0.0
      %612 = vmatprep.subr.mxu0 0.0
      %613 = vmatpush1.msra.mxu0 0.0
      %614 = vmatprep.subr.mxu0 0.0
      %615 = vmatpush1.msra.mxu0 0.0
      %616 = vmatprep.subr.mxu0 0.0
      %617 = vmatpush1.msra.mxu0 0.0
      %618 = vmatprep.subr.mxu0 0.0
      %619 = vmatpush1.msra.mxu0 0.0
      %620 = vmatprep.subr.mxu0 0.0
      %621 = vmatpush1.msra.mxu0 0.0
      %622 = vmatprep.subr.mxu0 0.0
      %623 = vmatpush1.msra.mxu0 0.0
      %624 = vmatprep.subr.mxu0 0.0
      %625 = vmatpush1.msra.mxu0 0.0
      %626 = vmatprep.subr.mxu0 0.0
      %627 = vmatpush1.msra.mxu0 0.0
      %628 = vmatprep.subr.mxu0 0.0
      %629 = vmatpush1.msra.mxu0 0.0
      %630 = vmatprep.mubr.f32.mxu0 0.0
      %631 = vmatmul.mubr.f32.gmra.mrb[0].mxu0 %v561
      %v632 = vpop.f32.mrb[0].mxu0
      %v633 = vadd.f32 0.0, %v632
      %v634 = vpop.f32.mrb[0].mxu0
      %635 = vmatprep.mubr.f32.mxu0 0.0
      %636 = vmatmul.mubr.f32.gmra.mrb[0].mxu0 %v564
      %v637 = vpop.f32.mrb[0].mxu0
      %v638 = vadd.f32 0.0, %v637
      %v639 = vpop.f32.mrb[0].mxu0
      %640 = vdwg.mxu0
      %v642 = vsel %vm459, %v633, 0
      %v645 = vsel %vm459, %v638, 0
      %v648 = vsel %vm466, %v447, 0
      %650 = vmatprep.subr.mxu0 0.0
      %651 = vmatpush1.msra.mxu0 %v648
      %652 = vmatprep.subr.mxu0 0.0
      %653 = vmatpush1.msra.mxu0 0.0
      %654 = vmatprep.subr.mxu0 0.0
      %655 = vmatpush1.msra.mxu0 0.0
      %656 = vmatprep.subr.mxu0 0.0
      %657 = vmatpush1.msra.mxu0 0.0
      %658 = vmatprep.subr.mxu0 0.0
      %659 = vmatpush1.msra.mxu0 0.0
      %660 = vmatprep.subr.mxu0 0.0
      %661 = vmatpush1.msra.mxu0 0.0
      %662 = vmatprep.subr.mxu0 0.0
      %663 = vmatpush1.msra.mxu0 0.0
      %664 = vmatprep.subr.mxu0 0.0
      %665 = vmatpush1.msra.mxu0 0.0
      %666 = vmatprep.subr.mxu0 0.0
      %667 = vmatpush1.msra.mxu0 0.0
      %668 = vmatprep.subr.mxu0 0.0
      %669 = vmatpush1.msra.mxu0 0.0
      %670 = vmatprep.subr.mxu0 0.0
      %671 = vmatpush1.msra.mxu0 0.0
      %672 = vmatprep.subr.mxu0 0.0
      %673 = vmatpush1.msra.mxu0 0.0
      %674 = vmatprep.subr.mxu0 0.0
      %675 = vmatpush1.msra.mxu0 0.0
      %676 = vmatprep.subr.mxu0 0.0
      %677 = vmatpush1.msra.mxu0 0.0
      %678 = vmatprep.subr.mxu0 0.0
      %679 = vmatpush1.msra.mxu0 0.0
      %680 = vmatprep.subr.mxu0 0.0
      %681 = vmatpush1.msra.mxu0 0.0
      %682 = vmatprep.subr.mxu0 0.0
      %683 = vmatpush1.msra.mxu0 0.0
      %684 = vmatprep.subr.mxu0 0.0
      %685 = vmatpush1.msra.mxu0 0.0
      %686 = vmatprep.subr.mxu0 0.0
      %687 = vmatpush1.msra.mxu0 0.0
      %688 = vmatprep.subr.mxu0 0.0
      %689 = vmatpush1.msra.mxu0 0.0
      %690 = vmatprep.subr.mxu0 0.0
      %691 = vmatpush1.msra.mxu0 0.0
      %692 = vmatprep.subr.mxu0 0.0
      %693 = vmatpush1.msra.mxu0 0.0
      %694 = vmatprep.subr.mxu0 0.0
      %695 = vmatpush1.msra.mxu0 0.0
      %696 = vmatprep.subr.mxu0 0.0
      %697 = vmatpush1.msra.mxu0 0.0
      %698 = vmatprep.subr.mxu0 0.0
      %699 = vmatpush1.msra.mxu0 0.0
      %700 = vmatprep.subr.mxu0 0.0
      %701 = vmatpush1.msra.mxu0 0.0
      %702 = vmatprep.subr.mxu0 0.0
      %703 = vmatpush1.msra.mxu0 0.0
      %704 = vmatprep.subr.mxu0 0.0
      %705 = vmatpush1.msra.mxu0 0.0
      %706 = vmatprep.subr.mxu0 0.0
      %707 = vmatpush1.msra.mxu0 0.0
      %708 = vmatprep.subr.mxu0 0.0
      %709 = vmatpush1.msra.mxu0 0.0
      %710 = vmatprep.subr.mxu0 0.0
      %711 = vmatpush1.msra.mxu0 0.0
      %712 = vmatprep.subr.mxu0 0.0
      %713 = vmatpush1.msra.mxu0 0.0
      %714 = vmatprep.mubr.f32.mxu0 0.0
      %715 = vmatmul.mubr.f32.gmra.mrb[0].mxu0 %v642
      %v716 = vpop.f32.mrb[0].mxu0
      %v717 = vadd.f32 0.0, %v716
      %v718 = vpop.f32.mrb[0].mxu0
      %719 = vmatprep.mubr.f32.mxu0 0.0
      %720 = vmatmul.mubr.f32.gmra.mrb[0].mxu0 %v645
      %v721 = vpop.f32.mrb[0].mxu0
      %v722 = vadd.f32 0.0, %v721
      %v723 = vpop.f32.mrb[0].mxu0
      %724 = vdwg.mxu0
      %v725 = vadd.f32 %v537, %v717
      %v726 = vadd.f32 %v542, %v722
      %v728 = vlaneseq
      %v729 = vshrl.u32 %v728, 7
      %v730 = vsub.s32 0, %v729
      %v731 = vrot.slane %v449, %v730
      %v733 = vmul.f32 %v725, %v731
      %v734 = vmul.f32 %v726, %v731
      %v736 = vlaneseq
      %v737 = vshrl.u32 %v736, 7
      %v738 = vsub.s32 0, %v737
      %v739 = vrot.slane %v450, %v738
      %v741 = vadd.f32 %v733, %v739
      %v742 = vadd.f32 %v734, %v739
      %v743 = vmax.f32 %v741, 0.0
      %v744 = vmax.f32 %v742, 0.0
      %v746 = vlaneseq
      %v747 = vshrl.u32 %v746, 7
      %v748 = vsub.s32 0, %v747
      %v749 = vrot.slane %v452, %v748
      %vm751 = vcmask 64512
      %v753 = vsel %vm751, %v743, 0
      %v756 = vsel %vm751, %v744, 0
      %758 = vmatprep.subr.mxu0 0.0
      %759 = vmatpush1.msra.mxu0 %v451
      %760 = vmatprep.subr.mxu0 0.0
      %761 = vmatpush1.msra.mxu0 0.0
      %762 = vmatprep.subr.mxu0 0.0
      %763 = vmatpush1.msra.mxu0 0.0
      %764 = vmatprep.subr.mxu0 0.0
      %765 = vmatpush1.msra.mxu0 0.0
      %766 = vmatprep.subr.mxu0 0.0
      %767 = vmatpush1.msra.mxu0 0.0
      %768 = vmatprep.subr.mxu0 0.0
      %769 = vmatpush1.msra.mxu0 0.0
      %770 = vmatprep.subr.mxu0 0.0
      %771 = vmatpush1.msra.mxu0 0.0
      %772 = vmatprep.subr.mxu0 0.0
      %773 = vmatpush1.msra.mxu0 0.0
      %774 = vmatprep.subr.mxu0 0.0
      %775 = vmatpush1.msra.mxu0 0.0
      %776 = vmatprep.subr.mxu0 0.0
      %777 = vmatpush1.msra.mxu0 0.0
      %778 = vmatprep.subr.mxu0 0.0
      %779 = vmatpush1.msra.mxu0 0.0
      %780 = vmatprep.subr.mxu0 0.0
      %781 = vmatpush1.msra.mxu0 0.0
      %782 = vmatprep.subr.mxu0 0.0
      %783 = vmatpush1.msra.mxu0 0.0
      %784 = vmatprep.subr.mxu0 0.0
      %785 = vmatpush1.msra.mxu0 0.0
      %786 = vmatprep.subr.mxu0 0.0
      %787 = vmatpush1.msra.mxu0 0.0
      %788 = vmatprep.subr.mxu0 0.0
      %789 = vmatpush1.msra.mxu0 0.0
      %790 = vmatprep.subr.mxu0 0.0
      %791 = vmatpush1.msra.mxu0 0.0
      %792 = vmatprep.subr.mxu0 0.0
      %793 = vmatpush1.msra.mxu0 0.0
      %794 = vmatprep.subr.mxu0 0.0
      %795 = vmatpush1.msra.mxu0 0.0
      %796 = vmatprep.subr.mxu0 0.0
      %797 = vmatpush1.msra.mxu0 0.0
      %798 = vmatprep.subr.mxu0 0.0
      %799 = vmatpush1.msra.mxu0 0.0
      %800 = vmatprep.subr.mxu0 0.0
      %801 = vmatpush1.msra.mxu0 0.0
      %802 = vmatprep.subr.mxu0 0.0
      %803 = vmatpush1.msra.mxu0 0.0
      %804 = vmatprep.subr.mxu0 0.0
      %805 = vmatpush1.msra.mxu0 0.0
      %806 = vmatprep.subr.mxu0 0.0
      %807 = vmatpush1.msra.mxu0 0.0
      %808 = vmatprep.subr.mxu0 0.0
      %809 = vmatpush1.msra.mxu0 0.0
      %810 = vmatprep.subr.mxu0 0.0
      %811 = vmatpush1.msra.mxu0 0.0
      %812 = vmatprep.subr.mxu0 0.0
      %813 = vmatpush1.msra.mxu0 0.0
      %814 = vmatprep.subr.mxu0 0.0
      %815 = vmatpush1.msra.mxu0 0.0
      %816 = vmatprep.subr.mxu0 0.0
      %817 = vmatpush1.msra.mxu0 0.0
      %818 = vmatprep.subr.mxu0 0.0
      %819 = vmatpush1.msra.mxu0 0.0
      %820 = vmatprep.subr.mxu0 0.0
      %821 = vmatpush1.msra.mxu0 0.0
      %822 = vmatprep.mubr.f32.mxu0 0.0
      %823 = vmatmul.mubr.f32.gmra.mrb[0].mxu0 %v753
      %v824 = vpop.f32.mrb[0].mxu0
      %v825 = vadd.f32 %v749, %v824
      %v826 = vpop.f32.mrb[0].mxu0
      %827 = vmatprep.mubr.f32.mxu0 0.0
      %828 = vmatmul.mubr.f32.gmra.mrb[0].mxu0 %v756
      %v829 = vpop.f32.mrb[0].mxu0
      %v830 = vadd.f32 %v749, %v829
      %v831 = vpop.f32.mrb[0].mxu0
      %832 = vdwg.mxu0
      %v833 = vsel %vm559, %v825, 0.0
      %v834 = vsel %vm559, %v830, 0.0
      %v835 = vadd.f32 %v833, %v834
      %v836 = vrot.slane %v835, 4
      %v837 = vadd.f32 %v835, %v836
      %v838 = vrot.slane %v837, 2
      %v839 = vadd.f32 %v837, %v838
      %v840 = vrot.slane %v839, 1
      %v841 = vadd.f32 %v839, %v840
      %v842 = vadd.f32 %v841, 0.0
      %v843 = vmul.f32 %v825, %v825
      %v844 = vmul.f32 %v830, %v830
      %v845 = vsel %vm559, %v843, 0.0
      %v846 = vsel %vm559, %v844, 0.0
      %v847 = vadd.f32 %v845, %v846
      %v848 = vrot.slane %v847, 4
      %v849 = vadd.f32 %v847, %v848
      %v850 = vrot.slane %v849, 2
      %v851 = vadd.f32 %v849, %v850
      %v852 = vrot.slane %v851, 1
      %v853 = vadd.f32 %v851, %v852
      %v854 = vadd.f32 %v853, 0.0
      %855 = vset.pattern.permute.xlu0 1
      %856 = vperm.xlu0 %855, %v444
      %v857 = vpop.permute.xlu0 %856
      %858 = vset.pattern.permute.xlu0 1
      %859 = vperm.xlu0 %858, %v445
      %v860 = vpop.permute.xlu0 %859
      %vm861 = vcmp.eq.s32.totalorder %v857, %v546
      %vm862 = vcmp.eq.s32.totalorder %v860, %v546
      %v863 = vsel %vm861, 1, 0
      %v864 = vsel %vm862, 1, 0
      %v865 = vcvt.s32.f32 %v863
      %v866 = vcvt.s32.f32 %v864
      %v868 = vsel %vm559, %v865, 0
      %v871 = vsel %vm559, %v866, 0
      %873 = vmatprep.subr.mxu0 0.0
      %874 = vmatpush1.msra.mxu0 %v442
      %875 = vmatprep.subr.mxu0 0.0
      %876 = vmatpush1.msra.mxu0 %v443
      %877 = vmatprep.subr.mxu0 0.0
      %878 = vmatpush1.msra.mxu0 0.0
      %879 = vmatprep.subr.mxu0 0.0
      %880 = vmatpush1.msra.mxu0 0.0
      %881 = vmatprep.subr.mxu0 0.0
      %882 = vmatpush1.msra.mxu0 0.0
      %883 = vmatprep.subr.mxu0 0.0
      %884 = vmatpush1.msra.mxu0 0.0
      %885 = vmatprep.subr.mxu0 0.0
      %886 = vmatpush1.msra.mxu0 0.0
      %887 = vmatprep.subr.mxu0 0.0
      %888 = vmatpush1.msra.mxu0 0.0
      %889 = vmatprep.subr.mxu0 0.0
      %890 = vmatpush1.msra.mxu0 0.0
      %891 = vmatprep.subr.mxu0 0.0
      %892 = vmatpush1.msra.mxu0 0.0
      %893 = vmatprep.subr.mxu0 0.0
      %894 = vmatpush1.msra.mxu0 0.0
      %895 = vmatprep.subr.mxu0 0.0
      %896 = vmatpush1.msra.mxu0 0.0
      %897 = vmatprep.subr.mxu0 0.0
      %898 = vmatpush1.msra.mxu0 0.0
      %899 = vmatprep.subr.mxu0 0.0
      %900 = vmatpush1.msra.mxu0 0.0
      %901 = vmatprep.subr.mxu0 0.0
      %902 = vmatpush1.msra.mxu0 0.0
      %903 = vmatprep.subr.mxu0 0.0
      %904 = vmatpush1.msra.mxu0 0.0
      %905 = vmatprep.subr.mxu0 0.0
      %906 = vmatpush1.msra.mxu0 0.0
      %907 = vmatprep.subr.mxu0 0.0
      %908 = vmatpush1.msra.mxu0 0.0
      %909 = vmatprep.subr.mxu0 0.0
      %910 = vmatpush1.msra.mxu0 0.0
      %911 = vmatprep.subr.mxu0 0.0
      %912 = vmatpush1.msra.mxu0 0.0
      %913 = vmatprep.subr.mxu0 0.0
      %914 = vmatpush1.msra.mxu0 0.0
      %915 = vmatprep.subr.mxu0 0.0
      %916 = vmatpush1.msra.mxu0 0.0
      %917 = vmatprep.subr.mxu0 0.0
      %918 = vmatpush1.msra.mxu0 0.0
      %919 = vmatprep.subr.mxu0 0.0
      %920 = vmatpush1.msra.mxu0 0.0
      %921 = vmatprep.subr.mxu0 0.0
      %922 = vmatpush1.msra.mxu0 0.0
      %923 = vmatprep.subr.mxu0 0.0
      %924 = vmatpush1.msra.mxu0 0.0
      %925 = vmatprep.subr.mxu0 0.0
      %926 = vmatpush1.msra.mxu0 0.0
      %927 = vmatprep.subr.mxu0 0.0
      %928 = vmatpush1.msra.mxu0 0.0
      %929 = vmatprep.subr.mxu0 0.0
      %930 = vmatpush1.msra.mxu0 0.0
      %931 = vmatprep.subr.mxu0 0.0
      %932 = vmatpush1.msra.mxu0 0.0
      %933 = vmatprep.subr.mxu0 0.0
      %934 = vmatpush1.msra.mxu0 0.0
      %935 = vmatprep.subr.mxu0 0.0
      %936 = vmatpush1.msra.mxu0 0.0
      %937 = vmatprep.mubr.f32.mxu0 0.0
      %938 = vmatmul.mubr.f32.gmra.mrb[0].mxu0 %v868
      %v939 = vpop.f32.mrb[0].mxu0
      %v940 = vadd.f32 0.0, %v939
      %v941 = vpop.f32.mrb[0].mxu0
      %942 = vmatprep.mubr.f32.mxu0 0.0
      %943 = vmatmul.mubr.f32.gmra.mrb[0].mxu0 %v871
      %v944 = vpop.f32.mrb[0].mxu0
      %v945 = vadd.f32 0.0, %v944
      %v946 = vpop.f32.mrb[0].mxu0
      %947 = vdwg.mxu0
      %v949 = vsel %vm459, %v940, 0
      %v952 = vsel %vm459, %v945, 0
      %954 = vmatprep.subr.mxu0 0.0
      %955 = vmatpush1.msra.mxu0 %v648
      %956 = vmatprep.subr.mxu0 0.0
      %957 = vmatpush1.msra.mxu0 0.0
      %958 = vmatprep.subr.mxu0 0.0
      %959 = vmatpush1.msra.mxu0 0.0
      %960 = vmatprep.subr.mxu0 0.0
      %961 = vmatpush1.msra.mxu0 0.0
      %962 = vmatprep.subr.mxu0 0.0
      %963 = vmatpush1.msra.mxu0 0.0
      %964 = vmatprep.subr.mxu0 0.0
      %965 = vmatpush1.msra.mxu0 0.0
      %966 = vmatprep.subr.mxu0 0.0
      %967 = vmatpush1.msra.mxu0 0.0
      %968 = vmatprep.subr.mxu0 0.0
      %969 = vmatpush1.msra.mxu0 0.0
      %970 = vmatprep.subr.mxu0 0.0
      %971 = vmatpush1.msra.mxu0 0.0
      %972 = vmatprep.subr.mxu0 0.0
      %973 = vmatpush1.msra.mxu0 0.0
      %974 = vmatprep.subr.mxu0 0.0
      %975 = vmatpush1.msra.mxu0 0.0
      %976 = vmatprep.subr.mxu0 0.0
      %977 = vmatpush1.msra.mxu0 0.0
      %978 = vmatprep.subr.mxu0 0.0
      %979 = vmatpush1.msra.mxu0 0.0
      %980 = vmatprep.subr.mxu0 0.0
      %981 = vmatpush1.msra.mxu0 0.0
      %982 = vmatprep.subr.mxu0 0.0
      %983 = vmatpush1.msra.mxu0 0.0
      %984 = vmatprep.subr.mxu0 0.0
      %985 = vmatpush1.msra.mxu0 0.0
      %986 = vmatprep.subr.mxu0 0.0
      %987 = vmatpush1.msra.mxu0 0.0
      %988 = vmatprep.subr.mxu0 0.0
      %989 = vmatpush1.msra.mxu0 0.0
      %990 = vmatprep.subr.mxu0 0.0
      %991 = vmatpush1.msra.mxu0 0.0
      %992 = vmatprep.subr.mxu0 0.0
      %993 = vmatpush1.msra.mxu0 0.0
      %994 = vmatprep.subr.mxu0 0.0
      %995 = vmatpush1.msra.mxu0 0.0
      %996 = vmatprep.subr.mxu0 0.0
      %997 = vmatpush1.msra.mxu0 0.0
      %998 = vmatprep.subr.mxu0 0.0
      %999 = vmatpush1.msra.mxu0 0.0
      %1000 = vmatprep.subr.mxu0 0.0
      %1001 = vmatpush1.msra.mxu0 0.0
      %1002 = vmatprep.subr.mxu0 0.0
      %1003 = vmatpush1.msra.mxu0 0.0
      %1004 = vmatprep.subr.mxu0 0.0
      %1005 = vmatpush1.msra.mxu0 0.0
      %1006 = vmatprep.subr.mxu0 0.0
      %1007 = vmatpush1.msra.mxu0 0.0
      %1008 = vmatprep.subr.mxu0 0.0
      %1009 = vmatpush1.msra.mxu0 0.0
      %1010 = vmatprep.subr.mxu0 0.0
      %1011 = vmatpush1.msra.mxu0 0.0
      %1012 = vmatprep.subr.mxu0 0.0
      %1013 = vmatpush1.msra.mxu0 0.0
      %1014 = vmatprep.subr.mxu0 0.0
      %1015 = vmatpush1.msra.mxu0 0.0
      %1016 = vmatprep.subr.mxu0 0.0
      %1017 = vmatpush1.msra.mxu0 0.0
      %1018 = vmatprep.mubr.f32.mxu0 0.0
      %1019 = vmatmul.mubr.f32.gmra.mrb[0].mxu0 %v949
      %v1020 = vpop.f32.mrb[0].mxu0
      %v1021 = vadd.f32 0.0, %v1020
      %v1022 = vpop.f32.mrb[0].mxu0
      %1023 = vmatprep.mubr.f32.mxu0 0.0
      %1024 = vmatmul.mubr.f32.gmra.mrb[0].mxu0 %v952
      %v1025 = vpop.f32.mrb[0].mxu0
      %v1026 = vadd.f32 0.0, %v1025
      %v1027 = vpop.f32.mrb[0].mxu0
      %1028 = vdwg.mxu0
      %v1029 = vadd.f32 %v537, %v1021
      %v1030 = vadd.f32 %v542, %v1026
      %v1031 = vmul.f32 %v1029, %v731
      %v1032 = vmul.f32 %v1030, %v731
      %v1033 = vadd.f32 %v1031, %v739
      %v1034 = vadd.f32 %v1032, %v739
      %v1035 = vmax.f32 %v1033, 0.0
      %v1036 = vmax.f32 %v1034, 0.0
      %v1038 = vsel %vm751, %v1035, 0
      %v1041 = vsel %vm751, %v1036, 0
      %1043 = vmatprep.subr.mxu0 0.0
      %1044 = vmatpush1.msra.mxu0 %v451
      %1045 = vmatprep.subr.mxu0 0.0
      %1046 = vmatpush1.msra.mxu0 0.0
      %1047 = vmatprep.subr.mxu0 0.0
      %1048 = vmatpush1.msra.mxu0 0.0
      %1049 = vmatprep.subr.mxu0 0.0
      %1050 = vmatpush1.msra.mxu0 0.0
      %1051 = vmatprep.subr.mxu0 0.0
      %1052 = vmatpush1.msra.mxu0 0.0
      %1053 = vmatprep.subr.mxu0 0.0
      %1054 = vmatpush1.msra.mxu0 0.0
      %1055 = vmatprep.subr.mxu0 0.0
      %1056 = vmatpush1.msra.mxu0 0.0
      %1057 = vmatprep.subr.mxu0 0.0
      %1058 = vmatpush1.msra.mxu0 0.0
      %1059 = vmatprep.subr.mxu0 0.0
      %1060 = vmatpush1.msra.mxu0 0.0
      %1061 = vmatprep.subr.mxu0 0.0
      %1062 = vmatpush1.msra.mxu0 0.0
      %1063 = vmatprep.subr.mxu0 0.0
      %1064 = vmatpush1.msra.mxu0 0.0
      %1065 = vmatprep.subr.mxu0 0.0
      %1066 = vmatpush1.msra.mxu0 0.0
      %1067 = vmatprep.subr.mxu0 0.0
      %1068 = vmatpush1.msra.mxu0 0.0
      %1069 = vmatprep.subr.mxu0 0.0
      %1070 = vmatpush1.msra.mxu0 0.0
      %1071 = vmatprep.subr.mxu0 0.0
      %1072 = vmatpush1.msra.mxu0 0.0
      %1073 = vmatprep.subr.mxu0 0.0
      %1074 = vmatpush1.msra.mxu0 0.0
      %1075 = vmatprep.subr.mxu0 0.0
      %1076 = vmatpush1.msra.mxu0 0.0
      %1077 = vmatprep.subr.mxu0 0.0
      %1078 = vmatpush1.msra.mxu0 0.0
      %1079 = vmatprep.subr.mxu0 0.0
      %1080 = vmatpush1.msra.mxu0 0.0
      %1081 = vmatprep.subr.mxu0 0.0
      %1082 = vmatpush1.msra.mxu0 0.0
      %1083 = vmatprep.subr.mxu0 0.0
      %1084 = vmatpush1.msra.mxu0 0.0
      %1085 = vmatprep.subr.mxu0 0.0
      %1086 = vmatpush1.msra.mxu0 0.0
      %1087 = vmatprep.subr.mxu0 0.0
      %1088 = vmatpush1.msra.mxu0 0.0
      %1089 = vmatprep.subr.mxu0 0.0
      %1090 = vmatpush1.msra.mxu0 0.0
      %1091 = vmatprep.subr.mxu0 0.0
      %1092 = vmatpush1.msra.mxu0 0.0
      %1093 = vmatprep.subr.mxu0 0.0
      %1094 = vmatpush1.msra.mxu0 0.0
      %1095 = vmatprep.subr.mxu0 0.0
      %1096 = vmatpush1.msra.mxu0 0.0
      %1097 = vmatprep.subr.mxu0 0.0
      %1098 = vmatpush1.msra.mxu0 0.0
      %1099 = vmatprep.subr.mxu0 0.0
      %1100 = vmatpush1.msra.mxu0 0.0
      %1101 = vmatprep.subr.mxu0 0.0
      %1102 = vmatpush1.msra.mxu0 0.0
      %1103 = vmatprep.subr.mxu0 0.0
      %1104 = vmatpush1.msra.mxu0 0.0
      %1105 = vmatprep.subr.mxu0 0.0
      %1106 = vmatpush1.msra.mxu0 0.0
      %1107 = vmatprep.mubr.f32.mxu0 0.0
      %1108 = vmatmul.mubr.f32.gmra.mrb[0].mxu0 %v1038
      %v1109 = vpop.f32.mrb[0].mxu0
      %v1110 = vadd.f32 %v749, %v1109
      %v1111 = vpop.f32.mrb[0].mxu0
      %1112 = vmatprep.mubr.f32.mxu0 0.0
      %1113 = vmatmul.mubr.f32.gmra.mrb[0].mxu0 %v1041
      %v1114 = vpop.f32.mrb[0].mxu0
      %v1115 = vadd.f32 %v749, %v1114
      %v1116 = vpop.f32.mrb[0].mxu0
      %1117 = vdwg.mxu0
      %v1118 = vsel %vm559, %v1110, 0.0
      %v1119 = vsel %vm559, %v1115, 0.0
      %v1120 = vadd.f32 %v1118, %v1119
      %v1121 = vrot.slane %v1120, 4
      %v1122 = vadd.f32 %v1120, %v1121
      %v1123 = vrot.slane %v1122, 2
      %v1124 = vadd.f32 %v1122, %v1123
      %v1125 = vrot.slane %v1124, 1
      %v1126 = vadd.f32 %v1124, %v1125
      %v1127 = vadd.f32 %v842, %v1126
      %v1128 = vmul.f32 %v1110, %v1110
      %v1129 = vmul.f32 %v1115, %v1115
      %v1130 = vsel %vm559, %v1128, 0.0
      %v1131 = vsel %vm559, %v1129, 0.0
      %v1132 = vadd.f32 %v1130, %v1131
      %v1133 = vrot.slane %v1132, 4
      %v1134 = vadd.f32 %v1132, %v1133
      %v1135 = vrot.slane %v1134, 2
      %v1136 = vadd.f32 %v1134, %v1135
      %v1137 = vrot.slane %v1136, 1
      %v1138 = vadd.f32 %v1136, %v1137
      %v1139 = vadd.f32 %v854, %v1138
      %1140 = vset.pattern.permute.xlu0 2
      %1141 = vperm.xlu0 %1140, %v444
      %v1142 = vpop.permute.xlu0 %1141
      %1143 = vset.pattern.permute.xlu0 2
      %1144 = vperm.xlu0 %1143, %v445
      %v1145 = vpop.permute.xlu0 %1144
      %vm1146 = vcmp.eq.s32.totalorder %v1142, %v546
      %vm1147 = vcmp.eq.s32.totalorder %v1145, %v546
      %v1148 = vsel %vm1146, 1, 0
      %v1149 = vsel %vm1147, 1, 0
      %v1150 = vcvt.s32.f32 %v1148
      %v1151 = vcvt.s32.f32 %v1149
      %v1153 = vsel %vm559, %v1150, 0
      %v1156 = vsel %vm559, %v1151, 0
      %1158 = vmatprep.subr.mxu0 0.0
      %1159 = vmatpush1.msra.mxu0 %v442
      %1160 = vmatprep.subr.mxu0 0.0
      %1161 = vmatpush1.msra.mxu0 %v443
      %1162 = vmatprep.subr.mxu0 0.0
      %1163 = vmatpush1.msra.mxu0 0.0
      %1164 = vmatprep.subr.mxu0 0.0
      %1165 = vmatpush1.msra.mxu0 0.0
      %1166 = vmatprep.subr.mxu0 0.0
      %1167 = vmatpush1.msra.mxu0 0.0
      %1168 = vmatprep.subr.mxu0 0.0
      %1169 = vmatpush1.msra.mxu0 0.0
      %1170 = vmatprep.subr.mxu0 0.0
      %1171 = vmatpush1.msra.mxu0 0.0
      %1172 = vmatprep.subr.mxu0 0.0
      %1173 = vmatpush1.msra.mxu0 0.0
      %1174 = vmatprep.subr.mxu0 0.0
      %1175 = vmatpush1.msra.mxu0 0.0
      %1176 = vmatprep.subr.mxu0 0.0
      %1177 = vmatpush1.msra.mxu0 0.0
      %1178 = vmatprep.subr.mxu0 0.0
      %1179 = vmatpush1.msra.mxu0 0.0
      %1180 = vmatprep.subr.mxu0 0.0
      %1181 = vmatpush1.msra.mxu0 0.0
      %1182 = vmatprep.subr.mxu0 0.0
      %1183 = vmatpush1.msra.mxu0 0.0
      %1184 = vmatprep.subr.mxu0 0.0
      %1185 = vmatpush1.msra.mxu0 0.0
      %1186 = vmatprep.subr.mxu0 0.0
      %1187 = vmatpush1.msra.mxu0 0.0
      %1188 = vmatprep.subr.mxu0 0.0
      %1189 = vmatpush1.msra.mxu0 0.0
      %1190 = vmatprep.subr.mxu0 0.0
      %1191 = vmatpush1.msra.mxu0 0.0
      %1192 = vmatprep.subr.mxu0 0.0
      %1193 = vmatpush1.msra.mxu0 0.0
      %1194 = vmatprep.subr.mxu0 0.0
      %1195 = vmatpush1.msra.mxu0 0.0
      %1196 = vmatprep.subr.mxu0 0.0
      %1197 = vmatpush1.msra.mxu0 0.0
      %1198 = vmatprep.subr.mxu0 0.0
      %1199 = vmatpush1.msra.mxu0 0.0
      %1200 = vmatprep.subr.mxu0 0.0
      %1201 = vmatpush1.msra.mxu0 0.0
      %1202 = vmatprep.subr.mxu0 0.0
      %1203 = vmatpush1.msra.mxu0 0.0
      %1204 = vmatprep.subr.mxu0 0.0
      %1205 = vmatpush1.msra.mxu0 0.0
      %1206 = vmatprep.subr.mxu0 0.0
      %1207 = vmatpush1.msra.mxu0 0.0
      %1208 = vmatprep.subr.mxu0 0.0
      %1209 = vmatpush1.msra.mxu0 0.0
      %1210 = vmatprep.subr.mxu0 0.0
      %1211 = vmatpush1.msra.mxu0 0.0
      %1212 = vmatprep.subr.mxu0 0.0
      %1213 = vmatpush1.msra.mxu0 0.0
      %1214 = vmatprep.subr.mxu0 0.0
      %1215 = vmatpush1.msra.mxu0 0.0
      %1216 = vmatprep.subr.mxu0 0.0
      %1217 = vmatpush1.msra.mxu0 0.0
      %1218 = vmatprep.subr.mxu0 0.0
      %1219 = vmatpush1.msra.mxu0 0.0
      %1220 = vmatprep.subr.mxu0 0.0
      %1221 = vmatpush1.msra.mxu0 0.0
      %1222 = vmatprep.mubr.f32.mxu0 0.0
      %1223 = vmatmul.mubr.f32.gmra.mrb[0].mxu0 %v1153
      %v1224 = vpop.f32.mrb[0].mxu0
      %v1225 = vadd.f32 0.0, %v1224
      %v1226 = vpop.f32.mrb[0].mxu0
      %1227 = vmatprep.mubr.f32.mxu0 0.0
      %1228 = vmatmul.mubr.f32.gmra.mrb[0].mxu0 %v1156
      %v1229 = vpop.f32.mrb[0].mxu0
      %v1230 = vadd.f32 0.0, %v1229
      %v1231 = vpop.f32.mrb[0].mxu0
      %1232 = vdwg.mxu0
      %v1234 = vsel %vm459, %v1225, 0
      %v1237 = vsel %vm459, %v1230, 0
      %1239 = vmatprep.subr.mxu0 0.0
      %1240 = vmatpush1.msra.mxu0 %v648
      %1241 = vmatprep.subr.mxu0 0.0
      %1242 = vmatpush1.msra.mxu0 0.0
      %1243 = vmatprep.subr.mxu0 0.0
      %1244 = vmatpush1.msra.mxu0 0.0
      %1245 = vmatprep.subr.mxu0 0.0
      %1246 = vmatpush1.msra.mxu0 0.0
      %1247 = vmatprep.subr.mxu0 0.0
      %1248 = vmatpush1.msra.mxu0 0.0
      %1249 = vmatprep.subr.mxu0 0.0
      %1250 = vmatpush1.msra.mxu0 0.0
      %1251 = vmatprep.subr.mxu0 0.0
      %1252 = vmatpush1.msra.mxu0 0.0
      %1253 = vmatprep.subr.mxu0 0.0
      %1254 = vmatpush1.msra.mxu0 0.0
      %1255 = vmatprep.subr.mxu0 0.0
      %1256 = vmatpush1.msra.mxu0 0.0
      %1257 = vmatprep.subr.mxu0 0.0
      %1258 = vmatpush1.msra.mxu0 0.0
      %1259 = vmatprep.subr.mxu0 0.0
      %1260 = vmatpush1.msra.mxu0 0.0
      %1261 = vmatprep.subr.mxu0 0.0
      %1262 = vmatpush1.msra.mxu0 0.0
      %1263 = vmatprep.subr.mxu0 0.0
      %1264 = vmatpush1.msra.mxu0 0.0
      %1265 = vmatprep.subr.mxu0 0.0
      %1266 = vmatpush1.msra.mxu0 0.0
      %1267 = vmatprep.subr.mxu0 0.0
      %1268 = vmatpush1.msra.mxu0 0.0
      %1269 = vmatprep.subr.mxu0 0.0
      %1270 = vmatpush1.msra.mxu0 0.0
      %1271 = vmatprep.subr.mxu0 0.0
      %1272 = vmatpush1.msra.mxu0 0.0
      %1273 = vmatprep.subr.mxu0 0.0
      %1274 = vmatpush1.msra.mxu0 0.0
      %1275 = vmatprep.subr.mxu0 0.0
      %1276 = vmatpush1.msra.mxu0 0.0
      %1277 = vmatprep.subr.mxu0 0.0
      %1278 = vmatpush1.msra.mxu0 0.0
      %1279 = vmatprep.subr.mxu0 0.0
      %1280 = vmatpush1.msra.mxu0 0.0
      %1281 = vmatprep.subr.mxu0 0.0
      %1282 = vmatpush1.msra.mxu0 0.0
      %1283 = vmatprep.subr.mxu0 0.0
      %1284 = vmatpush1.msra.mxu0 0.0
      %1285 = vmatprep.subr.mxu0 0.0
      %1286 = vmatpush1.msra.mxu0 0.0
      %1287 = vmatprep.subr.mxu0 0.0
      %1288 = vmatpush1.msra.mxu0 0.0
      %1289 = vmatprep.subr.mxu0 0.0
      %1290 = vmatpush1.msra.mxu0 0.0
      %1291 = vmatprep.subr.mxu0 0.0
      %1292 = vmatpush1.msra.mxu0 0.0
      %1293 = vmatprep.subr.mxu0 0.0
      %1294 = vmatpush1.msra.mxu0 0.0
      %1295 = vmatprep.subr.mxu0 0.0
      %1296 = vmatpush1.msra.mxu0 0.0
      %1297 = vmatprep.subr.mxu0 0.0
      %1298 = vmatpush1.msra.mxu0 0.0
      %1299 = vmatprep.subr.mxu0 0.0
      %1300 = vmatpush1.msra.mxu0 0.0
      %1301 = vmatprep.subr.mxu0 0.0
      %1302 = vmatpush1.msra.mxu0 0.0
      %1303 = vmatprep.mubr.f32.mxu0 0.0
      %1304 = vmatmul.mubr.f32.gmra.mrb[0].mxu0 %v1234
      %v1305 = vpop.f32.mrb[0].mxu0
      %v1306 = vadd.f32 0.0, %v1305
      %v1307 = vpop.f32.mrb[0].mxu0
      %1308 = vmatprep.mubr.f32.mxu0 0.0
      %1309 = vmatmul.mubr.f32.gmra.mrb[0].mxu0 %v1237
      %v1310 = vpop.f32.mrb[0].mxu0
      %v1311 = vadd.f32 0.0, %v1310
      %v1312 = vpop.f32.mrb[0].mxu0
      %1313 = vdwg.mxu0
      %v1314 = vadd.f32 %v537, %v1306
      %v1315 = vadd.f32 %v542, %v1311
      %v1316 = vmul.f32 %v1314, %v731
      %v1317 = vmul.f32 %v1315, %v731
      %v1318 = vadd.f32 %v1316, %v739
      %v1319 = vadd.f32 %v1317, %v739
      %v1320 = vmax.f32 %v1318, 0.0
      %v1321 = vmax.f32 %v1319, 0.0
      %v1323 = vsel %vm751, %v1320, 0
      %v1326 = vsel %vm751, %v1321, 0
      %1328 = vmatprep.subr.mxu0 0.0
      %1329 = vmatpush1.msra.mxu0 %v451
      %1330 = vmatprep.subr.mxu0 0.0
      %1331 = vmatpush1.msra.mxu0 0.0
      %1332 = vmatprep.subr.mxu0 0.0
      %1333 = vmatpush1.msra.mxu0 0.0
      %1334 = vmatprep.subr.mxu0 0.0
      %1335 = vmatpush1.msra.mxu0 0.0
      %1336 = vmatprep.subr.mxu0 0.0
      %1337 = vmatpush1.msra.mxu0 0.0
      %1338 = vmatprep.subr.mxu0 0.0
      %1339 = vmatpush1.msra.mxu0 0.0
      %1340 = vmatprep.subr.mxu0 0.0
      %1341 = vmatpush1.msra.mxu0 0.0
      %1342 = vmatprep.subr.mxu0 0.0
      %1343 = vmatpush1.msra.mxu0 0.0
      %1344 = vmatprep.subr.mxu0 0.0
      %1345 = vmatpush1.msra.mxu0 0.0
      %1346 = vmatprep.subr.mxu0 0.0
      %1347 = vmatpush1.msra.mxu0 0.0
      %1348 = vmatprep.subr.mxu0 0.0
      %1349 = vmatpush1.msra.mxu0 0.0
      %1350 = vmatprep.subr.mxu0 0.0
      %1351 = vmatpush1.msra.mxu0 0.0
      %1352 = vmatprep.subr.mxu0 0.0
      %1353 = vmatpush1.msra.mxu0 0.0
      %1354 = vmatprep.subr.mxu0 0.0
      %1355 = vmatpush1.msra.mxu0 0.0
      %1356 = vmatprep.subr.mxu0 0.0
      %1357 = vmatpush1.msra.mxu0 0.0
      %1358 = vmatprep.subr.mxu0 0.0
      %1359 = vmatpush1.msra.mxu0 0.0
      %1360 = vmatprep.subr.mxu0 0.0
      %1361 = vmatpush1.msra.mxu0 0.0
      %1362 = vmatprep.subr.mxu0 0.0
      %1363 = vmatpush1.msra.mxu0 0.0
      %1364 = vmatprep.subr.mxu0 0.0
      %1365 = vmatpush1.msra.mxu0 0.0
      %1366 = vmatprep.subr.mxu0 0.0
      %1367 = vmatpush1.msra.mxu0 0.0
      %1368 = vmatprep.subr.mxu0 0.0
      %1369 = vmatpush1.msra.mxu0 0.0
      %1370 = vmatprep.subr.mxu0 0.0
      %1371 = vmatpush1.msra.mxu0 0.0
      %1372 = vmatprep.subr.mxu0 0.0
      %1373 = vmatpush1.msra.mxu0 0.0
      %1374 = vmatprep.subr.mxu0 0.0
      %1375 = vmatpush1.msra.mxu0 0.0
      %1376 = vmatprep.subr.mxu0 0.0
      %1377 = vmatpush1.msra.mxu0 0.0
      %1378 = vmatprep.subr.mxu0 0.0
      %1379 = vmatpush1.msra.mxu0 0.0
      %1380 = vmatprep.subr.mxu0 0.0
      %1381 = vmatpush1.msra.mxu0 0.0
      %1382 = vmatprep.subr.mxu0 0.0
      %1383 = vmatpush1.msra.mxu0 0.0
      %1384 = vmatprep.subr.mxu0 0.0
      %1385 = vmatpush1.msra.mxu0 0.0
      %1386 = vmatprep.subr.mxu0 0.0
      %1387 = vmatpush1.msra.mxu0 0.0
      %1388 = vmatprep.subr.mxu0 0.0
      %1389 = vmatpush1.msra.mxu0 0.0
      %1390 = vmatprep.subr.mxu0 0.0
      %1391 = vmatpush1.msra.mxu0 0.0
      %1392 = vmatprep.mubr.f32.mxu0 0.0
      %1393 = vmatmul.mubr.f32.gmra.mrb[0].mxu0 %v1323
      %v1394 = vpop.f32.mrb[0].mxu0
      %v1395 = vadd.f32 %v749, %v1394
      %v1396 = vpop.f32.mrb[0].mxu0
      %1397 = vmatprep.mubr.f32.mxu0 0.0
      %1398 = vmatmul.mubr.f32.gmra.mrb[0].mxu0 %v1326
      %v1399 = vpop.f32.mrb[0].mxu0
      %v1400 = vadd.f32 %v749, %v1399
      %v1401 = vpop.f32.mrb[0].mxu0
      %1402 = vdwg.mxu0
      %v1403 = vsel %vm559, %v1395, 0.0
      %v1404 = vsel %vm559, %v1400, 0.0
      %v1405 = vadd.f32 %v1403, %v1404
      %v1406 = vrot.slane %v1405, 4
      %v1407 = vadd.f32 %v1405, %v1406
      %v1408 = vrot.slane %v1407, 2
      %v1409 = vadd.f32 %v1407, %v1408
      %v1410 = vrot.slane %v1409, 1
      %v1411 = vadd.f32 %v1409, %v1410
      %v1412 = vadd.f32 %v1127, %v1411
      %v1413 = vmul.f32 %v1395, %v1395
      %v1414 = vmul.f32 %v1400, %v1400
      %v1415 = vsel %vm559, %v1413, 0.0
      %v1416 = vsel %vm559, %v1414, 0.0
      %v1417 = vadd.f32 %v1415, %v1416
      %v1418 = vrot.slane %v1417, 4
      %v1419 = vadd.f32 %v1417, %v1418
      %v1420 = vrot.slane %v1419, 2
      %v1421 = vadd.f32 %v1419, %v1420
      %v1422 = vrot.slane %v1421, 1
      %v1423 = vadd.f32 %v1421, %v1422
      %v1424 = vadd.f32 %v1139, %v1423
      %1425 = vset.pattern.permute.xlu0 3
      %1426 = vperm.xlu0 %1425, %v444
      %v1427 = vpop.permute.xlu0 %1426
      %1428 = vset.pattern.permute.xlu0 3
      %1429 = vperm.xlu0 %1428, %v445
      %v1430 = vpop.permute.xlu0 %1429
      %vm1431 = vcmp.eq.s32.totalorder %v1427, %v546
      %vm1432 = vcmp.eq.s32.totalorder %v1430, %v546
      %v1433 = vsel %vm1431, 1, 0
      %v1434 = vsel %vm1432, 1, 0
      %v1435 = vcvt.s32.f32 %v1433
      %v1436 = vcvt.s32.f32 %v1434
      %v1438 = vsel %vm559, %v1435, 0
      %v1441 = vsel %vm559, %v1436, 0
      %1443 = vmatprep.subr.mxu0 0.0
      %1444 = vmatpush1.msra.mxu0 %v442
      %1445 = vmatprep.subr.mxu0 0.0
      %1446 = vmatpush1.msra.mxu0 %v443
      %1447 = vmatprep.subr.mxu0 0.0
      %1448 = vmatpush1.msra.mxu0 0.0
      %1449 = vmatprep.subr.mxu0 0.0
      %1450 = vmatpush1.msra.mxu0 0.0
      %1451 = vmatprep.subr.mxu0 0.0
      %1452 = vmatpush1.msra.mxu0 0.0
      %1453 = vmatprep.subr.mxu0 0.0
      %1454 = vmatpush1.msra.mxu0 0.0
      %1455 = vmatprep.subr.mxu0 0.0
      %1456 = vmatpush1.msra.mxu0 0.0
      %1457 = vmatprep.subr.mxu0 0.0
      %1458 = vmatpush1.msra.mxu0 0.0
      %1459 = vmatprep.subr.mxu0 0.0
      %1460 = vmatpush1.msra.mxu0 0.0
      %1461 = vmatprep.subr.mxu0 0.0
      %1462 = vmatpush1.msra.mxu0 0.0
      %1463 = vmatprep.subr.mxu0 0.0
      %1464 = vmatpush1.msra.mxu0 0.0
      %1465 = vmatprep.subr.mxu0 0.0
      %1466 = vmatpush1.msra.mxu0 0.0
      %1467 = vmatprep.subr.mxu0 0.0
      %1468 = vmatpush1.msra.mxu0 0.0
      %1469 = vmatprep.subr.mxu0 0.0
      %1470 = vmatpush1.msra.mxu0 0.0
      %1471 = vmatprep.subr.mxu0 0.0
      %1472 = vmatpush1.msra.mxu0 0.0
      %1473 = vmatprep.subr.mxu0 0.0
      %1474 = vmatpush1.msra.mxu0 0.0
      %1475 = vmatprep.subr.mxu0 0.0
      %1476 = vmatpush1.msra.mxu0 0.0
      %1477 = vmatprep.subr.mxu0 0.0
      %1478 = vmatpush1.msra.mxu0 0.0
      %1479 = vmatprep.subr.mxu0 0.0
      %1480 = vmatpush1.msra.mxu0 0.0
      %1481 = vmatprep.subr.mxu0 0.0
      %1482 = vmatpush1.msra.mxu0 0.0
      %1483 = vmatprep.subr.mxu0 0.0
      %1484 = vmatpush1.msra.mxu0 0.0
      %1485 = vmatprep.subr.mxu0 0.0
      %1486 = vmatpush1.msra.mxu0 0.0
      %1487 = vmatprep.subr.mxu0 0.0
      %1488 = vmatpush1.msra.mxu0 0.0
      %1489 = vmatprep.subr.mxu0 0.0
      %1490 = vmatpush1.msra.mxu0 0.0
      %1491 = vmatprep.subr.mxu0 0.0
      %1492 = vmatpush1.msra.mxu0 0.0
      %1493 = vmatprep.subr.mxu0 0.0
      %1494 = vmatpush1.msra.mxu0 0.0
      %1495 = vmatprep.subr.mxu0 0.0
      %1496 = vmatpush1.msra.mxu0 0.0
      %1497 = vmatprep.subr.mxu0 0.0
      %1498 = vmatpush1.msra.mxu0 0.0
      %1499 = vmatprep.subr.mxu0 0.0
      %1500 = vmatpush1.msra.mxu0 0.0
      %1501 = vmatprep.subr.mxu0 0.0
      %1502 = vmatpush1.msra.mxu0 0.0
      %1503 = vmatprep.subr.mxu0 0.0
      %1504 = vmatpush1.msra.mxu0 0.0
      %1505 = vmatprep.subr.mxu0 0.0
      %1506 = vmatpush1.msra.mxu0 0.0
      %1507 = vmatprep.mubr.f32.mxu0 0.0
      %1508 = vmatmul.mubr.f32.gmra.mrb[0].mxu0 %v1438
      %v1509 = vpop.f32.mrb[0].mxu0
      %v1510 = vadd.f32 0.0, %v1509
      %v1511 = vpop.f32.mrb[0].mxu0
      %1512 = vmatprep.mubr.f32.mxu0 0.0
      %1513 = vmatmul.mubr.f32.gmra.mrb[0].mxu0 %v1441
      %v1514 = vpop.f32.mrb[0].mxu0
      %v1515 = vadd.f32 0.0, %v1514
      %v1516 = vpop.f32.mrb[0].mxu0
      %1517 = vdwg.mxu0
      %v1519 = vsel %vm459, %v1510, 0
      %v1522 = vsel %vm459, %v1515, 0
      %1524 = vmatprep.subr.mxu0 0.0
      %1525 = vmatpush1.msra.mxu0 %v648
      %1526 = vmatprep.subr.mxu0 0.0
      %1527 = vmatpush1.msra.mxu0 0.0
      %1528 = vmatprep.subr.mxu0 0.0
      %1529 = vmatpush1.msra.mxu0 0.0
      %1530 = vmatprep.subr.mxu0 0.0
      %1531 = vmatpush1.msra.mxu0 0.0
      %1532 = vmatprep.subr.mxu0 0.0
      %1533 = vmatpush1.msra.mxu0 0.0
      %1534 = vmatprep.subr.mxu0 0.0
      %1535 = vmatpush1.msra.mxu0 0.0
      %1536 = vmatprep.subr.mxu0 0.0
      %1537 = vmatpush1.msra.mxu0 0.0
      %1538 = vmatprep.subr.mxu0 0.0
      %1539 = vmatpush1.msra.mxu0 0.0
      %1540 = vmatprep.subr.mxu0 0.0
      %1541 = vmatpush1.msra.mxu0 0.0
      %1542 = vmatprep.subr.mxu0 0.0
      %1543 = vmatpush1.msra.mxu0 0.0
      %1544 = vmatprep.subr.mxu0 0.0
      %1545 = vmatpush1.msra.mxu0 0.0
      %1546 = vmatprep.subr.mxu0 0.0
      %1547 = vmatpush1.msra.mxu0 0.0
      %1548 = vmatprep.subr.mxu0 0.0
      %1549 = vmatpush1.msra.mxu0 0.0
      %1550 = vmatprep.subr.mxu0 0.0
      %1551 = vmatpush1.msra.mxu0 0.0
      %1552 = vmatprep.subr.mxu0 0.0
      %1553 = vmatpush1.msra.mxu0 0.0
      %1554 = vmatprep.subr.mxu0 0.0
      %1555 = vmatpush1.msra.mxu0 0.0
      %1556 = vmatprep.subr.mxu0 0.0
      %1557 = vmatpush1.msra.mxu0 0.0
      %1558 = vmatprep.subr.mxu0 0.0
      %1559 = vmatpush1.msra.mxu0 0.0
      %1560 = vmatprep.subr.mxu0 0.0
      %1561 = vmatpush1.msra.mxu0 0.0
      %1562 = vmatprep.subr.mxu0 0.0
      %1563 = vmatpush1.msra.mxu0 0.0
      %1564 = vmatprep.subr.mxu0 0.0
      %1565 = vmatpush1.msra.mxu0 0.0
      %1566 = vmatprep.subr.mxu0 0.0
      %1567 = vmatpush1.msra.mxu0 0.0
      %1568 = vmatprep.subr.mxu0 0.0
      %1569 = vmatpush1.msra.mxu0 0.0
      %1570 = vmatprep.subr.mxu0 0.0
      %1571 = vmatpush1.msra.mxu0 0.0
      %1572 = vmatprep.subr.mxu0 0.0
      %1573 = vmatpush1.msra.mxu0 0.0
      %1574 = vmatprep.subr.mxu0 0.0
      %1575 = vmatpush1.msra.mxu0 0.0
      %1576 = vmatprep.subr.mxu0 0.0
      %1577 = vmatpush1.msra.mxu0 0.0
      %1578 = vmatprep.subr.mxu0 0.0
      %1579 = vmatpush1.msra.mxu0 0.0
      %1580 = vmatprep.subr.mxu0 0.0
      %1581 = vmatpush1.msra.mxu0 0.0
      %1582 = vmatprep.subr.mxu0 0.0
      %1583 = vmatpush1.msra.mxu0 0.0
      %1584 = vmatprep.subr.mxu0 0.0
      %1585 = vmatpush1.msra.mxu0 0.0
      %1586 = vmatprep.subr.mxu0 0.0
      %1587 = vmatpush1.msra.mxu0 0.0
      %1588 = vmatprep.mubr.f32.mxu0 0.0
      %1589 = vmatmul.mubr.f32.gmra.mrb[0].mxu0 %v1519
      %v1590 = vpop.f32.mrb[0].mxu0
      %v1591 = vadd.f32 0.0, %v1590
      %v1592 = vpop.f32.mrb[0].mxu0
      %1593 = vmatprep.mubr.f32.mxu0 0.0
      %1594 = vmatmul.mubr.f32.gmra.mrb[0].mxu0 %v1522
      %v1595 = vpop.f32.mrb[0].mxu0
      %v1596 = vadd.f32 0.0, %v1595
      %v1597 = vpop.f32.mrb[0].mxu0
      %1598 = vdwg.mxu0
      %v1599 = vadd.f32 %v537, %v1591
      %v1600 = vadd.f32 %v542, %v1596
      %v1601 = vmul.f32 %v1599, %v731
      %v1602 = vmul.f32 %v1600, %v731
      %v1603 = vadd.f32 %v1601, %v739
      %v1604 = vadd.f32 %v1602, %v739
      %v1605 = vmax.f32 %v1603, 0.0
      %v1606 = vmax.f32 %v1604, 0.0
      %v1608 = vsel %vm751, %v1605, 0
      %v1611 = vsel %vm751, %v1606, 0
      %1613 = vmatprep.subr.mxu0 0.0
      %1614 = vmatpush1.msra.mxu0 %v451
      %1615 = vmatprep.subr.mxu0 0.0
      %1616 = vmatpush1.msra.mxu0 0.0
      %1617 = vmatprep.subr.mxu0 0.0
      %1618 = vmatpush1.msra.mxu0 0.0
      %1619 = vmatprep.subr.mxu0 0.0
      %1620 = vmatpush1.msra.mxu0 0.0
      %1621 = vmatprep.subr.mxu0 0.0
      %1622 = vmatpush1.msra.mxu0 0.0
      %1623 = vmatprep.subr.mxu0 0.0
      %1624 = vmatpush1.msra.mxu0 0.0
      %1625 = vmatprep.subr.mxu0 0.0
      %1626 = vmatpush1.msra.mxu0 0.0
      %1627 = vmatprep.subr.mxu0 0.0
      %1628 = vmatpush1.msra.mxu0 0.0
      %1629 = vmatprep.subr.mxu0 0.0
      %1630 = vmatpush1.msra.mxu0 0.0
      %1631 = vmatprep.subr.mxu0 0.0
      %1632 = vmatpush1.msra.mxu0 0.0
      %1633 = vmatprep.subr.mxu0 0.0
      %1634 = vmatpush1.msra.mxu0 0.0
      %1635 = vmatprep.subr.mxu0 0.0
      %1636 = vmatpush1.msra.mxu0 0.0
      %1637 = vmatprep.subr.mxu0 0.0
      %1638 = vmatpush1.msra.mxu0 0.0
      %1639 = vmatprep.subr.mxu0 0.0
      %1640 = vmatpush1.msra.mxu0 0.0
      %1641 = vmatprep.subr.mxu0 0.0
      %1642 = vmatpush1.msra.mxu0 0.0
      %1643 = vmatprep.subr.mxu0 0.0
      %1644 = vmatpush1.msra.mxu0 0.0
      %1645 = vmatprep.subr.mxu0 0.0
      %1646 = vmatpush1.msra.mxu0 0.0
      %1647 = vmatprep.subr.mxu0 0.0
      %1648 = vmatpush1.msra.mxu0 0.0
      %1649 = vmatprep.subr.mxu0 0.0
      %1650 = vmatpush1.msra.mxu0 0.0
      %1651 = vmatprep.subr.mxu0 0.0
      %1652 = vmatpush1.msra.mxu0 0.0
      %1653 = vmatprep.subr.mxu0 0.0
      %1654 = vmatpush1.msra.mxu0 0.0
      %1655 = vmatprep.subr.mxu0 0.0
      %1656 = vmatpush1.msra.mxu0 0.0
      %1657 = vmatprep.subr.mxu0 0.0
      %1658 = vmatpush1.msra.mxu0 0.0
      %1659 = vmatprep.subr.mxu0 0.0
      %1660 = vmatpush1.msra.mxu0 0.0
      %1661 = vmatprep.subr.mxu0 0.0
      %1662 = vmatpush1.msra.mxu0 0.0
      %1663 = vmatprep.subr.mxu0 0.0
      %1664 = vmatpush1.msra.mxu0 0.0
      %1665 = vmatprep.subr.mxu0 0.0
      %1666 = vmatpush1.msra.mxu0 0.0
      %1667 = vmatprep.subr.mxu0 0.0
      %1668 = vmatpush1.msra.mxu0 0.0
      %1669 = vmatprep.subr.mxu0 0.0
      %1670 = vmatpush1.msra.mxu0 0.0
      %1671 = vmatprep.subr.mxu0 0.0
      %1672 = vmatpush1.msra.mxu0 0.0
      %1673 = vmatprep.subr.mxu0 0.0
      %1674 = vmatpush1.msra.mxu0 0.0
      %1675 = vmatprep.subr.mxu0 0.0
      %1676 = vmatpush1.msra.mxu0 0.0
      %1677 = vmatprep.mubr.f32.mxu0 0.0
      %1678 = vmatmul.mubr.f32.gmra.mrb[0].mxu0 %v1608
      %v1679 = vpop.f32.mrb[0].mxu0
      %v1680 = vadd.f32 %v749, %v1679
      %v1681 = vpop.f32.mrb[0].mxu0
      %1682 = vmatprep.mubr.f32.mxu0 0.0
      %1683 = vmatmul.mubr.f32.gmra.mrb[0].mxu0 %v1611
      %v1684 = vpop.f32.mrb[0].mxu0
      %v1685 = vadd.f32 %v749, %v1684
      %v1686 = vpop.f32.mrb[0].mxu0
      %1687 = vdwg.mxu0
      %v1688 = vsel %vm559, %v1680, 0.0
      %v1689 = vsel %vm559, %v1685, 0.0
      %v1690 = vadd.f32 %v1688, %v1689
      %v1691 = vrot.slane %v1690, 4
      %v1692 = vadd.f32 %v1690, %v1691
      %v1693 = vrot.slane %v1692, 2
      %v1694 = vadd.f32 %v1692, %v1693
      %v1695 = vrot.slane %v1694, 1
      %v1696 = vadd.f32 %v1694, %v1695
      %v1697 = vadd.f32 %v1412, %v1696
      %v1698 = vmul.f32 %v1680, %v1680
      %v1699 = vmul.f32 %v1685, %v1685
      %v1700 = vsel %vm559, %v1698, 0.0
      %v1701 = vsel %vm559, %v1699, 0.0
      %v1702 = vadd.f32 %v1700, %v1701
      %v1703 = vrot.slane %v1702, 4
      %v1704 = vadd.f32 %v1702, %v1703
      %v1705 = vrot.slane %v1704, 2
      %v1706 = vadd.f32 %v1704, %v1705
      %v1707 = vrot.slane %v1706, 1
      %v1708 = vadd.f32 %v1706, %v1707
      %v1709 = vadd.f32 %v1424, %v1708
      %v1710 = vld [vmem:[%s10] sm:$0x3]
      %vm1711 = vcmask 1040384
      %v1712 = vsel %vm1711, %v1697, %v1709
      %v1713 = vadd.f32 %v1710, %v1712
      %vm1714 = vcmask 123904
      %1715 = vst.msk [vmem:[%s10] sm:$0x3] %vm1714, %v1713
      // Predicated region
      $region65: #{edge_conv.6} parent=59 // pred_check
        _
      $region66: #{edge_conv.6} parent=59 // pred_check_branch
        %1717 = sbr.rel (%p434) target = $region68
      $region67: #{edge_conv.6} parent=59 // pred_region
        %v1718 = vld [vmem:[%s10] sm:$0x3]
        %v1719 = vmul.f32 %v1718, 0.0078125
        %v1720 = vmul.f32 %v1719, %v1719
        %v1722 = vrot.slane %v1720, 7
        %v1724 = vsub.f32 %v1719, %v1722
        %v1725 = vmax.f32 %v1724, 0.0
        %v1726 = vsel %vm1711, %v1719, %v1725
        %1727 = vst.msk [vmem:[%s10] sm:$0x3] %vm1714, %v1726
      $region68: #{edge_conv.6} parent=59 // pred_fallthru
        _
      // Predicated region
      $region69: #{edge_conv.6} parent=59 // pred_check
        %p1728 = pneg %p275
      $region70: #{edge_conv.6} parent=59 // pred_check_branch
        %1730 = sbr.rel (%p1728) target = $region72
      $region71: #{edge_conv.6} parent=59 // pred_region
        _
      $region72: #{edge_conv.6} parent=59 // pred_fallthru
        _
      // Predicated region
      $region73: #{edge_conv.6} parent=59 // pred_check
        %p1731 = pneg %p275
      $region74: #{edge_conv.6} parent=59 // pred_check_branch
        %1733 = sbr.rel (%p1731) target = $region76
      $region75: #{edge_conv.6} parent=59 // pred_region
        _
      $region76: #{edge_conv.6} parent=59 // pred_fallthru
        _
    $region60: #{edge_conv.6} parent=5 // pred_fallthru
      _
    %p1734 = scmp.le.s32.totalorder 2, %s16
    // Predicated region
    $region77: #{edge_conv.6} parent=5 // pred_check
      %p1735 = pneg %p1734
    $region78: #{edge_conv.6} parent=5 // pred_check_branch
      %1737 = sbr.rel (%p1735) target = $region80
    $region79: #{edge_conv.6} parent=5 // pred_region
      %s1738 = ssub.s32 %s16, 2
    $region80: #{edge_conv.6} parent=5 // pred_fallthru
      _
  $region6: #{edge_conv.6} parent=0 // loop_footer
    %s20 = sadd.s32 1, %s16
  $region7: #{edge_conv.6} parent=0 // loop_footer_branch
    %15 = sbr.rel target = $region3
  $region8: #{edge_conv.6} parent=0 // loop_exit
    _

// kernel: edge_conv.7
$region0: #{edge_conv.7}
  #allocation0 [shape = 'u32[]', space=smem, size = 0x4, offset = 0x4, fixed_abs, tag = 'smem constant byte address 0x4 - core index']
  #allocation1 [shape = 'u32[144,128]{1,0:T(1,128)}', space=vmem, size = 0x12000, scoped, tag = 'internal scratch']
  %s0 = inlined_call_operand.vmem [shape: f32[2,16,4], index: 0, kind: input, shape index: {}, may-alias: {0,1}]
  %s1 = inlined_call_operand.vmem [shape: f32[2,16,4], index: 1, kind: input, shape index: {}, may-alias: {0,1}]
  %s2 = inlined_call_operand.vmem [shape: s32[2,16,4], index: 2, kind: input, shape index: {}]
  %s3 = inlined_call_operand.vmem [shape: f32[4,8], index: 3, kind: input, shape index: {}]
  %s4 = inlined_call_operand.vmem [shape: f32[4,8], index: 4, kind: input, shape index: {}]
  %s5 = inlined_call_operand.vmem [shape: f32[1,8], index: 5, kind: input, shape index: {}]
  %s6 = inlined_call_operand.vmem [shape: f32[1,8], index: 6, kind: input, shape index: {}]
  %s7 = inlined_call_operand.vmem [shape: f32[1,8], index: 7, kind: input, shape index: {}]
  %s8 = inlined_call_operand.vmem [shape: f32[8,16], index: 8, kind: input, shape index: {}]
  %s9 = inlined_call_operand.vmem [shape: f32[1,16], index: 9, kind: input, shape index: {}]
  %s10 = inlined_call_operand.vmem [shape: f32[1,16], index: 10, kind: input, shape index: {}]
  %s11 = inlined_call_operand.vmem [shape: f32[1,16], index: 11, kind: input, shape index: {}]
  %s12 = inlined_call_operand.hbm [shape: f32[2,16,16], index: 12, kind: output, shape index: {}]
  %s13 = sld [smem:[#allocation0]]
  $region81: #{edge_conv.7} parent=0
    _
  %s15 = ssub.s32 1, %s13
  %s16 = scalar_select 0, %s15, %s13
  $region1: #{edge_conv.7} parent=0
    #allocation2 [shape = 'u8[16384]{0}', space=vmem, size = 0x4000, scoped, tag = 'output window, operand 0']
    #allocation3 [shape = 's32[2]{0}', space=sflag, size = 0x8, scoped, tag = 'scoped memory for edge_conv.7']
    %17 = vsyncpa [#allocation3], 0
    %s18 = scalar_lea.sflag [#allocation3], 1
    %19 = vsyncpa %s18, 0
    loop: start=0, step=1, limit=4
    $region2: #{edge_conv.7} parent=1 // loop_pre_header
      _
    $region3: #{edge_conv.7} parent=1 // loop_header
      %s21 = sphi 0, %s25
      %p22 = scmp.ge.s32.totalorder %s21, 4
      %s28 = sphi 0, %s40
      %s29 = sphi 0, %s36
      %s30 = sphi 0, %s28
      %s31 = sphi 0, %s29
      %s32 = sphi 0, %s30
      %s33 = sphi 0, %s31
      %s45 = sphi 0, %s47
      %s48 = sphi 0, %s45
      %s49 = sphi 0, %s48
      %s65 = sphi 0, %s49
      %s71 = sphi 0, %s73
      %s74 = sphi 0, %s71
      %s75 = sphi 0, %s74
      %s91 = sphi 0, %s75
      %s99 = sphi 0, %s101
      %s102 = sphi 0, %s99
      %s103 = sphi 0, %s102
      %s119 = sphi 0, %s103
      %s123 = sphi 0, %s123
      %s125 = sphi 0, %s123
      %s126 = sphi 0, %s125
      %s140 = sphi 0, %s126
      %s144 = sphi 0, %s144
      %s146 = sphi 0, %s144
      %s147 = sphi 0, %s146
      %s161 = sphi 0, %s147
      %s165 = sphi 0, %s165
      %s167 = sphi 0, %s165
      %s168 = sphi 0, %s167
      %s182 = sphi 0, %s168
      %s186 = sphi 0, %s186
      %s188 = sphi 0, %s186
      %s189 = sphi 0, %s188
      %s203 = sphi 0, %s189
      %s207 = sphi 0, %s207
      %s209 = sphi 0, %s207
      %s210 = sphi 0, %s209
      %s224 = sphi 0, %s210
      %s228 = sphi 0, %s228
      %s230 = sphi 0, %s228
      %s231 = sphi 0, %s230
      %s245 = sphi 0, %s231
      %s249 = sphi 0, %s249
      %s251 = sphi 0, %s249
      %s252 = sphi 0, %s251
      %s266 = sphi 0, %s252
      %s270 = sphi 0, %s270
      %s272 = sphi 0, %s270
      %s273 = sphi 0, %s272
      %s287 = sphi 0, %s273
      %s291 = sphi 0, %s291
      %s293 = sphi 0, %s291
      %s294 = sphi 0, %s293
      %s308 = sphi 0, %s294
      %s316 = sphi 0, %s318
      %s319 = sphi 0, %s316
      %s320 = sphi 0, %s319
      %s336 = sphi 0, %s320
    $region4: #{edge_conv.7} parent=1 // loop_header_branch
      %24 = sbr.rel (%p22) target = $region8
    $region5: #{edge_conv.7} parent=1 // loop_body
      %s26 = ssub.s32 %s21, 1
      %s27 = ssub.s32 %s21, 2
      %s34 = sadd.s32 1, %s29
      %p35 = scmp.ge.s32.totalorder %s34, 1
      %s36 = scalar_select %p35, 0, %s34
      %s37 = sadd.s32 1, %s28
      %s38 = scalar_select %p35, %s37, %s28
      %p39 = scmp.ge.s32.totalorder %s38, 2
      %s40 = scalar_select %p39, 0, %s38
      %s41 = ssub.s32 %s28, %s40
      %s42 = ssub.s32 %s29, %s36
      %s43 = sor.u32 %s41, %s42
      %p44 = scmp.eq.s32.totalorder %s43, 0
      %s46 = sadd.s32 %s45, 1
      %s47 = scalar_select %p44, %s45, %s46
      %p50 = pneg %p44
      %p51 = scmp.eq.s32.totalorder %s21, 1
      %p52 = por %p50, %p51
      %p53 = scmp.ne.s32.totalorder %s45, %s48
      %p54 = scmp.eq.s32.totalorder %s21, 0
      %p55 = por %p53, %p54
      %p56 = scmp.ne.s32.totalorder %s45, %s48
      %p57 = scmp.eq.s32.totalorder %s26, 1
      %p58 = por %p56, %p57
      %p59 = scmp.ne.s32.totalorder %s48, %s49
      %p60 = scmp.eq.s32.totalorder %s26, 0
      %p61 = por %p59, %p60
      %p62 = scmp.ne.s32.totalorder %s48, %s49
      %p63 = scmp.eq.s32.totalorder %s27, 1
      %p64 = por %p62, %p63
      %p66 = scmp.ne.s32.totalorder %s49, %s65
      %p67 = scmp.eq.s32.totalorder %s27, 0
      %p68 = por %p66, %p67
      %s69 = ssub.s32 %s28, %s40
      %p70 = scmp.eq.s32.totalorder %s69, 0
      %s72 = sadd.s32 %s71, 1
      %s73 = scalar_select %p70, %s71, %s72
      %p76 = pneg %p70
      %p77 = scmp.eq.s32.totalorder %s21, 1
      %p78 = por %p76, %p77
      %p79 = scmp.ne.s32.totalorder %s71, %s74
      %p80 = scmp.eq.s32.totalorder %s21, 0
      %p81 = por %p79, %p80
      %p82 = scmp.ne.s32.totalorder %s71, %s74
      %p83 = scmp.eq.s32.totalorder %s26, 1
      %p84 = por %p82, %p83
      %p85 = scmp.ne.s32.totalorder %s74, %s75
      %p86 = scmp.eq.s32.totalorder %s26, 0
      %p87 = por %p85, %p86
      %p88 = scmp.ne.s32.totalorder %s74, %s75
      %p89 = scmp.eq.s32.totalorder %s27, 1
      %p90 = por %p88, %p89
      %p92 = scmp.ne.s32.totalorder %s75, %s91
      %p93 = scmp.eq.s32.totalorder %s27, 0
      %p94 = por %p92, %p93
      %s95 = ssub.s32 %s28, %s40
      %s96 = ssub.s32 %s29, %s36
      %s97 = sor.u32 %s95, %s96
      %p98 = scmp.eq.s32.totalorder %s97, 0
      %s100 = sadd.s32 %s99, 1
      %s101 = scalar_select %p98, %s99, %s100
      %p104 = pneg %p98
      %p105 = scmp.eq.s32.totalorder %s21, 1
      %p106 = por %p104, %p105
      %p107 = scmp.ne.s32.totalorder %s99, %s102
      %p108 = scmp.eq.s32.totalorder %s21, 0
      %p109 = por %p107, %p108
      %p110 = scmp.ne.s32.totalorder %s99, %s102
      %p111 = scmp.eq.s32.totalorder %s26, 1
      %p112 = por %p110, %p111
      %p113 = scmp.ne.s32.totalorder %s102, %s103
      %p114 = scmp.eq.s32.totalorder %s26, 0
      %p115 = por %p113, %p114
      %p116 = scmp.ne.s32.totalorder %s102, %s103
      %p117 = scmp.eq.s32.totalorder %s27, 1
      %p118 = por %p116, %p117
      %p120 = scmp.ne.s32.totalorder %s103, %s119
      %p121 = scmp.eq.s32.totalorder %s27, 0
      %p122 = por %p120, %p121
      %s124 = sadd.s32 %s123, 1
      %p127 = scmp.eq.s32.totalorder %s21, 1
      %p128 = scmp.ne.s32.totalorder %s123, %s125
      %p129 = scmp.eq.s32.totalorder %s21, 0
      %p130 = por %p128, %p129
      %p131 = scmp.ne.s32.totalorder %s123, %s125
      %p132 = scmp.eq.s32.totalorder %s26, 1
      %p133 = por %p131, %p132
      %p134 = scmp.ne.s32.totalorder %s125, %s126
      %p135 = scmp.eq.s32.totalorder %s26, 0
      %p136 = por %p134, %p135
      %p137 = scmp.ne.s32.totalorder %s125, %s126
      %p138 = scmp.eq.s32.totalorder %s27, 1
      %p139 = por %p137, %p138
      %p141 = scmp.ne.s32.totalorder %s126, %s140
      %p142 = scmp.eq.s32.totalorder %s27, 0
      %p143 = por %p141, %p142
      %s145 = sadd.s32 %s144, 1
      %p148 = scmp.eq.s32.totalorder %s21, 1
      %p149 = scmp.ne.s32.totalorder %s144, %s146
      %p150 = scmp.eq.s32.totalorder %s21, 0
      %p151 = por %p149, %p150
      %p152 = scmp.ne.s32.totalorder %s144, %s146
      %p153 = scmp.eq.s32.totalorder %s26, 1
      %p154 = por %p152, %p153
      %p155 = scmp.ne.s32.totalorder %s146, %s147
      %p156 = scmp.eq.s32.totalorder %s26, 0
      %p157 = por %p155, %p156
      %p158 = scmp.ne.s32.totalorder %s146, %s147
      %p159 = scmp.eq.s32.totalorder %s27, 1
      %p160 = por %p158, %p159
      %p162 = scmp.ne.s32.totalorder %s147, %s161
      %p163 = scmp.eq.s32.totalorder %s27, 0
      %p164 = por %p162, %p163
      %s166 = sadd.s32 %s165, 1
      %p169 = scmp.eq.s32.totalorder %s21, 1
      %p170 = scmp.ne.s32.totalorder %s165, %s167
      %p171 = scmp.eq.s32.totalorder %s21, 0
      %p172 = por %p170, %p171
      %p173 = scmp.ne.s32.totalorder %s165, %s167
      %p174 = scmp.eq.s32.totalorder %s26, 1
      %p175 = por %p173, %p174
      %p176 = scmp.ne.s32.totalorder %s167, %s168
      %p177 = scmp.eq.s32.totalorder %s26, 0
      %p178 = por %p176, %p177
      %p179 = scmp.ne.s32.totalorder %s167, %s168
      %p180 = scmp.eq.s32.totalorder %s27, 1
      %p181 = por %p179, %p180
      %p183 = scmp.ne.s32.totalorder %s168, %s182
      %p184 = scmp.eq.s32.totalorder %s27, 0
      %p185 = por %p183, %p184
      %s187 = sadd.s32 %s186, 1
      %p190 = scmp.eq.s32.totalorder %s21, 1
      %p191 = scmp.ne.s32.totalorder %s186, %s188
      %p192 = scmp.eq.s32.totalorder %s21, 0
      %p193 = por %p191, %p192
      %p194 = scmp.ne.s32.totalorder %s186, %s188
      %p195 = scmp.eq.s32.totalorder %s26, 1
      %p196 = por %p194, %p195
      %p197 = scmp.ne.s32.totalorder %s188, %s189
      %p198 = scmp.eq.s32.totalorder %s26, 0
      %p199 = por %p197, %p198
      %p200 = scmp.ne.s32.totalorder %s188, %s189
      %p201 = scmp.eq.s32.totalorder %s27, 1
      %p202 = por %p200, %p201
      %p204 = scmp.ne.s32.totalorder %s189, %s203
      %p205 = scmp.eq.s32.totalorder %s27, 0
      %p206 = por %p204, %p205
      %s208 = sadd.s32 %s207, 1
      %p211 = scmp.eq.s32.totalorder %s21, 1
      %p212 = scmp.ne.s32.totalorder %s207, %s209
      %p213 = scmp.eq.s32.totalorder %s21, 0
      %p214 = por %p212, %p213
      %p215 = scmp.ne.s32.totalorder %s207, %s209
      %p216 = scmp.eq.s32.totalorder %s26, 1
      %p217 = por %p215, %p216
      %p218 = scmp.ne.s32.totalorder %s209, %s210
      %p219 = scmp.eq.s32.totalorder %s26, 0
      %p220 = por %p218, %p219
      %p221 = scmp.ne.s32.totalorder %s209, %s210
      %p222 = scmp.eq.s32.totalorder %s27, 1
      %p223 = por %p221, %p222
      %p225 = scmp.ne.s32.totalorder %s210, %s224
      %p226 = scmp.eq.s32.totalorder %s27, 0
      %p227 = por %p225, %p226
      %s229 = sadd.s32 %s228, 1
      %p232 = scmp.eq.s32.totalorder %s21, 1
      %p233 = scmp.ne.s32.totalorder %s228, %s230
      %p234 = scmp.eq.s32.totalorder %s21, 0
      %p235 = por %p233, %p234
      %p236 = scmp.ne.s32.totalorder %s228, %s230
      %p237 = scmp.eq.s32.totalorder %s26, 1
      %p238 = por %p236, %p237
      %p239 = scmp.ne.s32.totalorder %s230, %s231
      %p240 = scmp.eq.s32.totalorder %s26, 0
      %p241 = por %p239, %p240
      %p242 = scmp.ne.s32.totalorder %s230, %s231
      %p243 = scmp.eq.s32.totalorder %s27, 1
      %p244 = por %p242, %p243
      %p246 = scmp.ne.s32.totalorder %s231, %s245
      %p247 = scmp.eq.s32.totalorder %s27, 0
      %p248 = por %p246, %p247
      %s250 = sadd.s32 %s249, 1
      %p253 = scmp.eq.s32.totalorder %s21, 1
      %p254 = scmp.ne.s32.totalorder %s249, %s251
      %p255 = scmp.eq.s32.totalorder %s21, 0
      %p256 = por %p254, %p255
      %p257 = scmp.ne.s32.totalorder %s249, %s251
      %p258 = scmp.eq.s32.totalorder %s26, 1
      %p259 = por %p257, %p258
      %p260 = scmp.ne.s32.totalorder %s251, %s252
      %p261 = scmp.eq.s32.totalorder %s26, 0
      %p262 = por %p260, %p261
      %p263 = scmp.ne.s32.totalorder %s251, %s252
      %p264 = scmp.eq.s32.totalorder %s27, 1
      %p265 = por %p263, %p264
      %p267 = scmp.ne.s32.totalorder %s252, %s266
      %p268 = scmp.eq.s32.totalorder %s27, 0
      %p269 = por %p267, %p268
      %s271 = sadd.s32 %s270, 1
      %p274 = scmp.eq.s32.totalorder %s21, 1
      %p275 = scmp.ne.s32.totalorder %s270, %s272
      %p276 = scmp.eq.s32.totalorder %s21, 0
      %p277 = por %p275, %p276
      %p278 = scmp.ne.s32.totalorder %s270, %s272
      %p279 = scmp.eq.s32.totalorder %s26, 1
      %p280 = por %p278, %p279
      %p281 = scmp.ne.s32.totalorder %s272, %s273
      %p282 = scmp.eq.s32.totalorder %s26, 0
      %p283 = por %p281, %p282
      %p284 = scmp.ne.s32.totalorder %s272, %s273
      %p285 = scmp.eq.s32.totalorder %s27, 1
      %p286 = por %p284, %p285
      %p288 = scmp.ne.s32.totalorder %s273, %s287
      %p289 = scmp.eq.s32.totalorder %s27, 0
      %p290 = por %p288, %p289
      %s292 = sadd.s32 %s291, 1
      %p295 = scmp.eq.s32.totalorder %s21, 1
      %p296 = scmp.ne.s32.totalorder %s291, %s293
      %p297 = scmp.eq.s32.totalorder %s21, 0
      %p298 = por %p296, %p297
      %p299 = scmp.ne.s32.totalorder %s291, %s293
      %p300 = scmp.eq.s32.totalorder %s26, 1
      %p301 = por %p299, %p300
      %p302 = scmp.ne.s32.totalorder %s293, %s294
      %p303 = scmp.eq.s32.totalorder %s26, 0
      %p304 = por %p302, %p303
      %p305 = scmp.ne.s32.totalorder %s293, %s294
      %p306 = scmp.eq.s32.totalorder %s27, 1
      %p307 = por %p305, %p306
      %p309 = scmp.ne.s32.totalorder %s294, %s308
      %p310 = scmp.eq.s32.totalorder %s27, 0
      %p311 = por %p309, %p310
      %s312 = ssub.s32 %s28, %s40
      %s313 = ssub.s32 %s29, %s36
      %s314 = sor.u32 %s312, %s313
      %p315 = scmp.eq.s32.totalorder %s314, 0
      %s317 = sadd.s32 %s316, 1
      %s318 = scalar_select %p315, %s316, %s317
      %p321 = pneg %p315
      %p322 = scmp.eq.s32.totalorder %s21, 1
      %p323 = por %p321, %p322
      %p324 = scmp.ne.s32.totalorder %s316, %s319
      %p325 = scmp.eq.s32.totalorder %s21, 0
      %p326 = por %p324, %p325
      %p327 = scmp.ne.s32.totalorder %s316, %s319
      %p328 = scmp.eq.s32.totalorder %s26, 1
      %p329 = por %p327, %p328
      %p330 = scmp.ne.s32.totalorder %s319, %s320
      %p331 = scmp.eq.s32.totalorder %s26, 0
      %p332 = por %p330, %p331
      %p333 = scmp.ne.s32.totalorder %s319, %s320
      %p334 = scmp.eq.s32.totalorder %s27, 1
      %p335 = por %p333, %p334
      %p337 = scmp.ne.s32.totalorder %s320, %s336
      %p338 = scmp.eq.s32.totalorder %s27, 0
      %p339 = por %p337, %p338
      %p340 = scmp.le.s32.totalorder 1, %s21
      %p341 = scmp.lt.s32.totalorder %s21, 3
      %p342 = pnand %p340, %p341
      %p343 = pneg %p342
      // Predicated region
      $region9: #{edge_conv.7} parent=5 // pred_check
        _
      $region10: #{edge_conv.7} parent=5 // pred_check_branch
        %345 = sbr.rel (%p342) target = $region12
      $region11: #{edge_conv.7} parent=5 // pred_region
        %s346 = ssub.s32 %s21, 1
        // Predicated region
        $region13: #{edge_conv.7} parent=11 // pred_check
          %p347 = pneg %p136
        $region14: #{edge_conv.7} parent=11 // pred_check_branch
          %349 = sbr.rel (%p347) target = $region16
        $region15: #{edge_conv.7} parent=11 // pred_region
          _
        $region16: #{edge_conv.7} parent=11 // pred_fallthru
          _
        // Predicated region
        $region17: #{edge_conv.7} parent=11 // pred_check
          %p350 = pneg %p157
        $region18: #{edge_conv.7} parent=11 // pred_check_branch
          %352 = sbr.rel (%p350) target = $region20
        $region19: #{edge_conv.7} parent=11 // pred_region
          _
        $region20: #{edge_conv.7} parent=11 // pred_fallthru
          _
        // Predicated region
        $region21: #{edge_conv.7} parent=11 // pred_check
          %p353 = pneg %p178
        $region22: #{edge_conv.7} parent=11 // pred_check_branch
          %355 = sbr.rel (%p353) target = $region24
        $region23: #{edge_conv.7} parent=11 // pred_region
          _
        $region24: #{edge_conv.7} parent=11 // pred_fallthru
          _
        // Predicated region
        $region25: #{edge_conv.7} parent=11 // pred_check
          %p356 = pneg %p199
        $region26: #{edge_conv.7} parent=11 // pred_check_branch
          %358 = sbr.rel (%p356) target = $region28
        $region27: #{edge_conv.7} parent=11 // pred_region
          _
        $region28: #{edge_conv.7} parent=11 // pred_fallthru
          _
        // Predicated region
        $region29: #{edge_conv.7} parent=11 // pred_check
          %p359 = pneg %p220
        $region30: #{edge_conv.7} parent=11 // pred_check_branch
          %361 = sbr.rel (%p359) target = $region32
        $region31: #{edge_conv.7} parent=11 // pred_region
          _
        $region32: #{edge_conv.7} parent=11 // pred_fallthru
          _
        // Predicated region
        $region33: #{edge_conv.7} parent=11 // pred_check
          %p362 = pneg %p241
        $region34: #{edge_conv.7} parent=11 // pred_check_branch
          %364 = sbr.rel (%p362) target = $region36
        $region35: #{edge_conv.7} parent=11 // pred_region
          _
        $region36: #{edge_conv.7} parent=11 // pred_fallthru
          _
        // Predicated region
        $region37: #{edge_conv.7} parent=11 // pred_check
          %p365 = pneg %p262
        $region38: #{edge_conv.7} parent=11 // pred_check_branch
          %367 = sbr.rel (%p365) target = $region40
        $region39: #{edge_conv.7} parent=11 // pred_region
          _
        $region40: #{edge_conv.7} parent=11 // pred_fallthru
          _
        // Predicated region
        $region41: #{edge_conv.7} parent=11 // pred_check
          %p368 = pneg %p283
        $region42: #{edge_conv.7} parent=11 // pred_check_branch
          %370 = sbr.rel (%p368) target = $region44
        $region43: #{edge_conv.7} parent=11 // pred_region
          _
        $region44: #{edge_conv.7} parent=11 // pred_fallthru
          _
        // Predicated region
        $region45: #{edge_conv.7} parent=11 // pred_check
          %p371 = pneg %p304
        $region46: #{edge_conv.7} parent=11 // pred_check_branch
          %373 = sbr.rel (%p371) target = $region48
        $region47: #{edge_conv.7} parent=11 // pred_region
          _
        $region48: #{edge_conv.7} parent=11 // pred_fallthru
          _
      $region12: #{edge_conv.7} parent=5 // pred_fallthru
        _
      %p374 = scmp.lt.s32.totalorder %s21, 2
      // Predicated region
      $region49: #{edge_conv.7} parent=5 // pred_check
        %p375 = pneg %p374
      $region50: #{edge_conv.7} parent=5 // pred_check_branch
        %377 = sbr.rel (%p375) target = $region52
      $region51: #{edge_conv.7} parent=5 // pred_region
        // Predicated region
        $region53: #{edge_conv.7} parent=51 // pred_check
          %p378 = pneg %p55
        $region54: #{edge_conv.7} parent=51 // pred_check_branch
          %380 = sbr.rel (%p378) target = $region56
        $region55: #{edge_conv.7} parent=51 // pred_region
          %s381 = smul.u32 2, %s29
          %p382 = scmp.lt.s32.totalorder %s28, 1
          %s383 = scalar_select %p382, %s28, 1
          %p384 = scmp.lt.s32.totalorder %s381, 1
          %s385 = scalar_select %p384, %s381, 1
          %s386 = smul.addr %s383, 2
          %s387 = sadd.s32 %s385, %s386
          %s388 = smul.addr %s387, 8
          %s389 = scalar_lea.vmem %s0, %s388
          %s390 = smul.u32 2, %s29
        $region56: #{edge_conv.7} parent=51 // pred_fallthru
          _
        // Predicated region
        $region57: #{edge_conv.7} parent=51 // pred_check
          %p391 = pneg %p81
        $region58: #{edge_conv.7} parent=51 // pred_check_branch
          %393 = sbr.rel (%p391) target = $region60
        $region59: #{edge_conv.7} parent=51 // pred_region
          %p394 = scmp.lt.s32.totalorder %s28, 1
          %s395 = scalar_select %p394, %s28, 1
          %s396 = smul.addr %s395, 2
          %s397 = smul.addr %s396, 8
          %s398 = scalar_lea.vmem %s1, %s397
        $region60: #{edge_conv.7} parent=51 // pred_fallthru
          _
        // Predicated region
        $region61: #{edge_conv.7} parent=51 // pred_check
          %p399 = pneg %p109
        $region62: #{edge_conv.7} parent=51 // pred_check_branch
          %401 = sbr.rel (%p399) target = $region64
        $region63: #{edge_conv.7} parent=51 // pred_region
          %s402 = smul.u32 2, %s29
          %p403 = scmp.lt.s32.totalorder %s28, 1
          %s404 = scalar_select %p403, %s28, 1
          %p405 = scmp.lt.s32.totalorder %s402, 1
          %s406 = scalar_select %p405, %s402, 1
          %s407 = smul.addr %s404, 2
          %s408 = sadd.s32 %s406, %s407
          %s409 = smul.addr %s408, 8
          %s410 = scalar_lea.vmem %s2, %s409
          %s411 = smul.u32 2, %s29
        $region64: #{edge_conv.7} parent=51 // pred_fallthru
          _
      $region52: #{edge_conv.7} parent=5 // pred_fallthru
        _
      %p412 = scmp.le.s32.totalorder 1, %s21
      %p413 = scmp.lt.s32.totalorder %s21, 3
      %p414 = pnand %p412, %p413
      %p415 = pneg %p414
      // Predicated region
      $region65: #{edge_conv.7} parent=5 // pred_check
        _
      $region66: #{edge_conv.7} parent=5 // pred_check_branch
        %417 = sbr.rel (%p414) target = $region68
      $region67: #{edge_conv.7} parent=5 // pred_region
        %s418 = ssub.s32 %s21, 1
        %s419 = smul.u32 2, %s31
        %p420 = scmp.lt.s32.totalorder %s30, 1
        %s421 = scalar_select %p420, %s30, 1
        %p422 = scmp.lt.s32.totalorder %s419, 1
        %s423 = scalar_select %p422, %s419, 1
        %s424 = smul.addr %s421, 2
        %s425 = sadd.s32 %s423, %s424
        %s426 = smul.addr %s425, 8
        %s427 = scalar_lea.vmem %s0, %s426
        %p428 = pneg %p61
        %p429 = pneg %p58
        %p430 = scmp.lt.s32.totalorder %s30, 1
        %s431 = scalar_select %p430, %s30, 1
        %s432 = smul.addr %s431, 2
        %s433 = smul.addr %s432, 8
        %s434 = scalar_lea.vmem %s1, %s433
        %p435 = pneg %p87
        %p436 = pneg %p84
        %s437 = smul.u32 2, %s31
        %p438 = scmp.lt.s32.totalorder %s30, 1
        %s439 = scalar_select %p438, %s30, 1
        %p440 = scmp.lt.s32.totalorder %s437, 1
        %s441 = scalar_select %p440, %s437, 1
        %s442 = smul.addr %s439, 2
        %s443 = sadd.s32 %s441, %s442
        %s444 = smul.addr %s443, 8
        %s445 = scalar_lea.vmem %s2, %s444
        %p446 = pneg %p115
        %p447 = pneg %p112
        %p448 = pneg %p136
        %p449 = pneg %p133
        %p450 = pneg %p157
        %p451 = pneg %p154
        %p452 = pneg %p178
        %p453 = pneg %p175
        %p454 = pneg %p199
        %p455 = pneg %p196
        %p456 = pneg %p220
        %p457 = pneg %p217
        %p458 = pneg %p241
        %p459 = pneg %p238
        %p460 = pneg %p262
        %p461 = pneg %p259
        %p462 = pneg %p283
        %p463 = pneg %p280
        %p464 = pneg %p304
        %p465 = pneg %p301
        %p466 = pneg %p332
        %p467 = pneg %p329
        %s468 = sand.u32 %s319, 1
        %s469 = scalar_lea.sflag [#allocation3], %s468
        %s470 = sand.u32 %s319, 1
        %s471 = smul.addr %s470, 16
        %s472 = scalar_lea.vmem [#allocation2], %s471
        %s473 = smul.u32 2, %s31
        %p474 = scmp.lt.s32.totalorder %s30, 1
        %s475 = scalar_select %p474, %s30, 1
        %p476 = scmp.lt.s32.totalorder %s473, 1
        %s477 = scalar_select %p476, %s473, 1
        %s478 = smul.addr %s475, 2
        %s479 = sadd.s32 %s477, %s478
        %s480 = smul.addr %s479, 8
        %s481 = scalar_lea.vmem %s0, %s480
        %s482 = smul.u32 2, %s31
        %p483 = scmp.lt.s32.totalorder %s30, 1
        %s484 = scalar_select %p483, %s30, 1
        %s485 = smul.addr %s484, 2
        %s486 = smul.addr %s485, 8
        %s487 = scalar_lea.vmem %s1, %s486
        %s488 = smul.u32 2, %s31
        %p489 = scmp.lt.s32.totalorder %s30, 1
        %s490 = scalar_select %p489, %s30, 1
        %p491 = scmp.lt.s32.totalorder %s488, 1
        %s492 = scalar_select %p491, %s488, 1
        %s493 = smul.addr %s490, 2
        %s494 = sadd.s32 %s492, %s493
        %s495 = smul.addr %s494, 8
        %s496 = scalar_lea.vmem %s2, %s495
        %s497 = smul.u32 2, %s31
        %v498 = vld [vmem:[%s481] sm:$0xff]
        %v499 = vld [vmem:[%s481 + $0x8] sm:$0xff]
        %v500 = vld [vmem:[%s487] sm:$0xff]
        %v501 = vld [vmem:[%s487 + $0x8] sm:$0xff]
        %v502 = vld [vmem:[%s496] sm:$0xff]
        %v503 = vld [vmem:[%s496 + $0x8] sm:$0xff]
        %v504 = vld [vmem:[%s3] sm:$0xf]
        %v505 = vld [vmem:[%s4] sm:$0xf]
        %v506 = vld [vmem:[%s5] sm:$0x1]
        %v507 = vld [vmem:[%s6] sm:$0x1]
        %v508 = vld [vmem:[%s7] sm:$0x1]
        %v509 = vld [vmem:[%s8] sm:$0xff]
        %v510 = vld [vmem:[%s9] sm:$0x1]
        %v511 = vld [vmem:[%s10] sm:$0x1]
        %v512 = vld [vmem:[%s11] sm:$0x1]
        %v514 = vlaneseq
        %v515 = vshrl.u32 %v514, 7
        %v516 = vsub.s32 0, %v515
        %v517 = vrot.slane %v506, %v516
        %vm519 = vcmask 31744
        %v521 = vsel %vm519, %v498, 0
        %v524 = vsel %vm519, %v499, 0
        %vm526 = vcmask 1043456
        %v528 = vsel %vm526, %v504, 0
        %530 = vmatprep.subr.mxu0 0.0
        %531 = vmatpush1.msra.mxu0 %v528
        %532 = vmatprep.subr.mxu0 0.0
        %533 = vmatpush1.msra.mxu0 0.0
        %534 = vmatprep.subr.mxu0 0.0
        %535 = vmatpush1.msra.mxu0 0.0
        %536 = vmatprep.subr.mxu0 0.0
        %537 = vmatpush1.msra.mxu0 0.0
        %538 = vmatprep.subr.mxu0 0.0
        %539 = vmatpush1.msra.mxu0 0.0
        %540 = vmatprep.subr.mxu0 0.0
        %541 = vmatpush1.msra.mxu0 0.0
        %542 = vmatprep.subr.mxu0 0.0
        %543 = vmatpush1.msra.mxu0 0.0
        %544 = vmatprep.subr.mxu0 0.0
        %545 = vmatpush1.msra.mxu0 0.0
        %546 = vmatprep.subr.mxu0 0.0
        %547 = vmatpush1.msra.mxu0 0.0
        %548 = vmatprep.subr.mxu0 0.0
        %549 = vmatpush1.msra.mxu0 0.0
        %550 = vmatprep.subr.mxu0 0.0
        %551 = vmatpush1.msra.mxu0 0.0
        %552 = vmatprep.subr.mxu0 0.0
        %553 = vmatpush1.msra.mxu0 0.0
        %554 = vmatprep.subr.mxu0 0.0
        %555 = vmatpush1.msra.mxu0 0.0
        %556 = vmatprep.subr.mxu0 0.0
        %557 = vmatpush1.msra.mxu0 0.0
        %558 = vmatprep.subr.mxu0 0.0
        %559 = vmatpush1.msra.mxu0 0.0
        %560 = vmatprep.subr.mxu0 0.0
        %561 = vmatpush1.msra.mxu0 0.0
        %562 = vmatprep.subr.mxu0 0.0
        %563 = vmatpush1.msra.mxu0 0.0
        %564 = vmatprep.subr.mxu0 0.0
        %565 = vmatpush1.msra.mxu0 0.0
        %566 = vmatprep.subr.mxu0 0.0
        %567 = vmatpush1.msra.mxu0 0.0
        %568 = vmatprep.subr.mxu0 0.0
        %569 = vmatpush1.msra.mxu0 0.0
        %570 = vmatprep.subr.mxu0 0.0
        %571 = vmatpush1.msra.mxu0 0.0
        %572 = vmatprep.subr.mxu0 0.0
        %573 = vmatpush1.msra.mxu0 0.0
        %574 = vmatprep.subr.mxu0 0.0
        %575 = vmatpush1.msra.mxu0 0.0
        %576 = vmatprep.subr.mxu0 0.0
        %577 = vmatpush1.msra.mxu0 0.0
        %578 = vmatprep.subr.mxu0 0.0
        %579 = vmatpush1.msra.mxu0 0.0
        %580 = vmatprep.subr.mxu0 0.0
        %581 = vmatpush1.msra.mxu0 0.0
        %582 = vmatprep.subr.mxu0 0.0
        %583 = vmatpush1.msra.mxu0 0.0
        %584 = vmatprep.subr.mxu0 0.0
        %585 = vmatpush1.msra.mxu0 0.0
        %586 = vmatprep.subr.mxu0 0.0
        %587 = vmatpush1.msra.mxu0 0.0
        %588 = vmatprep.subr.mxu0 0.0
        %589 = vmatpush1.msra.mxu0 0.0
        %590 = vmatprep.subr.mxu0 0.0
        %591 = vmatpush1.msra.mxu0 0.0
        %592 = vmatprep.subr.mxu0 0.0
        %593 = vmatpush1.msra.mxu0 0.0
        %594 = vmatprep.mubr.f32.mxu0 0.0
        %595 = vmatmul.mubr.f32.gmra.mrb[0].mxu0 %v521
        %v596 = vpop.f32.mrb[0].mxu0
        %v597 = vadd.f32 %v517, %v596
        %v598 = vpop.f32.mrb[0].mxu0
        %599 = vmatprep.mubr.f32.mxu0 0.0
        %600 = vmatmul.mubr.f32.gmra.mrb[0].mxu0 %v524
        %v601 = vpop.f32.mrb[0].mxu0
        %v602 = vadd.f32 %v517, %v601
        %v603 = vpop.f32.mrb[0].mxu0
        %604 = vdwg.mxu0
        %v605 = vlaneseq
        %v606 = vand.u32 %v605, 127
        %607 = vset.pattern.permute.xlu0 0
        %608 = vperm.xlu0 %607, %v502
        %v609 = vpop.permute.xlu0 %608
        %610 = vset.pattern.permute.xlu0 0
        %611 = vperm.xlu0 %610, %v503
        %v612 = vpop.permute.xlu0 %611
        %vm613 = vcmp.eq.s32.totalorder %v609, %v606
        %vm614 = vcmp.eq.s32.totalorder %v612, %v606
        %v615 = vsel %vm613, 1, 0
        %v616 = vsel %vm614, 1, 0
        %v617 = vcvt.s32.f32 %v615
        %v618 = vcvt.s32.f32 %v616
        %vm619 = vcmask 130048
        %v621 = vsel %vm619, %v617, 0
        %v624 = vsel %vm619, %v618, 0
        %626 = vmatprep.subr.mxu0 0.0
        %627 = vmatpush1.msra.mxu0 %v500
        %628 = vmatprep.subr.mxu0 0.0
        %629 = vmatpush1.msra.mxu0 %v501
        %630 = vmatprep.subr.mxu0 0.0
        %631 = vmatpush1.msra.mxu0 0.0
        %632 = vmatprep.subr.mxu0 0.0
        %633 = vmatpush1.msra.mxu0 0.0
        %634 = vmatprep.subr.mxu0 0.0
        %635 = vmatpush1.msra.mxu0 0.0
        %636 = vmatprep.subr.mxu0 0.0
        %637 = vmatpush1.msra.mxu0 0.0
        %638 = vmatprep.subr.mxu0 0.0
        %639 = vmatpush1.msra.mxu0 0.0
        %640 = vmatprep.subr.mxu0 0.0
        %641 = vmatpush1.msra.mxu0 0.0
        %642 = vmatprep.subr.mxu0 0.0
        %643 = vmatpush1.msra.mxu0 0.0
        %644 = vmatprep.subr.mxu0 0.0
        %645 = vmatpush1.msra.mxu0 0.0
        %646 = vmatprep.subr.mxu0 0.0
        %647 = vmatpush1.msra.mxu0 0.0
        %648 = vmatprep.subr.mxu0 0.0
        %649 = vmatpush1.msra.mxu0 0.0
        %650 = vmatprep.subr.mxu0 0.0
        %651 = vmatpush1.msra.mxu0 0.0
        %652 = vmatprep.subr.mxu0 0.0
        %653 = vmatpush1.msra.mxu0 0.0
        %654 = vmatprep.subr.mxu0 0.0
        %655 = vmatpush1.msra.mxu0 0.0
        %656 = vmatprep.subr.mxu0 0.0
        %657 = vmatpush1.msra.mxu0 0.0
        %658 = vmatprep.subr.mxu0 0.0
        %659 = vmatpush1.msra.mxu0 0.0
        %660 = vmatprep.subr.mxu0 0.0
        %661 = vmatpush1.msra.mxu0 0.0
        %662 = vmatprep.subr.mxu0 0.0
        %663 = vmatpush1.msra.mxu0 0.0
        %664 = vmatprep.subr.mxu0 0.0
        %665 = vmatpush1.msra.mxu0 0.0
        %666 = vmatprep.subr.mxu0 0.0
        %667 = vmatpush1.msra.mxu0 0.0
        %668 = vmatprep.subr.mxu0 0.0
        %669 = vmatpush1.msra.mxu0 0.0
        %670 = vmatprep.subr.mxu0 0.0
        %671 = vmatpush1.msra.mxu0 0.0
        %672 = vmatprep.subr.mxu0 0.0
        %673 = vmatpush1.msra.mxu0 0.0
        %674 = vmatprep.subr.mxu0 0.0
        %675 = vmatpush1.msra.mxu0 0.0
        %676 = vmatprep.subr.mxu0 0.0
        %677 = vmatpush1.msra.mxu0 0.0
        %678 = vmatprep.subr.mxu0 0.0
        %679 = vmatpush1.msra.mxu0 0.0
        %680 = vmatprep.subr.mxu0 0.0
        %681 = vmatpush1.msra.mxu0 0.0
        %682 = vmatprep.subr.mxu0 0.0
        %683 = vmatpush1.msra.mxu0 0.0
        %684 = vmatprep.subr.mxu0 0.0
        %685 = vmatpush1.msra.mxu0 0.0
        %686 = vmatprep.subr.mxu0 0.0
        %687 = vmatpush1.msra.mxu0 0.0
        %688 = vmatprep.subr.mxu0 0.0
        %689 = vmatpush1.msra.mxu0 0.0
        %690 = vmatprep.mubr.f32.mxu0 0.0
        %691 = vmatmul.mubr.f32.gmra.mrb[0].mxu0 %v621
        %v692 = vpop.f32.mrb[0].mxu0
        %v693 = vadd.f32 0.0, %v692
        %v694 = vpop.f32.mrb[0].mxu0
        %695 = vmatprep.mubr.f32.mxu0 0.0
        %696 = vmatmul.mubr.f32.gmra.mrb[0].mxu0 %v624
        %v697 = vpop.f32.mrb[0].mxu0
        %v698 = vadd.f32 0.0, %v697
        %v699 = vpop.f32.mrb[0].mxu0
        %700 = vdwg.mxu0
        %v702 = vsel %vm519, %v693, 0
        %v705 = vsel %vm519, %v698, 0
        %v708 = vsel %vm526, %v505, 0
        %710 = vmatprep.subr.mxu0 0.0
        %711 = vmatpush1.msra.mxu0 %v708
        %712 = vmatprep.subr.mxu0 0.0
        %713 = vmatpush1.msra.mxu0 0.0
        %714 = vmatprep.subr.mxu0 0.0
        %715 = vmatpush1.msra.mxu0 0.0
        %716 = vmatprep.subr.mxu0 0.0
        %717 = vmatpush1.msra.mxu0 0.0
        %718 = vmatprep.subr.mxu0 0.0
        %719 = vmatpush1.msra.mxu0 0.0
        %720 = vmatprep.subr.mxu0 0.0
        %721 = vmatpush1.msra.mxu0 0.0
        %722 = vmatprep.subr.mxu0 0.0
        %723 = vmatpush1.msra.mxu0 0.0
        %724 = vmatprep.subr.mxu0 0.0
        %725 = vmatpush1.msra.mxu0 0.0
        %726 = vmatprep.subr.mxu0 0.0
        %727 = vmatpush1.msra.mxu0 0.0
        %728 = vmatprep.subr.mxu0 0.0
        %729 = vmatpush1.msra.mxu0 0.0
        %730 = vmatprep.subr.mxu0 0.0
        %731 = vmatpush1.msra.mxu0 0.0
        %732 = vmatprep.subr.mxu0 0.0
        %733 = vmatpush1.msra.mxu0 0.0
        %734 = vmatprep.subr.mxu0 0.0
        %735 = vmatpush1.msra.mxu0 0.0
        %736 = vmatprep.subr.mxu0 0.0
        %737 = vmatpush1.msra.mxu0 0.0
        %738 = vmatprep.subr.mxu0 0.0
        %739 = vmatpush1.msra.mxu0 0.0
        %740 = vmatprep.subr.mxu0 0.0
        %741 = vmatpush1.msra.mxu0 0.0
        %742 = vmatprep.subr.mxu0 0.0
        %743 = vmatpush1.msra.mxu0 0.0
        %744 = vmatprep.subr.mxu0 0.0
        %745 = vmatpush1.msra.mxu0 0.0
        %746 = vmatprep.subr.mxu0 0.0
        %747 = vmatpush1.msra.mxu0 0.0
        %748 = vmatprep.subr.mxu0 0.0
        %749 = vmatpush1.msra.mxu0 0.0
        %750 = vmatprep.subr.mxu0 0.0
        %751 = vmatpush1.msra.mxu0 0.0
        %752 = vmatprep.subr.mxu0 0.0
        %753 = vmatpush1.msra.mxu0 0.0
        %754 = vmatprep.subr.mxu0 0.0
        %755 = vmatpush1.msra.mxu0 0.0
        %756 = vmatprep.subr.mxu0 0.0
        %757 = vmatpush1.msra.mxu0 0.0
        %758 = vmatprep.subr.mxu0 0.0
        %759 = vmatpush1.msra.mxu0 0.0
        %760 = vmatprep.subr.mxu0 0.0
        %761 = vmatpush1.msra.mxu0 0.0
        %762 = vmatprep.subr.mxu0 0.0
        %763 = vmatpush1.msra.mxu0 0.0
        %764 = vmatprep.subr.mxu0 0.0
        %765 = vmatpush1.msra.mxu0 0.0
        %766 = vmatprep.subr.mxu0 0.0
        %767 = vmatpush1.msra.mxu0 0.0
        %768 = vmatprep.subr.mxu0 0.0
        %769 = vmatpush1.msra.mxu0 0.0
        %770 = vmatprep.subr.mxu0 0.0
        %771 = vmatpush1.msra.mxu0 0.0
        %772 = vmatprep.subr.mxu0 0.0
        %773 = vmatpush1.msra.mxu0 0.0
        %774 = vmatprep.mubr.f32.mxu0 0.0
        %775 = vmatmul.mubr.f32.gmra.mrb[0].mxu0 %v702
        %v776 = vpop.f32.mrb[0].mxu0
        %v777 = vadd.f32 0.0, %v776
        %v778 = vpop.f32.mrb[0].mxu0
        %779 = vmatprep.mubr.f32.mxu0 0.0
        %780 = vmatmul.mubr.f32.gmra.mrb[0].mxu0 %v705
        %v781 = vpop.f32.mrb[0].mxu0
        %v782 = vadd.f32 0.0, %v781
        %v783 = vpop.f32.mrb[0].mxu0
        %784 = vdwg.mxu0
        %v785 = vadd.f32 %v597, %v777
        %v786 = vadd.f32 %v602, %v782
        %v788 = vlaneseq
        %v789 = vshrl.u32 %v788, 7
        %v790 = vsub.s32 0, %v789
        %v791 = vrot.slane %v507, %v790
        %v793 = vmul.f32 %v785, %v791
        %v794 = vmul.f32 %v786, %v791
        %v796 = vlaneseq
        %v797 = vshrl.u32 %v796, 7
        %v798 = vsub.s32 0, %v797
        %v799 = vrot.slane %v508, %v798
        %v801 = vadd.f32 %v793, %v799
        %v802 = vadd.f32 %v794, %v799
        %v803 = vmax.f32 %v801, 0.0
        %v804 = vmax.f32 %v802, 0.0
        %v806 = vlaneseq
        %v807 = vshrl.u32 %v806, 7
        %v808 = vsub.s32 0, %v807
        %v809 = vrot.slane %v510, %v808
        %vm811 = vcmask 64512
        %v813 = vsel %vm811, %v803, 0
        %v816 = vsel %vm811, %v804, 0
        %818 = vmatprep.subr.mxu0 0.0
        %819 = vmatpush1.msra.mxu0 %v509
        %820 = vmatprep.subr.mxu0 0.0
        %821 = vmatpush1.msra.mxu0 0.0
        %822 = vmatprep.subr.mxu0 0.0
        %823 = vmatpush1.msra.mxu0 0.0
        %824 = vmatprep.subr.mxu0 0.0
        %825 = vmatpush1.msra.mxu0 0.0
        %826 = vmatprep.subr.mxu0 0.0
        %827 = vmatpush1.msra.mxu0 0.0
        %828 = vmatprep.subr.mxu0 0.0
        %829 = vmatpush1.msra.mxu0 0.0
        %830 = vmatprep.subr.mxu0 0.0
        %831 = vmatpush1.msra.mxu0 0.0
        %832 = vmatprep.subr.mxu0 0.0
        %833 = vmatpush1.msra.mxu0 0.0
        %834 = vmatprep.subr.mxu0 0.0
        %835 = vmatpush1.msra.mxu0 0.0
        %836 = vmatprep.subr.mxu0 0.0
        %837 = vmatpush1.msra.mxu0 0.0
        %838 = vmatprep.subr.mxu0 0.0
        %839 = vmatpush1.msra.mxu0 0.0
        %840 = vmatprep.subr.mxu0 0.0
        %841 = vmatpush1.msra.mxu0 0.0
        %842 = vmatprep.subr.mxu0 0.0
        %843 = vmatpush1.msra.mxu0 0.0
        %844 = vmatprep.subr.mxu0 0.0
        %845 = vmatpush1.msra.mxu0 0.0
        %846 = vmatprep.subr.mxu0 0.0
        %847 = vmatpush1.msra.mxu0 0.0
        %848 = vmatprep.subr.mxu0 0.0
        %849 = vmatpush1.msra.mxu0 0.0
        %850 = vmatprep.subr.mxu0 0.0
        %851 = vmatpush1.msra.mxu0 0.0
        %852 = vmatprep.subr.mxu0 0.0
        %853 = vmatpush1.msra.mxu0 0.0
        %854 = vmatprep.subr.mxu0 0.0
        %855 = vmatpush1.msra.mxu0 0.0
        %856 = vmatprep.subr.mxu0 0.0
        %857 = vmatpush1.msra.mxu0 0.0
        %858 = vmatprep.subr.mxu0 0.0
        %859 = vmatpush1.msra.mxu0 0.0
        %860 = vmatprep.subr.mxu0 0.0
        %861 = vmatpush1.msra.mxu0 0.0
        %862 = vmatprep.subr.mxu0 0.0
        %863 = vmatpush1.msra.mxu0 0.0
        %864 = vmatprep.subr.mxu0 0.0
        %865 = vmatpush1.msra.mxu0 0.0
        %866 = vmatprep.subr.mxu0 0.0
        %867 = vmatpush1.msra.mxu0 0.0
        %868 = vmatprep.subr.mxu0 0.0
        %869 = vmatpush1.msra.mxu0 0.0
        %870 = vmatprep.subr.mxu0 0.0
        %871 = vmatpush1.msra.mxu0 0.0
        %872 = vmatprep.subr.mxu0 0.0
        %873 = vmatpush1.msra.mxu0 0.0
        %874 = vmatprep.subr.mxu0 0.0
        %875 = vmatpush1.msra.mxu0 0.0
        %876 = vmatprep.subr.mxu0 0.0
        %877 = vmatpush1.msra.mxu0 0.0
        %878 = vmatprep.subr.mxu0 0.0
        %879 = vmatpush1.msra.mxu0 0.0
        %880 = vmatprep.subr.mxu0 0.0
        %881 = vmatpush1.msra.mxu0 0.0
        %882 = vmatprep.mubr.f32.mxu0 0.0
        %883 = vmatmul.mubr.f32.gmra.mrb[0].mxu0 %v813
        %v884 = vpop.f32.mrb[0].mxu0
        %v885 = vadd.f32 %v809, %v884
        %v886 = vpop.f32.mrb[0].mxu0
        %887 = vmatprep.mubr.f32.mxu0 0.0
        %888 = vmatmul.mubr.f32.gmra.mrb[0].mxu0 %v816
        %v889 = vpop.f32.mrb[0].mxu0
        %v890 = vadd.f32 %v809, %v889
        %v891 = vpop.f32.mrb[0].mxu0
        %892 = vdwg.mxu0
        %v894 = vlaneseq
        %v895 = vshrl.u32 %v894, 7
        %v896 = vsub.s32 0, %v895
        %v897 = vrot.slane %v511, %v896
        %v899 = vmul.f32 %v885, %v897
        %v900 = vmul.f32 %v890, %v897
        %v902 = vlaneseq
        %v903 = vshrl.u32 %v902, 7
        %v904 = vsub.s32 0, %v903
        %v905 = vrot.slane %v512, %v904
        %v907 = vadd.f32 %v899, %v905
        %v908 = vadd.f32 %v900, %v905
        %v909 = vmax.f32 %v907, 0.0
        %v910 = vmax.f32 %v908, 0.0
        %911 = vset.pattern.permute.xlu0 1
        %912 = vperm.xlu0 %911, %v502
        %v913 = vpop.permute.xlu0 %912
        %914 = vset.pattern.permute.xlu0 1
        %915 = vperm.xlu0 %914, %v503
        %v916 = vpop.permute.xlu0 %915
        %vm917 = vcmp.eq.s32.totalorder %v913, %v606
        %vm918 = vcmp.eq.s32.totalorder %v916, %v606
        %v919 = vsel %vm917, 1, 0
        %v920 = vsel %vm918, 1, 0
        %v921 = vcvt.s32.f32 %v919
        %v922 = vcvt.s32.f32 %v920
        %v924 = vsel %vm619, %v921, 0
        %v927 = vsel %vm619, %v922, 0
        %929 = vmatprep.subr.mxu0 0.0
        %930 = vmatpush1.msra.mxu0 %v500
        %931 = vmatprep.subr.mxu0 0.0
        %932 = vmatpush1.msra.mxu0 %v501
        %933 = vmatprep.subr.mxu0 0.0
        %934 = vmatpush1.msra.mxu0 0.0
        %935 = vmatprep.subr.mxu0 0.0
        %936 = vmatpush1.msra.mxu0 0.0
        %937 = vmatprep.subr.mxu0 0.0
        %938 = vmatpush1.msra.mxu0 0.0
        %939 = vmatprep.subr.mxu0 0.0
        %940 = vmatpush1.msra.mxu0 0.0
        %941 = vmatprep.subr.mxu0 0.0
        %942 = vmatpush1.msra.mxu0 0.0
        %943 = vmatprep.subr.mxu0 0.0
        %944 = vmatpush1.msra.mxu0 0.0
        %945 = vmatprep.subr.mxu0 0.0
        %946 = vmatpush1.msra.mxu0 0.0
        %947 = vmatprep.subr.mxu0 0.0
        %948 = vmatpush1.msra.mxu0 0.0
        %949 = vmatprep.subr.mxu0 0.0
        %950 = vmatpush1.msra.mxu0 0.0
        %951 = vmatprep.subr.mxu0 0.0
        %952 = vmatpush1.msra.mxu0 0.0
        %953 = vmatprep.subr.mxu0 0.0
        %954 = vmatpush1.msra.mxu0 0.0
        %955 = vmatprep.subr.mxu0 0.0
        %956 = vmatpush1.msra.mxu0 0.0
        %957 = vmatprep.subr.mxu0 0.0
        %958 = vmatpush1.msra.mxu0 0.0
        %959 = vmatprep.subr.mxu0 0.0
        %960 = vmatpush1.msra.mxu0 0.0
        %961 = vmatprep.subr.mxu0 0.0
        %962 = vmatpush1.msra.mxu0 0.0
        %963 = vmatprep.subr.mxu0 0.0
        %964 = vmatpush1.msra.mxu0 0.0
        %965 = vmatprep.subr.mxu0 0.0
        %966 = vmatpush1.msra.mxu0 0.0
        %967 = vmatprep.subr.mxu0 0.0
        %968 = vmatpush1.msra.mxu0 0.0
        %969 = vmatprep.subr.mxu0 0.0
        %970 = vmatpush1.msra.mxu0 0.0
        %971 = vmatprep.subr.mxu0 0.0
        %972 = vmatpush1.msra.mxu0 0.0
        %973 = vmatprep.subr.mxu0 0.0
        %974 = vmatpush1.msra.mxu0 0.0
        %975 = vmatprep.subr.mxu0 0.0
        %976 = vmatpush1.msra.mxu0 0.0
        %977 = vmatprep.subr.mxu0 0.0
        %978 = vmatpush1.msra.mxu0 0.0
        %979 = vmatprep.subr.mxu0 0.0
        %980 = vmatpush1.msra.mxu0 0.0
        %981 = vmatprep.subr.mxu0 0.0
        %982 = vmatpush1.msra.mxu0 0.0
        %983 = vmatprep.subr.mxu0 0.0
        %984 = vmatpush1.msra.mxu0 0.0
        %985 = vmatprep.subr.mxu0 0.0
        %986 = vmatpush1.msra.mxu0 0.0
        %987 = vmatprep.subr.mxu0 0.0
        %988 = vmatpush1.msra.mxu0 0.0
        %989 = vmatprep.subr.mxu0 0.0
        %990 = vmatpush1.msra.mxu0 0.0
        %991 = vmatprep.subr.mxu0 0.0
        %992 = vmatpush1.msra.mxu0 0.0
        %993 = vmatprep.mubr.f32.mxu0 0.0
        %994 = vmatmul.mubr.f32.gmra.mrb[0].mxu0 %v924
        %v995 = vpop.f32.mrb[0].mxu0
        %v996 = vadd.f32 0.0, %v995
        %v997 = vpop.f32.mrb[0].mxu0
        %998 = vmatprep.mubr.f32.mxu0 0.0
        %999 = vmatmul.mubr.f32.gmra.mrb[0].mxu0 %v927
        %v1000 = vpop.f32.mrb[0].mxu0
        %v1001 = vadd.f32 0.0, %v1000
        %v1002 = vpop.f32.mrb[0].mxu0
        %1003 = vdwg.mxu0
        %v1005 = vsel %vm519, %v996, 0
        %v1008 = vsel %vm519, %v1001, 0
        %1010 = vmatprep.subr.mxu0 0.0
        %1011 = vmatpush1.msra.mxu0 %v708
        %1012 = vmatprep.subr.mxu0 0.0
        %1013 = vmatpush1.msra.mxu0 0.0
        %1014 = vmatprep.subr.mxu0 0.0
        %1015 = vmatpush1.msra.mxu0 0.0
        %1016 = vmatprep.subr.mxu0 0.0
        %1017 = vmatpush1.msra.mxu0 0.0
        %1018 = vmatprep.subr.mxu0 0.0
        %1019 = vmatpush1.msra.mxu0 0.0
        %1020 = vmatprep.subr.mxu0 0.0
        %1021 = vmatpush1.msra.mxu0 0.0
        %1022 = vmatprep.subr.mxu0 0.0
        %1023 = vmatpush1.msra.mxu0 0.0
        %1024 = vmatprep.subr.mxu0 0.0
        %1025 = vmatpush1.msra.mxu0 0.0
        %1026 = vmatprep.subr.mxu0 0.0
        %1027 = vmatpush1.msra.mxu0 0.0
        %1028 = vmatprep.subr.mxu0 0.0
        %1029 = vmatpush1.msra.mxu0 0.0
        %1030 = vmatprep.subr.mxu0 0.0
        %1031 = vmatpush1.msra.mxu0 0.0
        %1032 = vmatprep.subr.mxu0 0.0
        %1033 = vmatpush1.msra.mxu0 0.0
        %1034 = vmatprep.subr.mxu0 0.0
        %1035 = vmatpush1.msra.mxu0 0.0
        %1036 = vmatprep.subr.mxu0 0.0
        %1037 = vmatpush1.msra.mxu0 0.0
        %1038 = vmatprep.subr.mxu0 0.0
        %1039 = vmatpush1.msra.mxu0 0.0
        %1040 = vmatprep.subr.mxu0 0.0
        %1041 = vmatpush1.msra.mxu0 0.0
        %1042 = vmatprep.subr.mxu0 0.0
        %1043 = vmatpush1.msra.mxu0 0.0
        %1044 = vmatprep.subr.mxu0 0.0
        %1045 = vmatpush1.msra.mxu0 0.0
        %1046 = vmatprep.subr.mxu0 0.0
        %1047 = vmatpush1.msra.mxu0 0.0
        %1048 = vmatprep.subr.mxu0 0.0
        %1049 = vmatpush1.msra.mxu0 0.0
        %1050 = vmatprep.subr.mxu0 0.0
        %1051 = vmatpush1.msra.mxu0 0.0
        %1052 = vmatprep.subr.mxu0 0.0
        %1053 = vmatpush1.msra.mxu0 0.0
        %1054 = vmatprep.subr.mxu0 0.0
        %1055 = vmatpush1.msra.mxu0 0.0
        %1056 = vmatprep.subr.mxu0 0.0
        %1057 = vmatpush1.msra.mxu0 0.0
        %1058 = vmatprep.subr.mxu0 0.0
        %1059 = vmatpush1.msra.mxu0 0.0
        %1060 = vmatprep.subr.mxu0 0.0
        %1061 = vmatpush1.msra.mxu0 0.0
        %1062 = vmatprep.subr.mxu0 0.0
        %1063 = vmatpush1.msra.mxu0 0.0
        %1064 = vmatprep.subr.mxu0 0.0
        %1065 = vmatpush1.msra.mxu0 0.0
        %1066 = vmatprep.subr.mxu0 0.0
        %1067 = vmatpush1.msra.mxu0 0.0
        %1068 = vmatprep.subr.mxu0 0.0
        %1069 = vmatpush1.msra.mxu0 0.0
        %1070 = vmatprep.subr.mxu0 0.0
        %1071 = vmatpush1.msra.mxu0 0.0
        %1072 = vmatprep.subr.mxu0 0.0
        %1073 = vmatpush1.msra.mxu0 0.0
        %1074 = vmatprep.mubr.f32.mxu0 0.0
        %1075 = vmatmul.mubr.f32.gmra.mrb[0].mxu0 %v1005
        %v1076 = vpop.f32.mrb[0].mxu0
        %v1077 = vadd.f32 0.0, %v1076
        %v1078 = vpop.f32.mrb[0].mxu0
        %1079 = vmatprep.mubr.f32.mxu0 0.0
        %1080 = vmatmul.mubr.f32.gmra.mrb[0].mxu0 %v1008
        %v1081 = vpop.f32.mrb[0].mxu0
        %v1082 = vadd.f32 0.0, %v1081
        %v1083 = vpop.f32.mrb[0].mxu0
        %1084 = vdwg.mxu0
        %v1085 = vadd.f32 %v597, %v1077
        %v1086 = vadd.f32 %v602, %v1082
        %v1087 = vmul.f32 %v1085, %v791
        %v1088 = vmul.f32 %v1086, %v791
        %v1089 = vadd.f32 %v1087, %v799
        %v1090 = vadd.f32 %v1088, %v799
        %v1091 = vmax.f32 %v1089, 0.0
        %v1092 = vmax.f32 %v1090, 0.0
        %v1094 = vsel %vm811, %v1091, 0
        %v1097 = vsel %vm811, %v1092, 0
        %1099 = vmatprep.subr.mxu0 0.0
        %1100 = vmatpush1.msra.mxu0 %v509
        %1101 = vmatprep.subr.mxu0 0.0
        %1102 = vmatpush1.msra.mxu0 0.0
        %1103 = vmatprep.subr.mxu0 0.0
        %1104 = vmatpush1.msra.mxu0 0.0
        %1105 = vmatprep.subr.mxu0 0.0
        %1106 = vmatpush1.msra.mxu0 0.0
        %1107 = vmatprep.subr.mxu0 0.0
        %1108 = vmatpush1.msra.mxu0 0.0
        %1109 = vmatprep.subr.mxu0 0.0
        %1110 = vmatpush1.msra.mxu0 0.0
        %1111 = vmatprep.subr.mxu0 0.0
        %1112 = vmatpush1.msra.mxu0 0.0
        %1113 = vmatprep.subr.mxu0 0.0
        %1114 = vmatpush1.msra.mxu0 0.0
        %1115 = vmatprep.subr.mxu0 0.0
        %1116 = vmatpush1.msra.mxu0 0.0
        %1117 = vmatprep.subr.mxu0 0.0
        %1118 = vmatpush1.msra.mxu0 0.0
        %1119 = vmatprep.subr.mxu0 0.0
        %1120 = vmatpush1.msra.mxu0 0.0
        %1121 = vmatprep.subr.mxu0 0.0
        %1122 = vmatpush1.msra.mxu0 0.0
        %1123 = vmatprep.subr.mxu0 0.0
        %1124 = vmatpush1.msra.mxu0 0.0
        %1125 = vmatprep.subr.mxu0 0.0
        %1126 = vmatpush1.msra.mxu0 0.0
        %1127 = vmatprep.subr.mxu0 0.0
        %1128 = vmatpush1.msra.mxu0 0.0
        %1129 = vmatprep.subr.mxu0 0.0
        %1130 = vmatpush1.msra.mxu0 0.0
        %1131 = vmatprep.subr.mxu0 0.0
        %1132 = vmatpush1.msra.mxu0 0.0
        %1133 = vmatprep.subr.mxu0 0.0
        %1134 = vmatpush1.msra.mxu0 0.0
        %1135 = vmatprep.subr.mxu0 0.0
        %1136 = vmatpush1.msra.mxu0 0.0
        %1137 = vmatprep.subr.mxu0 0.0
        %1138 = vmatpush1.msra.mxu0 0.0
        %1139 = vmatprep.subr.mxu0 0.0
        %1140 = vmatpush1.msra.mxu0 0.0
        %1141 = vmatprep.subr.mxu0 0.0
        %1142 = vmatpush1.msra.mxu0 0.0
        %1143 = vmatprep.subr.mxu0 0.0
        %1144 = vmatpush1.msra.mxu0 0.0
        %1145 = vmatprep.subr.mxu0 0.0
        %1146 = vmatpush1.msra.mxu0 0.0
        %1147 = vmatprep.subr.mxu0 0.0
        %1148 = vmatpush1.msra.mxu0 0.0
        %1149 = vmatprep.subr.mxu0 0.0
        %1150 = vmatpush1.msra.mxu0 0.0
        %1151 = vmatprep.subr.mxu0 0.0
        %1152 = vmatpush1.msra.mxu0 0.0
        %1153 = vmatprep.subr.mxu0 0.0
        %1154 = vmatpush1.msra.mxu0 0.0
        %1155 = vmatprep.subr.mxu0 0.0
        %1156 = vmatpush1.msra.mxu0 0.0
        %1157 = vmatprep.subr.mxu0 0.0
        %1158 = vmatpush1.msra.mxu0 0.0
        %1159 = vmatprep.subr.mxu0 0.0
        %1160 = vmatpush1.msra.mxu0 0.0
        %1161 = vmatprep.subr.mxu0 0.0
        %1162 = vmatpush1.msra.mxu0 0.0
        %1163 = vmatprep.mubr.f32.mxu0 0.0
        %1164 = vmatmul.mubr.f32.gmra.mrb[0].mxu0 %v1094
        %v1165 = vpop.f32.mrb[0].mxu0
        %v1166 = vadd.f32 %v809, %v1165
        %v1167 = vpop.f32.mrb[0].mxu0
        %1168 = vmatprep.mubr.f32.mxu0 0.0
        %1169 = vmatmul.mubr.f32.gmra.mrb[0].mxu0 %v1097
        %v1170 = vpop.f32.mrb[0].mxu0
        %v1171 = vadd.f32 %v809, %v1170
        %v1172 = vpop.f32.mrb[0].mxu0
        %1173 = vdwg.mxu0
        %v1174 = vmul.f32 %v1166, %v897
        %v1175 = vmul.f32 %v1171, %v897
        %v1176 = vadd.f32 %v1174, %v905
        %v1177 = vadd.f32 %v1175, %v905
        %v1178 = vmax.f32 %v1176, 0.0
        %v1179 = vmax.f32 %v1177, 0.0
        %v1180 = vmax.f32 %v909, %v1178
        %v1181 = vmax.f32 %v910, %v1179
        %1182 = vset.pattern.permute.xlu0 2
        %1183 = vperm.xlu0 %1182, %v502
        %v1184 = vpop.permute.xlu0 %1183
        %1185 = vset.pattern.permute.xlu0 2
        %1186 = vperm.xlu0 %1185, %v503
        %v1187 = vpop.permute.xlu0 %1186
        %vm1188 = vcmp.eq.s32.totalorder %v1184, %v606
        %vm1189 = vcmp.eq.s32.totalorder %v1187, %v606
        %v1190 = vsel %vm1188, 1, 0
        %v1191 = vsel %vm1189, 1, 0
        %v1192 = vcvt.s32.f32 %v1190
        %v1193 = vcvt.s32.f32 %v1191
        %v1195 = vsel %vm619, %v1192, 0
        %v1198 = vsel %vm619, %v1193, 0
        %1200 = vmatprep.subr.mxu0 0.0
        %1201 = vmatpush1.msra.mxu0 %v500
        %1202 = vmatprep.subr.mxu0 0.0
        %1203 = vmatpush1.msra.mxu0 %v501
        %1204 = vmatprep.subr.mxu0 0.0
        %1205 = vmatpush1.msra.mxu0 0.0
        %1206 = vmatprep.subr.mxu0 0.0
        %1207 = vmatpush1.msra.mxu0 0.0
        %1208 = vmatprep.subr.mxu0 0.0
        %1209 = vmatpush1.msra.mxu0 0.0
        %1210 = vmatprep.subr.mxu0 0.0
        %1211 = vmatpush1.msra.mxu0 0.0
        %1212 = vmatprep.subr.mxu0 0.0
        %1213 = vmatpush1.msra.mxu0 0.0
        %1214 = vmatprep.subr.mxu0 0.0
        %1215 = vmatpush1.msra.mxu0 0.0
        %1216 = vmatprep.subr.mxu0 0.0
        %1217 = vmatpush1.msra.mxu0 0.0
        %1218 = vmatprep.subr.mxu0 0.0
        %1219 = vmatpush1.msra.mxu0 0.0
        %1220 = vmatprep.subr.mxu0 0.0
        %1221 = vmatpush1.msra.mxu0 0.0
        %1222 = vmatprep.subr.mxu0 0.0
        %1223 = vmatpush1.msra.mxu0 0.0
        %1224 = vmatprep.subr.mxu0 0.0
        %1225 = vmatpush1.msra.mxu0 0.0
        %1226 = vmatprep.subr.mxu0 0.0
        %1227 = vmatpush1.msra.mxu0 0.0
        %1228 = vmatprep.subr.mxu0 0.0
        %1229 = vmatpush1.msra.mxu0 0.0
        %1230 = vmatprep.subr.mxu0 0.0
        %1231 = vmatpush1.msra.mxu0 0.0
        %1232 = vmatprep.subr.mxu0 0.0
        %1233 = vmatpush1.msra.mxu0 0.0
        %1234 = vmatprep.subr.mxu0 0.0
        %1235 = vmatpush1.msra.mxu0 0.0
        %1236 = vmatprep.subr.mxu0 0.0
        %1237 = vmatpush1.msra.mxu0 0.0
        %1238 = vmatprep.subr.mxu0 0.0
        %1239 = vmatpush1.msra.mxu0 0.0
        %1240 = vmatprep.subr.mxu0 0.0
        %1241 = vmatpush1.msra.mxu0 0.0
        %1242 = vmatprep.subr.mxu0 0.0
        %1243 = vmatpush1.msra.mxu0 0.0
        %1244 = vmatprep.subr.mxu0 0.0
        %1245 = vmatpush1.msra.mxu0 0.0
        %1246 = vmatprep.subr.mxu0 0.0
        %1247 = vmatpush1.msra.mxu0 0.0
        %1248 = vmatprep.subr.mxu0 0.0
        %1249 = vmatpush1.msra.mxu0 0.0
        %1250 = vmatprep.subr.mxu0 0.0
        %1251 = vmatpush1.msra.mxu0 0.0
        %1252 = vmatprep.subr.mxu0 0.0
        %1253 = vmatpush1.msra.mxu0 0.0
        %1254 = vmatprep.subr.mxu0 0.0
        %1255 = vmatpush1.msra.mxu0 0.0
        %1256 = vmatprep.subr.mxu0 0.0
        %1257 = vmatpush1.msra.mxu0 0.0
        %1258 = vmatprep.subr.mxu0 0.0
        %1259 = vmatpush1.msra.mxu0 0.0
        %1260 = vmatprep.subr.mxu0 0.0
        %1261 = vmatpush1.msra.mxu0 0.0
        %1262 = vmatprep.subr.mxu0 0.0
        %1263 = vmatpush1.msra.mxu0 0.0
        %1264 = vmatprep.mubr.f32.mxu0 0.0
        %1265 = vmatmul.mubr.f32.gmra.mrb[0].mxu0 %v1195
        %v1266 = vpop.f32.mrb[0].mxu0
        %v1267 = vadd.f32 0.0, %v1266
        %v1268 = vpop.f32.mrb[0].mxu0
        %1269 = vmatprep.mubr.f32.mxu0 0.0
        %1270 = vmatmul.mubr.f32.gmra.mrb[0].mxu0 %v1198
        %v1271 = vpop.f32.mrb[0].mxu0
        %v1272 = vadd.f32 0.0, %v1271
        %v1273 = vpop.f32.mrb[0].mxu0
        %1274 = vdwg.mxu0
        %v1276 = vsel %vm519, %v1267, 0
        %v1279 = vsel %vm519, %v1272, 0
        %1281 = vmatprep.subr.mxu0 0.0
        %1282 = vmatpush1.msra.mxu0 %v708
        %1283 = vmatprep.subr.mxu0 0.0
        %1284 = vmatpush1.msra.mxu0 0.0
        %1285 = vmatprep.subr.mxu0 0.0
        %1286 = vmatpush1.msra.mxu0 0.0
        %1287 = vmatprep.subr.mxu0 0.0
        %1288 = vmatpush1.msra.mxu0 0.0
        %1289 = vmatprep.subr.mxu0 0.0
        %1290 = vmatpush1.msra.mxu0 0.0
        %1291 = vmatprep.subr.mxu0 0.0
        %1292 = vmatpush1.msra.mxu0 0.0
        %1293 = vmatprep.subr.mxu0 0.0
        %1294 = vmatpush1.msra.mxu0 0.0
        %1295 = vmatprep.subr.mxu0 0.0
        %1296 = vmatpush1.msra.mxu0 0.0
        %1297 = vmatprep.subr.mxu0 0.0
        %1298 = vmatpush1.msra.mxu0 0.0
        %1299 = vmatprep.subr.mxu0 0.0
        %1300 = vmatpush1.msra.mxu0 0.0
        %1301 = vmatprep.subr.mxu0 0.0
        %1302 = vmatpush1.msra.mxu0 0.0
        %1303 = vmatprep.subr.mxu0 0.0
        %1304 = vmatpush1.msra.mxu0 0.0
        %1305 = vmatprep.subr.mxu0 0.0
        %1306 = vmatpush1.msra.mxu0 0.0
        %1307 = vmatprep.subr.mxu0 0.0
        %1308 = vmatpush1.msra.mxu0 0.0
        %1309 = vmatprep.subr.mxu0 0.0
        %1310 = vmatpush1.msra.mxu0 0.0
        %1311 = vmatprep.subr.mxu0 0.0
        %1312 = vmatpush1.msra.mxu0 0.0
        %1313 = vmatprep.subr.mxu0 0.0
        %1314 = vmatpush1.msra.mxu0 0.0
        %1315 = vmatprep.subr.mxu0 0.0
        %1316 = vmatpush1.msra.mxu0 0.0
        %1317 = vmatprep.subr.mxu0 0.0
        %1318 = vmatpush1.msra.mxu0 0.0
        %1319 = vmatprep.subr.mxu0 0.0
        %1320 = vmatpush1.msra.mxu0 0.0
        %1321 = vmatprep.subr.mxu0 0.0
        %1322 = vmatpush1.msra.mxu0 0.0
        %1323 = vmatprep.subr.mxu0 0.0
        %1324 = vmatpush1.msra.mxu0 0.0
        %1325 = vmatprep.subr.mxu0 0.0
        %1326 = vmatpush1.msra.mxu0 0.0
        %1327 = vmatprep.subr.mxu0 0.0
        %1328 = vmatpush1.msra.mxu0 0.0
        %1329 = vmatprep.subr.mxu0 0.0
        %1330 = vmatpush1.msra.mxu0 0.0
        %1331 = vmatprep.subr.mxu0 0.0
        %1332 = vmatpush1.msra.mxu0 0.0
        %1333 = vmatprep.subr.mxu0 0.0
        %1334 = vmatpush1.msra.mxu0 0.0
        %1335 = vmatprep.subr.mxu0 0.0
        %1336 = vmatpush1.msra.mxu0 0.0
        %1337 = vmatprep.subr.mxu0 0.0
        %1338 = vmatpush1.msra.mxu0 0.0
        %1339 = vmatprep.subr.mxu0 0.0
        %1340 = vmatpush1.msra.mxu0 0.0
        %1341 = vmatprep.subr.mxu0 0.0
        %1342 = vmatpush1.msra.mxu0 0.0
        %1343 = vmatprep.subr.mxu0 0.0
        %1344 = vmatpush1.msra.mxu0 0.0
        %1345 = vmatprep.mubr.f32.mxu0 0.0
        %1346 = vmatmul.mubr.f32.gmra.mrb[0].mxu0 %v1276
        %v1347 = vpop.f32.mrb[0].mxu0
        %v1348 = vadd.f32 0.0, %v1347
        %v1349 = vpop.f32.mrb[0].mxu0
        %1350 = vmatprep.mubr.f32.mxu0 0.0
        %1351 = vmatmul.mubr.f32.gmra.mrb[0].mxu0 %v1279
        %v1352 = vpop.f32.mrb[0].mxu0
        %v1353 = vadd.f32 0.0, %v1352
        %v1354 = vpop.f32.mrb[0].mxu0
        %1355 = vdwg.mxu0
        %v1356 = vadd.f32 %v597, %v1348
        %v1357 = vadd.f32 %v602, %v1353
        %v1358 = vmul.f32 %v1356, %v791
        %v1359 = vmul.f32 %v1357, %v791
        %v1360 = vadd.f32 %v1358, %v799
        %v1361 = vadd.f32 %v1359, %v799
        %v1362 = vmax.f32 %v1360, 0.0
        %v1363 = vmax.f32 %v1361, 0.0
        %v1365 = vsel %vm811, %v1362, 0
        %v1368 = vsel %vm811, %v1363, 0
        %1370 = vmatprep.subr.mxu0 0.0
        %1371 = vmatpush1.msra.mxu0 %v509
        %1372 = vmatprep.subr.mxu0 0.0
        %1373 = vmatpush1.msra.mxu0 0.0
        %1374 = vmatprep.subr.mxu0 0.0
        %1375 = vmatpush1.msra.mxu0 0.0
        %1376 = vmatprep.subr.mxu0 0.0
        %1377 = vmatpush1.msra.mxu0 0.0
        %1378 = vmatprep.subr.mxu0 0.0
        %1379 = vmatpush1.msra.mxu0 0.0
        %1380 = vmatprep.subr.mxu0 0.0
        %1381 = vmatpush1.msra.mxu0 0.0
        %1382 = vmatprep.subr.mxu0 0.0
        %1383 = vmatpush1.msra.mxu0 0.0
        %1384 = vmatprep.subr.mxu0 0.0
        %1385 = vmatpush1.msra.mxu0 0.0
        %1386 = vmatprep.subr.mxu0 0.0
        %1387 = vmatpush1.msra.mxu0 0.0
        %1388 = vmatprep.subr.mxu0 0.0
        %1389 = vmatpush1.msra.mxu0 0.0
        %1390 = vmatprep.subr.mxu0 0.0
        %1391 = vmatpush1.msra.mxu0 0.0
        %1392 = vmatprep.subr.mxu0 0.0
        %1393 = vmatpush1.msra.mxu0 0.0
        %1394 = vmatprep.subr.mxu0 0.0
        %1395 = vmatpush1.msra.mxu0 0.0
        %1396 = vmatprep.subr.mxu0 0.0
        %1397 = vmatpush1.msra.mxu0 0.0
        %1398 = vmatprep.subr.mxu0 0.0
        %1399 = vmatpush1.msra.mxu0 0.0
        %1400 = vmatprep.subr.mxu0 0.0
        %1401 = vmatpush1.msra.mxu0 0.0
        %1402 = vmatprep.subr.mxu0 0.0
        %1403 = vmatpush1.msra.mxu0 0.0
        %1404 = vmatprep.subr.mxu0 0.0
        %1405 = vmatpush1.msra.mxu0 0.0
        %1406 = vmatprep.subr.mxu0 0.0
        %1407 = vmatpush1.msra.mxu0 0.0
        %1408 = vmatprep.subr.mxu0 0.0
        %1409 = vmatpush1.msra.mxu0 0.0
        %1410 = vmatprep.subr.mxu0 0.0
        %1411 = vmatpush1.msra.mxu0 0.0
        %1412 = vmatprep.subr.mxu0 0.0
        %1413 = vmatpush1.msra.mxu0 0.0
        %1414 = vmatprep.subr.mxu0 0.0
        %1415 = vmatpush1.msra.mxu0 0.0
        %1416 = vmatprep.subr.mxu0 0.0
        %1417 = vmatpush1.msra.mxu0 0.0
        %1418 = vmatprep.subr.mxu0 0.0
        %1419 = vmatpush1.msra.mxu0 0.0
        %1420 = vmatprep.subr.mxu0 0.0
        %1421 = vmatpush1.msra.mxu0 0.0
        %1422 = vmatprep.subr.mxu0 0.0
        %1423 = vmatpush1.msra.mxu0 0.0
        %1424 = vmatprep.subr.mxu0 0.0
        %1425 = vmatpush1.msra.mxu0 0.0
        %1426 = vmatprep.subr.mxu0 0.0
        %1427 = vmatpush1.msra.mxu0 0.0
        %1428 = vmatprep.subr.mxu0 0.0
        %1429 = vmatpush1.msra.mxu0 0.0
        %1430 = vmatprep.subr.mxu0 0.0
        %1431 = vmatpush1.msra.mxu0 0.0
        %1432 = vmatprep.subr.mxu0 0.0
        %1433 = vmatpush1.msra.mxu0 0.0
        %1434 = vmatprep.mubr.f32.mxu0 0.0
        %1435 = vmatmul.mubr.f32.gmra.mrb[0].mxu0 %v1365
        %v1436 = vpop.f32.mrb[0].mxu0
        %v1437 = vadd.f32 %v809, %v1436
        %v1438 = vpop.f32.mrb[0].mxu0
        %1439 = vmatprep.mubr.f32.mxu0 0.0
        %1440 = vmatmul.mubr.f32.gmra.mrb[0].mxu0 %v1368
        %v1441 = vpop.f32.mrb[0].mxu0
        %v1442 = vadd.f32 %v809, %v1441
        %v1443 = vpop.f32.mrb[0].mxu0
        %1444 = vdwg.mxu0
        %v1445 = vmul.f32 %v1437, %v897
        %v1446 = vmul.f32 %v1442, %v897
        %v1447 = vadd.f32 %v1445, %v905
        %v1448 = vadd.f32 %v1446, %v905
        %v1449 = vmax.f32 %v1447, 0.0
        %v1450 = vmax.f32 %v1448, 0.0
        %v1451 = vmax.f32 %v1180, %v1449
        %v1452 = vmax.f32 %v1181, %v1450
        %1453 = vset.pattern.permute.xlu0 3
        %1454 = vperm.xlu0 %1453, %v502
        %v1455 = vpop.permute.xlu0 %1454
        %1456 = vset.pattern.permute.xlu0 3
        %1457 = vperm.xlu0 %1456, %v503
        %v1458 = vpop.permute.xlu0 %1457
        %vm1459 = vcmp.eq.s32.totalorder %v1455, %v606
        %vm1460 = vcmp.eq.s32.totalorder %v1458, %v606
        %v1461 = vsel %vm1459, 1, 0
        %v1462 = vsel %vm1460, 1, 0
        %v1463 = vcvt.s32.f32 %v1461
        %v1464 = vcvt.s32.f32 %v1462
        %v1466 = vsel %vm619, %v1463, 0
        %v1469 = vsel %vm619, %v1464, 0
        %1471 = vmatprep.subr.mxu0 0.0
        %1472 = vmatpush1.msra.mxu0 %v500
        %1473 = vmatprep.subr.mxu0 0.0
        %1474 = vmatpush1.msra.mxu0 %v501
        %1475 = vmatprep.subr.mxu0 0.0
        %1476 = vmatpush1.msra.mxu0 0.0
        %1477 = vmatprep.subr.mxu0 0.0
        %1478 = vmatpush1.msra.mxu0 0.0
        %1479 = vmatprep.subr.mxu0 0.0
        %1480 = vmatpush1.msra.mxu0 0.0
        %1481 = vmatprep.subr.mxu0 0.0
        %1482 = vmatpush1.msra.mxu0 0.0
        %1483 = vmatprep.subr.mxu0 0.0
        %1484 = vmatpush1.msra.mxu0 0.0
        %1485 = vmatprep.subr.mxu0 0.0
        %1486 = vmatpush1.msra.mxu0 0.0
        %1487 = vmatprep.subr.mxu0 0.0
        %1488 = vmatpush1.msra.mxu0 0.0
        %1489 = vmatprep.subr.mxu0 0.0
        %1490 = vmatpush1.msra.mxu0 0.0
        %1491 = vmatprep.subr.mxu0 0.0
        %1492 = vmatpush1.msra.mxu0 0.0
        %1493 = vmatprep.subr.mxu0 0.0
        %1494 = vmatpush1.msra.mxu0 0.0
        %1495 = vmatprep.subr.mxu0 0.0
        %1496 = vmatpush1.msra.mxu0 0.0
        %1497 = vmatprep.subr.mxu0 0.0
        %1498 = vmatpush1.msra.mxu0 0.0
        %1499 = vmatprep.subr.mxu0 0.0
        %1500 = vmatpush1.msra.mxu0 0.0
        %1501 = vmatprep.subr.mxu0 0.0
        %1502 = vmatpush1.msra.mxu0 0.0
        %1503 = vmatprep.subr.mxu0 0.0
        %1504 = vmatpush1.msra.mxu0 0.0
        %1505 = vmatprep.subr.mxu0 0.0
        %1506 = vmatpush1.msra.mxu0 0.0
        %1507 = vmatprep.subr.mxu0 0.0
        %1508 = vmatpush1.msra.mxu0 0.0
        %1509 = vmatprep.subr.mxu0 0.0
        %1510 = vmatpush1.msra.mxu0 0.0
        %1511 = vmatprep.subr.mxu0 0.0
        %1512 = vmatpush1.msra.mxu0 0.0
        %1513 = vmatprep.subr.mxu0 0.0
        %1514 = vmatpush1.msra.mxu0 0.0
        %1515 = vmatprep.subr.mxu0 0.0
        %1516 = vmatpush1.msra.mxu0 0.0
        %1517 = vmatprep.subr.mxu0 0.0
        %1518 = vmatpush1.msra.mxu0 0.0
        %1519 = vmatprep.subr.mxu0 0.0
        %1520 = vmatpush1.msra.mxu0 0.0
        %1521 = vmatprep.subr.mxu0 0.0
        %1522 = vmatpush1.msra.mxu0 0.0
        %1523 = vmatprep.subr.mxu0 0.0
        %1524 = vmatpush1.msra.mxu0 0.0
        %1525 = vmatprep.subr.mxu0 0.0
        %1526 = vmatpush1.msra.mxu0 0.0
        %1527 = vmatprep.subr.mxu0 0.0
        %1528 = vmatpush1.msra.mxu0 0.0
        %1529 = vmatprep.subr.mxu0 0.0
        %1530 = vmatpush1.msra.mxu0 0.0
        %1531 = vmatprep.subr.mxu0 0.0
        %1532 = vmatpush1.msra.mxu0 0.0
        %1533 = vmatprep.subr.mxu0 0.0
        %1534 = vmatpush1.msra.mxu0 0.0
        %1535 = vmatprep.mubr.f32.mxu0 0.0
        %1536 = vmatmul.mubr.f32.gmra.mrb[0].mxu0 %v1466
        %v1537 = vpop.f32.mrb[0].mxu0
        %v1538 = vadd.f32 0.0, %v1537
        %v1539 = vpop.f32.mrb[0].mxu0
        %1540 = vmatprep.mubr.f32.mxu0 0.0
        %1541 = vmatmul.mubr.f32.gmra.mrb[0].mxu0 %v1469
        %v1542 = vpop.f32.mrb[0].mxu0
        %v1543 = vadd.f32 0.0, %v1542
        %v1544 = vpop.f32.mrb[0].mxu0
        %1545 = vdwg.mxu0
        %v1547 = vsel %vm519, %v1538, 0
        %v1550 = vsel %vm519, %v1543, 0
        %1552 = vmatprep.subr.mxu0 0.0
        %1553 = vmatpush1.msra.mxu0 %v708
        %1554 = vmatprep.subr.mxu0 0.0
        %1555 = vmatpush1.msra.mxu0 0.0
        %1556 = vmatprep.subr.mxu0 0.0
        %1557 = vmatpush1.msra.mxu0 0.0
        %1558 = vmatprep.subr.mxu0 0.0
        %1559 = vmatpush1.msra.mxu0 0.0
        %1560 = vmatprep.subr.mxu0 0.0
        %1561 = vmatpush1.msra.mxu0 0.0
        %1562 = vmatprep.subr.mxu0 0.0
        %1563 = vmatpush1.msra.mxu0 0.0
        %1564 = vmatprep.subr.mxu0 0.0
        %1565 = vmatpush1.msra.mxu0 0.0
        %1566 = vmatprep.subr.mxu0 0.0
        %1567 = vmatpush1.msra.mxu0 0.0
        %1568 = vmatprep.subr.mxu0 0.0
        %1569 = vmatpush1.msra.mxu0 0.0
        %1570 = vmatprep.subr.mxu0 0.0
        %1571 = vmatpush1.msra.mxu0 0.0
        %1572 = vmatprep.subr.mxu0 0.0
        %1573 = vmatpush1.msra.mxu0 0.0
        %1574 = vmatprep.subr.mxu0 0.0
        %1575 = vmatpush1.msra.mxu0 0.0
        %1576 = vmatprep.subr.mxu0 0.0
        %1577 = vmatpush1.msra.mxu0 0.0
        %1578 = vmatprep.subr.mxu0 0.0
        %1579 = vmatpush1.msra.mxu0 0.0
        %1580 = vmatprep.subr.mxu0 0.0
        %1581 = vmatpush1.msra.mxu0 0.0
        %1582 = vmatprep.subr.mxu0 0.0
        %1583 = vmatpush1.msra.mxu0 0.0
        %1584 = vmatprep.subr.mxu0 0.0
        %1585 = vmatpush1.msra.mxu0 0.0
        %1586 = vmatprep.subr.mxu0 0.0
        %1587 = vmatpush1.msra.mxu0 0.0
        %1588 = vmatprep.subr.mxu0 0.0
        %1589 = vmatpush1.msra.mxu0 0.0
        %1590 = vmatprep.subr.mxu0 0.0
        %1591 = vmatpush1.msra.mxu0 0.0
        %1592 = vmatprep.subr.mxu0 0.0
        %1593 = vmatpush1.msra.mxu0 0.0
        %1594 = vmatprep.subr.mxu0 0.0
        %1595 = vmatpush1.msra.mxu0 0.0
        %1596 = vmatprep.subr.mxu0 0.0
        %1597 = vmatpush1.msra.mxu0 0.0
        %1598 = vmatprep.subr.mxu0 0.0
        %1599 = vmatpush1.msra.mxu0 0.0
        %1600 = vmatprep.subr.mxu0 0.0
        %1601 = vmatpush1.msra.mxu0 0.0
        %1602 = vmatprep.subr.mxu0 0.0
        %1603 = vmatpush1.msra.mxu0 0.0
        %1604 = vmatprep.subr.mxu0 0.0
        %1605 = vmatpush1.msra.mxu0 0.0
        %1606 = vmatprep.subr.mxu0 0.0
        %1607 = vmatpush1.msra.mxu0 0.0
        %1608 = vmatprep.subr.mxu0 0.0
        %1609 = vmatpush1.msra.mxu0 0.0
        %1610 = vmatprep.subr.mxu0 0.0
        %1611 = vmatpush1.msra.mxu0 0.0
        %1612 = vmatprep.subr.mxu0 0.0
        %1613 = vmatpush1.msra.mxu0 0.0
        %1614 = vmatprep.subr.mxu0 0.0
        %1615 = vmatpush1.msra.mxu0 0.0
        %1616 = vmatprep.mubr.f32.mxu0 0.0
        %1617 = vmatmul.mubr.f32.gmra.mrb[0].mxu0 %v1547
        %v1618 = vpop.f32.mrb[0].mxu0
        %v1619 = vadd.f32 0.0, %v1618
        %v1620 = vpop.f32.mrb[0].mxu0
        %1621 = vmatprep.mubr.f32.mxu0 0.0
        %1622 = vmatmul.mubr.f32.gmra.mrb[0].mxu0 %v1550
        %v1623 = vpop.f32.mrb[0].mxu0
        %v1624 = vadd.f32 0.0, %v1623
        %v1625 = vpop.f32.mrb[0].mxu0
        %1626 = vdwg.mxu0
        %v1627 = vadd.f32 %v597, %v1619
        %v1628 = vadd.f32 %v602, %v1624
        %v1629 = vmul.f32 %v1627, %v791
        %v1630 = vmul.f32 %v1628, %v791
        %v1631 = vadd.f32 %v1629, %v799
        %v1632 = vadd.f32 %v1630, %v799
        %v1633 = vmax.f32 %v1631, 0.0
        %v1634 = vmax.f32 %v1632, 0.0
        %v1636 = vsel %vm811, %v1633, 0
        %v1639 = vsel %vm811, %v1634, 0
        %1641 = vmatprep.subr.mxu0 0.0
        %1642 = vmatpush1.msra.mxu0 %v509
        %1643 = vmatprep.subr.mxu0 0.0
        %1644 = vmatpush1.msra.mxu0 0.0
        %1645 = vmatprep.subr.mxu0 0.0
        %1646 = vmatpush1.msra.mxu0 0.0
        %1647 = vmatprep.subr.mxu0 0.0
        %1648 = vmatpush1.msra.mxu0 0.0
        %1649 = vmatprep.subr.mxu0 0.0
        %1650 = vmatpush1.msra.mxu0 0.0
        %1651 = vmatprep.subr.mxu0 0.0
        %1652 = vmatpush1.msra.mxu0 0.0
        %1653 = vmatprep.subr.mxu0 0.0
        %1654 = vmatpush1.msra.mxu0 0.0
        %1655 = vmatprep.subr.mxu0 0.0
        %1656 = vmatpush1.msra.mxu0 0.0
        %1657 = vmatprep.subr.mxu0 0.0
        %1658 = vmatpush1.msra.mxu0 0.0
        %1659 = vmatprep.subr.mxu0 0.0
        %1660 = vmatpush1.msra.mxu0 0.0
        %1661 = vmatprep.subr.mxu0 0.0
        %1662 = vmatpush1.msra.mxu0 0.0
        %1663 = vmatprep.subr.mxu0 0.0
        %1664 = vmatpush1.msra.mxu0 0.0
        %1665 = vmatprep.subr.mxu0 0.0
        %1666 = vmatpush1.msra.mxu0 0.0
        %1667 = vmatprep.subr.mxu0 0.0
        %1668 = vmatpush1.msra.mxu0 0.0
        %1669 = vmatprep.subr.mxu0 0.0
        %1670 = vmatpush1.msra.mxu0 0.0
        %1671 = vmatprep.subr.mxu0 0.0
        %1672 = vmatpush1.msra.mxu0 0.0
        %1673 = vmatprep.subr.mxu0 0.0
        %1674 = vmatpush1.msra.mxu0 0.0
        %1675 = vmatprep.subr.mxu0 0.0
        %1676 = vmatpush1.msra.mxu0 0.0
        %1677 = vmatprep.subr.mxu0 0.0
        %1678 = vmatpush1.msra.mxu0 0.0
        %1679 = vmatprep.subr.mxu0 0.0
        %1680 = vmatpush1.msra.mxu0 0.0
        %1681 = vmatprep.subr.mxu0 0.0
        %1682 = vmatpush1.msra.mxu0 0.0
        %1683 = vmatprep.subr.mxu0 0.0
        %1684 = vmatpush1.msra.mxu0 0.0
        %1685 = vmatprep.subr.mxu0 0.0
        %1686 = vmatpush1.msra.mxu0 0.0
        %1687 = vmatprep.subr.mxu0 0.0
        %1688 = vmatpush1.msra.mxu0 0.0
        %1689 = vmatprep.subr.mxu0 0.0
        %1690 = vmatpush1.msra.mxu0 0.0
        %1691 = vmatprep.subr.mxu0 0.0
        %1692 = vmatpush1.msra.mxu0 0.0
        %1693 = vmatprep.subr.mxu0 0.0
        %1694 = vmatpush1.msra.mxu0 0.0
        %1695 = vmatprep.subr.mxu0 0.0
        %1696 = vmatpush1.msra.mxu0 0.0
        %1697 = vmatprep.subr.mxu0 0.0
        %1698 = vmatpush1.msra.mxu0 0.0
        %1699 = vmatprep.subr.mxu0 0.0
        %1700 = vmatpush1.msra.mxu0 0.0
        %1701 = vmatprep.subr.mxu0 0.0
        %1702 = vmatpush1.msra.mxu0 0.0
        %1703 = vmatprep.subr.mxu0 0.0
        %1704 = vmatpush1.msra.mxu0 0.0
        %1705 = vmatprep.mubr.f32.mxu0 0.0
        %1706 = vmatmul.mubr.f32.gmra.mrb[0].mxu0 %v1636
        %v1707 = vpop.f32.mrb[0].mxu0
        %v1708 = vadd.f32 %v809, %v1707
        %v1709 = vpop.f32.mrb[0].mxu0
        %1710 = vmatprep.mubr.f32.mxu0 0.0
        %1711 = vmatmul.mubr.f32.gmra.mrb[0].mxu0 %v1639
        %v1712 = vpop.f32.mrb[0].mxu0
        %v1713 = vadd.f32 %v809, %v1712
        %v1714 = vpop.f32.mrb[0].mxu0
        %1715 = vdwg.mxu0
        %v1716 = vmul.f32 %v1708, %v897
        %v1717 = vmul.f32 %v1713, %v897
        %v1718 = vadd.f32 %v1716, %v905
        %v1719 = vadd.f32 %v1717, %v905
        %v1720 = vmax.f32 %v1718, 0.0
        %v1721 = vmax.f32 %v1719, 0.0
        %v1722 = vmax.f32 %v1451, %v1720
        %v1723 = vmax.f32 %v1452, %v1721
        %1724 = vxpose.xlu0.b32.start [1/16] %v1722, 128
        %1725 = vxpose.xlu0.b32.cont [2/16] %v1723, 128
        %1726 = vxpose.xlu0.b32.cont [3/16] 0.0, 128
        %1727 = vxpose.xlu0.b32.cont [4/16] 0.0, 128
        %1728 = vxpose.xlu0.b32.cont [5/16] 0.0, 128
        %1729 = vxpose.xlu0.b32.cont [6/16] 0.0, 128
        %1730 = vxpose.xlu0.b32.cont [7/16] 0.0, 128
        %1731 = vxpose.xlu0.b32.cont [8/16] 0.0, 128
        %1732 = vxpose.xlu0.b32.cont [9/16] 0.0, 128
        %1733 = vxpose.xlu0.b32.cont [10/16] 0.0, 128
        %1734 = vxpose.xlu0.b32.cont [11/16] 0.0, 128
        %1735 = vxpose.xlu0.b32.cont [12/16] 0.0, 128
        %1736 = vxpose.xlu0.b32.cont [13/16] 0.0, 128
        %1737 = vxpose.xlu0.b32.cont [14/16] 0.0, 128
        %1738 = vxpose.xlu0.b32.cont [15/16] 0.0, 128
        %1739 = vxpose.xlu0.b32.end [16/16] 0.0, 128
        %v1740 = vpop.trf.xlu0
        %v1741 = vpop.trf.xlu0
        %v1742 = vpop.trf.xlu0
        %v1743 = vpop.trf.xlu0
        %v1744 = vpop.trf.xlu0
        %v1745 = vpop.trf.xlu0
        %v1746 = vpop.trf.xlu0
        %v1747 = vpop.trf.xlu0
        %v1748 = vpop.trf.xlu0
        %v1749 = vpop.trf.xlu0
        %v1750 = vpop.trf.xlu0
        %v1751 = vpop.trf.xlu0
        %v1752 = vpop.trf.xlu0
        %v1753 = vpop.trf.xlu0
        %v1754 = vpop.trf.xlu0
        %v1755 = vpop.trf.xlu0
        %1756 = vst.msk [vmem:[%s472] sm:$0xff] %vm619, %v1740
        %1757 = vst.msk [vmem:[%s472 + $0x8] sm:$0xff] %vm619, %v1741
        %s1758 = sand.u32 %s319, 1
        %s1759 = scalar_lea.sflag [#allocation3], %s1758
        %s1760 = sand.u32 %s319, 1
        %s1761 = smul.addr %s1760, 16
        %s1762 = scalar_lea.vmem [#allocation2], %s1761
        // Predicated region
        $region69: #{edge_conv.7} parent=67 // pred_check
          %p1763 = pneg %p329
        $region70: #{edge_conv.7} parent=67 // pred_check_branch
          %1765 = sbr.rel (%p1763) target = $region72
        $region71: #{edge_conv.7} parent=67 // pred_region
          %s1767 = ssub.s32 256, 256
          %1768 = vsyncadd %s1759, %s1767
          %s1769 = smul.addr %s30, 2
          %s1770 = sadd.s32 %s31, %s1769
          %s1771 = smul.addr %s1770, 128
          %s1772 = scalar_lea.hbm %s12, %s1771
          %s1773 = sshll.u32 %s1762, 4
          %s1774 = int_to_ptr.vmem [resolvable:$true] %s1773
          %1779 = dma.vmem_to_hbm [thread:$0]  %s1774, 256, %s1772, %s1759, 128, 128, 8
        $region72: #{edge_conv.7} parent=67 // pred_fallthru
          _
      $region68: #{edge_conv.7} parent=5 // pred_fallthru
        _
      %p1780 = scmp.le.s32.totalorder 2, %s21
      // Predicated region
      $region73: #{edge_conv.7} parent=5 // pred_check
        %p1781 = pneg %p1780
      $region74: #{edge_conv.7} parent=5 // pred_check_branch
        %1783 = sbr.rel (%p1781) target = $region76
      $region75: #{edge_conv.7} parent=5 // pred_region
        %s1784 = ssub.s32 %s21, 2
        // Predicated region
        $region77: #{edge_conv.7} parent=75 // pred_check
          %p1785 = pneg %p335
        $region78: #{edge_conv.7} parent=75 // pred_check_branch
          %1787 = sbr.rel (%p1785) target = $region80
        $region79: #{edge_conv.7} parent=75 // pred_region
          %s1788 = sand.u32 %s320, 1
          %s1789 = scalar_lea.sflag [#allocation3], %s1788
          %s1790 = sand.u32 %s320, 1
          %s1791 = smul.addr %s1790, 16
          %s1792 = scalar_lea.vmem [#allocation2], %s1791
          %1793 = dma.done %s1789, 256
        $region80: #{edge_conv.7} parent=75 // pred_fallthru
          _
      $region76: #{edge_conv.7} parent=5 // pred_fallthru
        _
    $region6: #{edge_conv.7} parent=1 // loop_footer
      %s25 = sadd.s32 1, %s21
    $region7: #{edge_conv.7} parent=1 // loop_footer_branch
      %20 = sbr.rel target = $region3
    $region8: #{edge_conv.7} parent=1 // loop_exit
      _
    %1794 = vsyncpa [#allocation3], 1
    %s1795 = scalar_lea.sflag [#allocation3], 1
    %1796 = vsyncpa %s1795, 1

</llo_original>
